<compile_context>
chip_gen: v6e
topology: v6e:2x2x1
jax: 0.10.0
libtpu: 0.0.40
codegen_flags: <defaults>
</compile_context>

<pallas_src>
from math import sqrt

import numpy as np
import jax
import jax.numpy as jnp
from jax.experimental import pallas as pl
from jax.experimental.pallas import tpu as pltpu


# ----------------------------------------------------------------------------
# Pallas kernel: one grid step = `batch_tile` batch elements; all `depth`
# lambda layers run inside the kernel as a statically unrolled loop (static
# weight indices, no per-depth grid-step overhead, no weight re-DMA).
# ----------------------------------------------------------------------------
def _lambda_gate_kernel(x_ref, emb_ref, mask_ref, w_ref, bg_ref, out_ref):
    bt, n, d = x_ref.shape          # (batch_tile, featureNum, featureDim)
    depth = w_ref.shape[0]

    head_mask = mask_ref[...]                        # (D, D) block-diagonal head mask
    x = x_ref[...].astype(jnp.float32)               # (Bt, N, D) running field features

    for layer in range(depth):                       # static unroll, static ref indices
        w = w_ref[layer]                             # (D, 4D)  fused [Wq | Wk | Wv | Wg]
        bg = bg_ref[layer]                           # (1, D)   gate bias
        emb = emb_ref[layer]                         # (N, D)   head-replicated fieldWeight proj

        # One fused, lane-dense projection: (Bt*N, D) @ (D, 4D) on the MXU.
        proj = jnp.dot(x.reshape(bt * n, d), w,
                       preferred_element_type=jnp.float32).reshape(bt, n, 4 * d)
        q = proj[..., 0 * d:1 * d]                   # (Bt, N, D)
        key = proj[..., 1 * d:2 * d]                 # (Bt, N, D)  head-replicated columns
        val = proj[..., 2 * d:3 * d]                 # (Bt, N, D)  head-replicated columns
        gate = jax.nn.sigmoid(proj[..., 3 * d:4 * d] + bg)

        # Exact f32 softmax over the field axis (axis=1).
        kmax = jnp.max(key, axis=1, keepdims=True)
        kexp = jnp.exp(key - kmax)
        ksum = jnp.sum(kexp, axis=1, keepdims=True)
        ksm = kexp / ksum                            # (Bt, N, D)

        # Fused content + positional lambda: (softmax(K) + E)^T V.
        # Batched dot_general contracting the field axis of both operands
        # directly -> no materialized transpose.  Because the K/V/E columns are
        # head-replicated, this single (D, D) contraction equals the per-head
        # (k, k) lambda tiled over all head pairs; the block-diagonal mask then
        # makes `q @ lam` exactly the per-head lambda application (no per-head
        # loop / reshape / concat).
        lam = jax.lax.dot_general(
            ksm + emb[None, :, :], val,
            dimension_numbers=(((1,), (1,)), ((0,), (0,))),
            preferred_element_type=jnp.float32)      # (Bt, D, D)
        lam = lam * head_mask[None, :, :]

        y = jax.lax.dot_general(
            q, lam,
            dimension_numbers=(((2,), (1,)), ((0,), (0,))),
            preferred_element_type=jnp.float32)      # (Bt, N, D)

        # Sigmoid-gated residual fusion.
        x = gate * y + (1.0 - gate) * x

    # TODO(synk): at D=32 this store is lane-masked; for production D >= 128
    # (or with a (rows, 128)-reshaped output layout) it becomes lane-dense.
    out_ref[...] = x.astype(out_ref.dtype)


# ----------------------------------------------------------------------------
# Wrapper: the "LambdaGateFusionV4.forward" equivalent.
# ----------------------------------------------------------------------------
def lambda_gate_fusion_v4(user_trans, user_feature, item_feature, item_trans,
                          context_feature, context_trans,
                          field_weight, params, *, head_num, batch_tile=None):
    # defaultHooker: chain(userTrans, itemTrans, contextTrans)
    feature = list(user_trans) + list(item_trans) + list(context_trans)
    # unsqueeze(1) + cat(dim=1)  -> [B, N, D]
    cat = jnp.concatenate([f[:, None, :] for f in feature], axis=1)

    B, N, D = cat.shape
    wq, wk, wv, we, wg, bg = params
    depth = wq.shape[0]
    kdim = wk.shape[-1]
    assert kdim * head_num == D

    if batch_tile is None:
        batch_tile = 1
    assert B % batch_tile == 0
    bt = batch_tile

    # Batch-invariant positional-lambda input, hoisted out of the kernel:
    #   emb[d] = fieldWeight @ We[d], then head-replicated along channels.
    emb = jnp.einsum("nd,ldk->lnk", field_weight, we)              # (depth, N, k)
    emb_b = jnp.tile(emb, (1, 1, head_num))                        # (depth, N, D)

    # Head-replicated K/V projections fused with Q and the gate into one
    # lane-dense (D, 4D) slab per layer (one MXU matmul instead of four).
    wk_b = jnp.tile(wk, (1, 1, head_num))                          # (depth, D, D)
    wv_b = jnp.tile(wv, (1, 1, head_num))                          # (depth, D, D)
    w_cat = jnp.concatenate([wq, wk_b, wv_b, wg], axis=-1)         # (depth, D, 4D)

    # Constant block-diagonal head mask (numpy-built; loaded once).
    blk = np.arange(D) // kdim
    head_mask = jnp.asarray(blk[:, None] == blk[None, :], dtype=jnp.float32)

    # Advisory cost estimate for the XLA scheduler.
    flops = int(2 * B * depth * (N * D * 4 * D + 2 * N * D * D))
    transcendentals = int(2 * B * depth * N * D)                   # exp + sigmoid
    bytes_accessed = int(4 * (2 * B * N * D)
                         + 4 * (w_cat.size + emb_b.size + head_mask.size + bg.size))

    out = pl.pallas_call(
        _lambda_gate_kernel,
        out_shape=jax.ShapeDtypeStruct((B, N, D), cat.dtype),
        grid_spec=pltpu.PrefetchScalarGridSpec(
            num_scalar_prefetch=0,
            grid=(B // bt,),
            in_specs=[
                # Per-step batch tile.
                pl.BlockSpec((bt, N, D), lambda b: (b, 0, 0)),
                # Batch-invariant operands: constant block index -> single buffer.
                pl.BlockSpec((depth, N, D), lambda b: (0, 0, 0),
                             pipeline_mode=pl.Buffered(1)),            # emb (repl.)
                pl.BlockSpec((D, D), lambda b: (0, 0),
                             pipeline_mode=pl.Buffered(1)),            # head mask
                pl.BlockSpec((depth, D, 4 * D), lambda b: (0, 0, 0),
                             pipeline_mode=pl.Buffered(1)),            # [Wq|Wk|Wv|Wg]
                pl.BlockSpec((depth, 1, D), lambda b: (0, 0, 0),
                             pipeline_mode=pl.Buffered(1)),            # bg
            ],
            out_specs=pl.BlockSpec((bt, N, D), lambda b: (b, 0, 0)),
        ),
        compiler_params=pltpu.CompilerParams(
            dimension_semantics=("parallel",),
            vmem_limit_bytes=48 * 1024 * 1024),
        cost_estimate=pl.CostEstimate(flops=flops,
                                      transcendentals=transcendentals,
                                      bytes_accessed=bytes_accessed),
    )(cat, emb_b, head_mask, w_cat, bg)
    return out


# ----------------------------------------------------------------------------
# Pure-JAX reference (same math) for a sanity check.
# ----------------------------------------------------------------------------
def _reference(cat, field_weight, params, head_num):
    wq, wk, wv, we, wg, bg = params
    depth = wq.shape[0]
    B, N, D = cat.shape
    k = wk.shape[-1]
    x = cat.astype(jnp.float32)
    pos = field_weight[None, :, :].astype(jnp.float32)
    for d in range(depth):
        q = x @ wq[d]
        key = x @ wk[d]
        val = x @ wv[d]
        emb = pos @ we[d]
        key_sm = jax.nn.softmax(key, axis=1)
        lam = (jnp.einsum("bnk,bnv->bkv", key_sm, val) +
               jnp.einsum("bnk,bnv->bkv", jnp.broadcast_to(emb, key.shape), val))
        qh = q.reshape(B, N, head_num, k)
        y = jnp.einsum("bnhk,bkv->bnhv", qh, lam).reshape(B, N, D)
        g = jax.nn.sigmoid(x @ wg[d] + bg[d])
        x = g * y + (1.0 - g) * x
    return x


if __name__ == "__main__":
    # Small shapes consistent with the module.
    B = 4          # batch (tiled into 2 grid steps of 2)
    D = 32         # featureDim
    H = 4          # headNum
    k = D // H     # per-head key/value dim
    depth = 3
    n_user, n_item, n_ctx = 2, 2, 2
    N = n_user + n_item + n_ctx   # featureNum = 6

    root = jax.random.PRNGKey(0)
    keys = jax.random.split(root, 16)

    # Field inputs: lists of [B, D] tensors (trans features consumed by hooker).
    user_trans = [jax.random.normal(keys[i], (B, D), jnp.float32) for i in range(n_user)]
    item_trans = [jax.random.normal(keys[2 + i], (B, D), jnp.float32) for i in range(n_item)]
    context_trans = [jax.random.normal(keys[4 + i], (B, D), jnp.float32) for i in range(n_ctx)]
    # The raw (non-trans) features are unused by defaultHooker.
    user_feature = [jax.random.normal(keys[6], (B, D), jnp.float32)]
    item_feature = [jax.random.normal(keys[7], (B, D), jnp.float32)]
    context_feature = [jax.random.normal(keys[8], (B, D), jnp.float32)]

    # fieldWeight buffer: [featureNum, featureDim]
    field_weight = jax.random.normal(keys[9], (N, D), jnp.float32) / sqrt(D)

    # Deterministic parameter init for the lambda-gate stack.
    scale = 1.0 / sqrt(D)
    wq = jax.random.normal(keys[10], (depth, D, D), jnp.float32) * scale
    wk = jax.random.normal(keys[11], (depth, D, k), jnp.float32) * scale
    wv = jax.random.normal(keys[12], (depth, D, k), jnp.float32) * scale
    we = jax.random.normal(keys[13], (depth, D, k), jnp.float32) * scale
    wg = jax.random.normal(keys[14], (depth, D, D), jnp.float32) * scale
    bg = jax.random.normal(keys[15], (depth, 1, D), jnp.float32) * 0.1
    params = (wq, wk, wv, we, wg, bg)

    out = lambda_gate_fusion_v4(user_trans, user_feature, item_feature,
                                item_trans, context_feature, context_trans,
                                field_weight, params, head_num=H, batch_tile=2)
    out = jax.block_until_ready(out)

    # Sanity check vs pure-JAX reference (exact f32 softmax in the kernel; any
    # residual difference comes from matmul rounding only).
    cat = jnp.concatenate(
        [f[:, None, :] for f in (user_trans + item_trans + context_trans)], axis=1)
    ref = _reference(cat, field_weight, params, H)
    assert out.shape == (B, N, D)
    assert np.allclose(np.asarray(out), np.asarray(ref), rtol=2e-2, atol=2e-2), \
        "Pallas kernel mismatch vs reference"

    print("KERNEL_OK")
</pallas_src>

<mosaic_0001>
module attributes {stable_mosaic.version = 11 : i64} {
  func.func @_lambda_gate_kernel(%arg0: i32, %arg1: memref<2x6x32xf32, #tpu.memory_space<vmem>>, %arg2: memref<3x6x32xf32, #tpu.memory_space<vmem>>, %arg3: memref<32x32xf32, #tpu.memory_space<vmem>>, %arg4: memref<3x32x128xf32, #tpu.memory_space<vmem>>, %arg5: memref<3x1x32xf32, #tpu.memory_space<vmem>>, %arg6: memref<2x6x32xf32, #tpu.memory_space<vmem>>) attributes {dimension_semantics = [#tpu.dimension_semantics<parallel>], iteration_bounds = array<i64: 2>, scalar_prefetch = 0 : i64, scratch_operands = 0 : i64, tpu.core_type = #tpu.core_type<tc>, window_params = [{transform_indices = @transform_0, window_bounds = array<i64: 2, 6, 32>}, {pipeline_mode = #tpu.pipeline_mode<synchronous>, transform_indices = @transform_1, window_bounds = array<i64: 3, 6, 32>}, {pipeline_mode = #tpu.pipeline_mode<synchronous>, transform_indices = @transform_2, window_bounds = array<i64: 32, 32>}, {pipeline_mode = #tpu.pipeline_mode<synchronous>, transform_indices = @transform_3, window_bounds = array<i64: 3, 32, 128>}, {pipeline_mode = #tpu.pipeline_mode<synchronous>, transform_indices = @transform_4, window_bounds = array<i64: 3, 1, 32>}, {transform_indices = @transform_5, window_bounds = array<i64: 2, 6, 32>}]} {
    %c0 = arith.constant 0 : index
    %c0_0 = arith.constant 0 : index
    %0 = vector.load %arg3[%c0, %c0_0] : memref<32x32xf32, #tpu.memory_space<vmem>>, vector<32x32xf32>
    %c0_1 = arith.constant 0 : index
    %c0_2 = arith.constant 0 : index
    %c0_3 = arith.constant 0 : index
    %1 = vector.load %arg1[%c0_1, %c0_2, %c0_3] : memref<2x6x32xf32, #tpu.memory_space<vmem>>, vector<2x6x32xf32>
    %c0_4 = arith.constant 0 : index
    %c0_5 = arith.constant 0 : index
    %c0_6 = arith.constant 0 : index
    %2 = vector.load %arg4[%c0_4, %c0_5, %c0_6] : memref<3x32x128xf32, #tpu.memory_space<vmem>>, vector<1x32x128xf32>
    %3 = vector.shape_cast %2 : vector<1x32x128xf32> to vector<32x128xf32>
    %c0_7 = arith.constant 0 : index
    %c0_8 = arith.constant 0 : index
    %c0_9 = arith.constant 0 : index
    %4 = vector.load %arg5[%c0_7, %c0_8, %c0_9] : memref<3x1x32xf32, #tpu.memory_space<vmem>>, vector<1x1x32xf32>
    %5 = vector.shape_cast %4 : vector<1x1x32xf32> to vector<1x32xf32>
    %c0_10 = arith.constant 0 : index
    %c0_11 = arith.constant 0 : index
    %c0_12 = arith.constant 0 : index
    %6 = vector.load %arg2[%c0_10, %c0_11, %c0_12] : memref<3x6x32xf32, #tpu.memory_space<vmem>>, vector<1x6x32xf32>
    %7 = vector.shape_cast %6 : vector<1x6x32xf32> to vector<6x32xf32>
    %8 = vector.shape_cast %1 : vector<2x6x32xf32> to vector<12x32xf32>
    %cst = arith.constant dense<0.000000e+00> : vector<12x128xf32>
    %9 = tpu.matmul %8, %3, %cst {dimension_numbers = #tpu.dot_dimension_numbers<[1], [0], [0], [1], [0, 0, 1, 1], [], []>} : vector<12x32xf32>, vector<32x128xf32>, vector<12x128xf32> -> vector<12x128xf32>
    %10 = vector.shape_cast %9 : vector<12x128xf32> to vector<2x6x128xf32>
    %11 = vector.extract_strided_slice %10 {offsets = [0, 0, 0], sizes = [2, 6, 32], strides = [1, 1, 1]} : vector<2x6x128xf32> to vector<2x6x32xf32>
    %12 = vector.extract_strided_slice %10 {offsets = [0, 0, 32], sizes = [2, 6, 32], strides = [1, 1, 1]} : vector<2x6x128xf32> to vector<2x6x32xf32>
    %13 = vector.extract_strided_slice %10 {offsets = [0, 0, 64], sizes = [2, 6, 32], strides = [1, 1, 1]} : vector<2x6x128xf32> to vector<2x6x32xf32>
    %14 = vector.extract_strided_slice %10 {offsets = [0, 0, 96], sizes = [2, 6, 32], strides = [1, 1, 1]} : vector<2x6x128xf32> to vector<2x6x32xf32>
    %15 = vector.shape_cast %5 : vector<1x32xf32> to vector<1x1x32xf32>
    %16 = vector.broadcast %15 : vector<1x1x32xf32> to vector<2x6x32xf32>
    %17 = arith.addf %14, %16 : vector<2x6x32xf32>
    %18 = arith.negf %17 : vector<2x6x32xf32>
    %19 = math.exp %18 : vector<2x6x32xf32>
    %cst_13 = arith.constant 1.000000e+00 : f32
    %20 = vector.broadcast %cst_13 : f32 to vector<2x6x32xf32>
    %21 = arith.addf %20, %19 : vector<2x6x32xf32>
    %22 = arith.divf %20, %21 : vector<2x6x32xf32>
    %cst_14 = arith.constant dense<0xFF800000> : vector<2x32xf32>
    %23 = vector.multi_reduction <maximumf>, %12, %cst_14 [1] : vector<2x6x32xf32> to vector<2x32xf32>
    %24 = vector.shape_cast %23 : vector<2x32xf32> to vector<2x1x32xf32>
    %25 = vector.broadcast %24 : vector<2x1x32xf32> to vector<2x6x32xf32>
    %26 = arith.subf %12, %25 : vector<2x6x32xf32>
    %27 = math.exp %26 : vector<2x6x32xf32>
    %cst_15 = arith.constant dense<0.000000e+00> : vector<2x32xf32>
    %28 = vector.multi_reduction <add>, %27, %cst_15 [1] : vector<2x6x32xf32> to vector<2x32xf32>
    %29 = vector.shape_cast %28 : vector<2x32xf32> to vector<2x1x32xf32>
    %30 = vector.broadcast %29 : vector<2x1x32xf32> to vector<2x6x32xf32>
    %31 = arith.divf %27, %30 : vector<2x6x32xf32>
    %32 = vector.shape_cast %7 : vector<6x32xf32> to vector<1x6x32xf32>
    %33 = vector.broadcast %32 : vector<1x6x32xf32> to vector<2x6x32xf32>
    %34 = arith.addf %31, %33 : vector<2x6x32xf32>
    %cst_16 = arith.constant dense<0.000000e+00> : vector<2x32x32xf32>
    %35 = tpu.matmul %34, %13, %cst_16 {dimension_numbers = #tpu.dot_dimension_numbers<[1], [1], [2], [2], [0, 0, 0, 2, 1, 2], [0], [0]>} : vector<2x6x32xf32>, vector<2x6x32xf32>, vector<2x32x32xf32> -> vector<2x32x32xf32>
    %36 = vector.shape_cast %0 : vector<32x32xf32> to vector<1x32x32xf32>
    %37 = vector.broadcast %36 : vector<1x32x32xf32> to vector<2x32x32xf32>
    %38 = arith.mulf %35, %37 : vector<2x32x32xf32>
    %cst_17 = arith.constant dense<0.000000e+00> : vector<2x6x32xf32>
    %39 = tpu.matmul %11, %38, %cst_17 {dimension_numbers = #tpu.dot_dimension_numbers<[2], [1], [1], [2], [0, 0, 0, 1, 1, 2], [0], [0]>} : vector<2x6x32xf32>, vector<2x32x32xf32>, vector<2x6x32xf32> -> vector<2x6x32xf32>
    %40 = arith.mulf %22, %39 : vector<2x6x32xf32>
    %cst_18 = arith.constant 1.000000e+00 : f32
    %41 = vector.broadcast %cst_18 : f32 to vector<2x6x32xf32>
    %42 = arith.subf %41, %22 : vector<2x6x32xf32>
    %43 = arith.mulf %42, %1 : vector<2x6x32xf32>
    %44 = arith.addf %40, %43 : vector<2x6x32xf32>
    %c1 = arith.constant 1 : index
    %c0_19 = arith.constant 0 : index
    %c0_20 = arith.constant 0 : index
    %45 = vector.load %arg4[%c1, %c0_19, %c0_20] : memref<3x32x128xf32, #tpu.memory_space<vmem>>, vector<1x32x128xf32>
    %46 = vector.shape_cast %45 : vector<1x32x128xf32> to vector<32x128xf32>
    %c1_21 = arith.constant 1 : index
    %c0_22 = arith.constant 0 : index
    %c0_23 = arith.constant 0 : index
    %47 = vector.load %arg5[%c1_21, %c0_22, %c0_23] : memref<3x1x32xf32, #tpu.memory_space<vmem>>, vector<1x1x32xf32>
    %48 = vector.shape_cast %47 : vector<1x1x32xf32> to vector<1x32xf32>
    %c1_24 = arith.constant 1 : index
    %c0_25 = arith.constant 0 : index
    %c0_26 = arith.constant 0 : index
    %49 = vector.load %arg2[%c1_24, %c0_25, %c0_26] : memref<3x6x32xf32, #tpu.memory_space<vmem>>, vector<1x6x32xf32>
    %50 = vector.shape_cast %49 : vector<1x6x32xf32> to vector<6x32xf32>
    %51 = vector.shape_cast %44 : vector<2x6x32xf32> to vector<12x32xf32>
    %cst_27 = arith.constant dense<0.000000e+00> : vector<12x128xf32>
    %52 = tpu.matmul %51, %46, %cst_27 {dimension_numbers = #tpu.dot_dimension_numbers<[1], [0], [0], [1], [0, 0, 1, 1], [], []>} : vector<12x32xf32>, vector<32x128xf32>, vector<12x128xf32> -> vector<12x128xf32>
    %53 = vector.shape_cast %52 : vector<12x128xf32> to vector<2x6x128xf32>
    %54 = vector.extract_strided_slice %53 {offsets = [0, 0, 0], sizes = [2, 6, 32], strides = [1, 1, 1]} : vector<2x6x128xf32> to vector<2x6x32xf32>
    %55 = vector.extract_strided_slice %53 {offsets = [0, 0, 32], sizes = [2, 6, 32], strides = [1, 1, 1]} : vector<2x6x128xf32> to vector<2x6x32xf32>
    %56 = vector.extract_strided_slice %53 {offsets = [0, 0, 64], sizes = [2, 6, 32], strides = [1, 1, 1]} : vector<2x6x128xf32> to vector<2x6x32xf32>
    %57 = vector.extract_strided_slice %53 {offsets = [0, 0, 96], sizes = [2, 6, 32], strides = [1, 1, 1]} : vector<2x6x128xf32> to vector<2x6x32xf32>
    %58 = vector.shape_cast %48 : vector<1x32xf32> to vector<1x1x32xf32>
    %59 = vector.broadcast %58 : vector<1x1x32xf32> to vector<2x6x32xf32>
    %60 = arith.addf %57, %59 : vector<2x6x32xf32>
    %61 = arith.negf %60 : vector<2x6x32xf32>
    %62 = math.exp %61 : vector<2x6x32xf32>
    %cst_28 = arith.constant 1.000000e+00 : f32
    %63 = vector.broadcast %cst_28 : f32 to vector<2x6x32xf32>
    %64 = arith.addf %63, %62 : vector<2x6x32xf32>
    %65 = arith.divf %63, %64 : vector<2x6x32xf32>
    %cst_29 = arith.constant dense<0xFF800000> : vector<2x32xf32>
    %66 = vector.multi_reduction <maximumf>, %55, %cst_29 [1] : vector<2x6x32xf32> to vector<2x32xf32>
    %67 = vector.shape_cast %66 : vector<2x32xf32> to vector<2x1x32xf32>
    %68 = vector.broadcast %67 : vector<2x1x32xf32> to vector<2x6x32xf32>
    %69 = arith.subf %55, %68 : vector<2x6x32xf32>
    %70 = math.exp %69 : vector<2x6x32xf32>
    %cst_30 = arith.constant dense<0.000000e+00> : vector<2x32xf32>
    %71 = vector.multi_reduction <add>, %70, %cst_30 [1] : vector<2x6x32xf32> to vector<2x32xf32>
    %72 = vector.shape_cast %71 : vector<2x32xf32> to vector<2x1x32xf32>
    %73 = vector.broadcast %72 : vector<2x1x32xf32> to vector<2x6x32xf32>
    %74 = arith.divf %70, %73 : vector<2x6x32xf32>
    %75 = vector.shape_cast %50 : vector<6x32xf32> to vector<1x6x32xf32>
    %76 = vector.broadcast %75 : vector<1x6x32xf32> to vector<2x6x32xf32>
    %77 = arith.addf %74, %76 : vector<2x6x32xf32>
    %cst_31 = arith.constant dense<0.000000e+00> : vector<2x32x32xf32>
    %78 = tpu.matmul %77, %56, %cst_31 {dimension_numbers = #tpu.dot_dimension_numbers<[1], [1], [2], [2], [0, 0, 0, 2, 1, 2], [0], [0]>} : vector<2x6x32xf32>, vector<2x6x32xf32>, vector<2x32x32xf32> -> vector<2x32x32xf32>
    %79 = vector.shape_cast %0 : vector<32x32xf32> to vector<1x32x32xf32>
    %80 = vector.broadcast %79 : vector<1x32x32xf32> to vector<2x32x32xf32>
    %81 = arith.mulf %78, %80 : vector<2x32x32xf32>
    %cst_32 = arith.constant dense<0.000000e+00> : vector<2x6x32xf32>
    %82 = tpu.matmul %54, %81, %cst_32 {dimension_numbers = #tpu.dot_dimension_numbers<[2], [1], [1], [2], [0, 0, 0, 1, 1, 2], [0], [0]>} : vector<2x6x32xf32>, vector<2x32x32xf32>, vector<2x6x32xf32> -> vector<2x6x32xf32>
    %83 = arith.mulf %65, %82 : vector<2x6x32xf32>
    %cst_33 = arith.constant 1.000000e+00 : f32
    %84 = vector.broadcast %cst_33 : f32 to vector<2x6x32xf32>
    %85 = arith.subf %84, %65 : vector<2x6x32xf32>
    %86 = arith.mulf %85, %44 : vector<2x6x32xf32>
    %87 = arith.addf %83, %86 : vector<2x6x32xf32>
    %c2 = arith.constant 2 : index
    %c0_34 = arith.constant 0 : index
    %c0_35 = arith.constant 0 : index
    %88 = vector.load %arg4[%c2, %c0_34, %c0_35] : memref<3x32x128xf32, #tpu.memory_space<vmem>>, vector<1x32x128xf32>
    %89 = vector.shape_cast %88 : vector<1x32x128xf32> to vector<32x128xf32>
    %c2_36 = arith.constant 2 : index
    %c0_37 = arith.constant 0 : index
    %c0_38 = arith.constant 0 : index
    %90 = vector.load %arg5[%c2_36, %c0_37, %c0_38] : memref<3x1x32xf32, #tpu.memory_space<vmem>>, vector<1x1x32xf32>
    %91 = vector.shape_cast %90 : vector<1x1x32xf32> to vector<1x32xf32>
    %c2_39 = arith.constant 2 : index
    %c0_40 = arith.constant 0 : index
    %c0_41 = arith.constant 0 : index
    %92 = vector.load %arg2[%c2_39, %c0_40, %c0_41] : memref<3x6x32xf32, #tpu.memory_space<vmem>>, vector<1x6x32xf32>
    %93 = vector.shape_cast %92 : vector<1x6x32xf32> to vector<6x32xf32>
    %94 = vector.shape_cast %87 : vector<2x6x32xf32> to vector<12x32xf32>
    %cst_42 = arith.constant dense<0.000000e+00> : vector<12x128xf32>
    %95 = tpu.matmul %94, %89, %cst_42 {dimension_numbers = #tpu.dot_dimension_numbers<[1], [0], [0], [1], [0, 0, 1, 1], [], []>} : vector<12x32xf32>, vector<32x128xf32>, vector<12x128xf32> -> vector<12x128xf32>
    %96 = vector.shape_cast %95 : vector<12x128xf32> to vector<2x6x128xf32>
    %97 = vector.extract_strided_slice %96 {offsets = [0, 0, 0], sizes = [2, 6, 32], strides = [1, 1, 1]} : vector<2x6x128xf32> to vector<2x6x32xf32>
    %98 = vector.extract_strided_slice %96 {offsets = [0, 0, 32], sizes = [2, 6, 32], strides = [1, 1, 1]} : vector<2x6x128xf32> to vector<2x6x32xf32>
    %99 = vector.extract_strided_slice %96 {offsets = [0, 0, 64], sizes = [2, 6, 32], strides = [1, 1, 1]} : vector<2x6x128xf32> to vector<2x6x32xf32>
    %100 = vector.extract_strided_slice %96 {offsets = [0, 0, 96], sizes = [2, 6, 32], strides = [1, 1, 1]} : vector<2x6x128xf32> to vector<2x6x32xf32>
    %101 = vector.shape_cast %91 : vector<1x32xf32> to vector<1x1x32xf32>
    %102 = vector.broadcast %101 : vector<1x1x32xf32> to vector<2x6x32xf32>
    %103 = arith.addf %100, %102 : vector<2x6x32xf32>
    %104 = arith.negf %103 : vector<2x6x32xf32>
    %105 = math.exp %104 : vector<2x6x32xf32>
    %cst_43 = arith.constant 1.000000e+00 : f32
    %106 = vector.broadcast %cst_43 : f32 to vector<2x6x32xf32>
    %107 = arith.addf %106, %105 : vector<2x6x32xf32>
    %108 = arith.divf %106, %107 : vector<2x6x32xf32>
    %cst_44 = arith.constant dense<0xFF800000> : vector<2x32xf32>
    %109 = vector.multi_reduction <maximumf>, %98, %cst_44 [1] : vector<2x6x32xf32> to vector<2x32xf32>
    %110 = vector.shape_cast %109 : vector<2x32xf32> to vector<2x1x32xf32>
    %111 = vector.broadcast %110 : vector<2x1x32xf32> to vector<2x6x32xf32>
    %112 = arith.subf %98, %111 : vector<2x6x32xf32>
    %113 = math.exp %112 : vector<2x6x32xf32>
    %cst_45 = arith.constant dense<0.000000e+00> : vector<2x32xf32>
    %114 = vector.multi_reduction <add>, %113, %cst_45 [1] : vector<2x6x32xf32> to vector<2x32xf32>
    %115 = vector.shape_cast %114 : vector<2x32xf32> to vector<2x1x32xf32>
    %116 = vector.broadcast %115 : vector<2x1x32xf32> to vector<2x6x32xf32>
    %117 = arith.divf %113, %116 : vector<2x6x32xf32>
    %118 = vector.shape_cast %93 : vector<6x32xf32> to vector<1x6x32xf32>
    %119 = vector.broadcast %118 : vector<1x6x32xf32> to vector<2x6x32xf32>
    %120 = arith.addf %117, %119 : vector<2x6x32xf32>
    %cst_46 = arith.constant dense<0.000000e+00> : vector<2x32x32xf32>
    %121 = tpu.matmul %120, %99, %cst_46 {dimension_numbers = #tpu.dot_dimension_numbers<[1], [1], [2], [2], [0, 0, 0, 2, 1, 2], [0], [0]>} : vector<2x6x32xf32>, vector<2x6x32xf32>, vector<2x32x32xf32> -> vector<2x32x32xf32>
    %122 = vector.shape_cast %0 : vector<32x32xf32> to vector<1x32x32xf32>
    %123 = vector.broadcast %122 : vector<1x32x32xf32> to vector<2x32x32xf32>
    %124 = arith.mulf %121, %123 : vector<2x32x32xf32>
    %cst_47 = arith.constant dense<0.000000e+00> : vector<2x6x32xf32>
    %125 = tpu.matmul %97, %124, %cst_47 {dimension_numbers = #tpu.dot_dimension_numbers<[2], [1], [1], [2], [0, 0, 0, 1, 1, 2], [0], [0]>} : vector<2x6x32xf32>, vector<2x32x32xf32>, vector<2x6x32xf32> -> vector<2x6x32xf32>
    %126 = arith.mulf %108, %125 : vector<2x6x32xf32>
    %cst_48 = arith.constant 1.000000e+00 : f32
    %127 = vector.broadcast %cst_48 : f32 to vector<2x6x32xf32>
    %128 = arith.subf %127, %108 : vector<2x6x32xf32>
    %129 = arith.mulf %128, %87 : vector<2x6x32xf32>
    %130 = arith.addf %126, %129 : vector<2x6x32xf32>
    %c0_49 = arith.constant 0 : index
    %c0_50 = arith.constant 0 : index
    %c0_51 = arith.constant 0 : index
    %131 = vector.load %arg6[%c0_49, %c0_50, %c0_51] : memref<2x6x32xf32, #tpu.memory_space<vmem>>, vector<2x6x32xf32>
    tpu.vector_store %arg6[%c0_49, %c0_50, %c0_51], %130 {strides = array<i32>} : memref<2x6x32xf32, #tpu.memory_space<vmem>>, vector<2x6x32xf32>,
    return
  }
  func.func @transform_0(%arg0: i32) -> (i32, i32, i32) {
    %c0_i32 = arith.constant 0 : i32
    %c0_i32_0 = arith.constant 0 : i32
    %c0_i32_1 = arith.constant 0 : i32
    return %arg0, %c0_i32, %c0_i32_0 : i32, i32, i32
  }
  func.func @transform_1(%arg0: i32) -> (i32, i32, i32) {
    %c0_i32 = arith.constant 0 : i32
    %c0_i32_0 = arith.constant 0 : i32
    %c0_i32_1 = arith.constant 0 : i32
    %c0_i32_2 = arith.constant 0 : i32
    return %c0_i32, %c0_i32_0, %c0_i32_1 : i32, i32, i32
  }
  func.func @transform_2(%arg0: i32) -> (i32, i32) {
    %c0_i32 = arith.constant 0 : i32
    %c0_i32_0 = arith.constant 0 : i32
    %c0_i32_1 = arith.constant 0 : i32
    return %c0_i32, %c0_i32_0 : i32, i32
  }
  func.func @transform_3(%arg0: i32) -> (i32, i32, i32) {
    %c0_i32 = arith.constant 0 : i32
    %c0_i32_0 = arith.constant 0 : i32
    %c0_i32_1 = arith.constant 0 : i32
    %c0_i32_2 = arith.constant 0 : i32
    return %c0_i32, %c0_i32_0, %c0_i32_1 : i32, i32, i32
  }
  func.func @transform_4(%arg0: i32) -> (i32, i32, i32) {
    %c0_i32 = arith.constant 0 : i32
    %c0_i32_0 = arith.constant 0 : i32
    %c0_i32_1 = arith.constant 0 : i32
    %c0_i32_2 = arith.constant 0 : i32
    return %c0_i32, %c0_i32_0, %c0_i32_1 : i32, i32, i32
  }
  func.func @transform_5(%arg0: i32) -> (i32, i32, i32) {
    %c0_i32 = arith.constant 0 : i32
    %c0_i32_0 = arith.constant 0 : i32
    %c0_i32_1 = arith.constant 0 : i32
    return %arg0, %c0_i32, %c0_i32_0 : i32, i32, i32
  }
}

</mosaic_0001>

<llo_original>
// kernel: tpu_custom_call.1
$region0: #{tpu_custom_call.1}
  #allocation0 [shape = 'u32[]', space=smem, size = 0x4, offset = 0x4, fixed_abs, tag = 'smem constant byte address 0x4 - core index']
  #allocation1 [shape = 'u32[144,128]{1,0:T(1,128)}', space=vmem, size = 0x12000, scoped, tag = 'internal scratch']
  %s0 = inlined_call_operand.vmem [shape: f32[4,6,32], index: 0, kind: input, shape index: {}]
  %s1 = inlined_call_operand.vmem [shape: f32[3,6,32], index: 1, kind: input, shape index: {}]
  %s2 = inlined_call_operand.vmem [shape: f32[32,32], index: 2, kind: input, shape index: {}]
  %s3 = inlined_call_operand.hbm [shape: f32[3,32,128], index: 3, kind: input, shape index: {}]
  %s4 = inlined_call_operand.vmem [shape: f32[3,1,32], index: 4, kind: input, shape index: {}]
  %s5 = inlined_call_operand.vmem [shape: f32[4,6,32], index: 5, kind: output, shape index: {}]
  %s6 = sld [smem:[#allocation0]]
  $region57: #{tpu_custom_call.1} parent=0
    _
  %s8 = ssub.s32 1, %s6
  %s9 = scalar_select 0, %s8, %s6
  $region1: #{tpu_custom_call.1} parent=0
    #allocation2 [shape = 'u8[49152]{0}', space=vmem, size = 0xc000, scoped, tag = 'input window, operand 3, single buffered']
    #allocation3 [shape = 's32[2]{0}', space=sflag, size = 0x8, scoped, tag = 'scoped memory for tpu_custom_call.1']
    %10 = vsyncpa [#allocation3], 0
    loop: start=0, step=1, limit=4
    $region2: #{tpu_custom_call.1} parent=1 // loop_pre_header
      _
    $region3: #{tpu_custom_call.1} parent=1 // loop_header
      %s12 = sphi 0, %s16
      %p13 = scmp.ge.s32.totalorder %s12, 4
      %s22 = sphi 0, %s24
      %s25 = sphi 0, %s22
      %s26 = sphi 0, %s25
      %s42 = sphi 0, %s26
      %s46 = sphi 0, %s46
      %s48 = sphi 0, %s46
      %s49 = sphi 0, %s48
      %s63 = sphi 0, %s49
      %s67 = sphi 0, %s67
      %s69 = sphi 0, %s67
      %s70 = sphi 0, %s69
      %s84 = sphi 0, %s70
      %s88 = sphi 0, %s88
      %s90 = sphi 0, %s88
      %s91 = sphi 0, %s90
      %s105 = sphi 0, %s91
      %s109 = sphi 0, %s109
      %s111 = sphi 0, %s109
      %s112 = sphi 0, %s111
      %s126 = sphi 0, %s112
      %s132 = sphi 0, %s134
      %s135 = sphi 0, %s132
      %s136 = sphi 0, %s135
      %s152 = sphi 0, %s136
    $region4: #{tpu_custom_call.1} parent=1 // loop_header_branch
      %15 = sbr.rel (%p13) target = $region8
    $region5: #{tpu_custom_call.1} parent=1 // loop_body
      %s17 = ssub.s32 %s12, 1
      %s18 = ssub.s32 %s12, 2
      %s19 = sadd.s32 %s12, 1
      %s20 = ssub.s32 %s12, %s19
      %p21 = scmp.eq.s32.totalorder %s20, 0
      %s23 = sadd.s32 %s22, 1
      %s24 = scalar_select %p21, %s22, %s23
      %p27 = pneg %p21
      %p28 = scmp.eq.s32.totalorder %s12, 1
      %p29 = por %p27, %p28
      %p30 = scmp.ne.s32.totalorder %s22, %s25
      %p31 = scmp.eq.s32.totalorder %s12, 0
      %p32 = por %p30, %p31
      %p33 = scmp.ne.s32.totalorder %s22, %s25
      %p34 = scmp.eq.s32.totalorder %s17, 1
      %p35 = por %p33, %p34
      %p36 = scmp.ne.s32.totalorder %s25, %s26
      %p37 = scmp.eq.s32.totalorder %s17, 0
      %p38 = por %p36, %p37
      %p39 = scmp.ne.s32.totalorder %s25, %s26
      %p40 = scmp.eq.s32.totalorder %s18, 1
      %p41 = por %p39, %p40
      %p43 = scmp.ne.s32.totalorder %s26, %s42
      %p44 = scmp.eq.s32.totalorder %s18, 0
      %p45 = por %p43, %p44
      %s47 = sadd.s32 %s46, 1
      %p50 = scmp.eq.s32.totalorder %s12, 1
      %p51 = scmp.ne.s32.totalorder %s46, %s48
      %p52 = scmp.eq.s32.totalorder %s12, 0
      %p53 = por %p51, %p52
      %p54 = scmp.ne.s32.totalorder %s46, %s48
      %p55 = scmp.eq.s32.totalorder %s17, 1
      %p56 = por %p54, %p55
      %p57 = scmp.ne.s32.totalorder %s48, %s49
      %p58 = scmp.eq.s32.totalorder %s17, 0
      %p59 = por %p57, %p58
      %p60 = scmp.ne.s32.totalorder %s48, %s49
      %p61 = scmp.eq.s32.totalorder %s18, 1
      %p62 = por %p60, %p61
      %p64 = scmp.ne.s32.totalorder %s49, %s63
      %p65 = scmp.eq.s32.totalorder %s18, 0
      %p66 = por %p64, %p65
      %s68 = sadd.s32 %s67, 1
      %p71 = scmp.eq.s32.totalorder %s12, 1
      %p72 = scmp.ne.s32.totalorder %s67, %s69
      %p73 = scmp.eq.s32.totalorder %s12, 0
      %p74 = por %p72, %p73
      %p75 = scmp.ne.s32.totalorder %s67, %s69
      %p76 = scmp.eq.s32.totalorder %s17, 1
      %p77 = por %p75, %p76
      %p78 = scmp.ne.s32.totalorder %s69, %s70
      %p79 = scmp.eq.s32.totalorder %s17, 0
      %p80 = por %p78, %p79
      %p81 = scmp.ne.s32.totalorder %s69, %s70
      %p82 = scmp.eq.s32.totalorder %s18, 1
      %p83 = por %p81, %p82
      %p85 = scmp.ne.s32.totalorder %s70, %s84
      %p86 = scmp.eq.s32.totalorder %s18, 0
      %p87 = por %p85, %p86
      %s89 = sadd.s32 %s88, 1
      %p92 = scmp.eq.s32.totalorder %s12, 1
      %p93 = scmp.ne.s32.totalorder %s88, %s90
      %p94 = scmp.eq.s32.totalorder %s12, 0
      %p95 = por %p93, %p94
      %p96 = scmp.ne.s32.totalorder %s88, %s90
      %p97 = scmp.eq.s32.totalorder %s17, 1
      %p98 = por %p96, %p97
      %p99 = scmp.ne.s32.totalorder %s90, %s91
      %p100 = scmp.eq.s32.totalorder %s17, 0
      %p101 = por %p99, %p100
      %p102 = scmp.ne.s32.totalorder %s90, %s91
      %p103 = scmp.eq.s32.totalorder %s18, 1
      %p104 = por %p102, %p103
      %p106 = scmp.ne.s32.totalorder %s91, %s105
      %p107 = scmp.eq.s32.totalorder %s18, 0
      %p108 = por %p106, %p107
      %s110 = sadd.s32 %s109, 1
      %p113 = scmp.eq.s32.totalorder %s12, 1
      %p114 = scmp.ne.s32.totalorder %s109, %s111
      %p115 = scmp.eq.s32.totalorder %s12, 0
      %p116 = por %p114, %p115
      %p117 = scmp.ne.s32.totalorder %s109, %s111
      %p118 = scmp.eq.s32.totalorder %s17, 1
      %p119 = por %p117, %p118
      %p120 = scmp.ne.s32.totalorder %s111, %s112
      %p121 = scmp.eq.s32.totalorder %s17, 0
      %p122 = por %p120, %p121
      %p123 = scmp.ne.s32.totalorder %s111, %s112
      %p124 = scmp.eq.s32.totalorder %s18, 1
      %p125 = por %p123, %p124
      %p127 = scmp.ne.s32.totalorder %s112, %s126
      %p128 = scmp.eq.s32.totalorder %s18, 0
      %p129 = por %p127, %p128
      %s130 = ssub.s32 %s12, %s19
      %p131 = scmp.eq.s32.totalorder %s130, 0
      %s133 = sadd.s32 %s132, 1
      %s134 = scalar_select %p131, %s132, %s133
      %p137 = pneg %p131
      %p138 = scmp.eq.s32.totalorder %s12, 1
      %p139 = por %p137, %p138
      %p140 = scmp.ne.s32.totalorder %s132, %s135
      %p141 = scmp.eq.s32.totalorder %s12, 0
      %p142 = por %p140, %p141
      %p143 = scmp.ne.s32.totalorder %s132, %s135
      %p144 = scmp.eq.s32.totalorder %s17, 1
      %p145 = por %p143, %p144
      %p146 = scmp.ne.s32.totalorder %s135, %s136
      %p147 = scmp.eq.s32.totalorder %s17, 0
      %p148 = por %p146, %p147
      %p149 = scmp.ne.s32.totalorder %s135, %s136
      %p150 = scmp.eq.s32.totalorder %s18, 1
      %p151 = por %p149, %p150
      %p153 = scmp.ne.s32.totalorder %s136, %s152
      %p154 = scmp.eq.s32.totalorder %s18, 0
      %p155 = por %p153, %p154
      %p156 = scmp.le.s32.totalorder 1, %s12
      %p157 = scmp.lt.s32.totalorder %s12, 3
      %p158 = pnand %p156, %p157
      %p159 = pneg %p158
      // Predicated region
      $region9: #{tpu_custom_call.1} parent=5 // pred_check
        _
      $region10: #{tpu_custom_call.1} parent=5 // pred_check_branch
        %161 = sbr.rel (%p158) target = $region12
      $region11: #{tpu_custom_call.1} parent=5 // pred_region
        %s162 = ssub.s32 %s12, 1
        // Predicated region
        $region13: #{tpu_custom_call.1} parent=11 // pred_check
          %p163 = pneg %p59
        $region14: #{tpu_custom_call.1} parent=11 // pred_check_branch
          %165 = sbr.rel (%p163) target = $region16
        $region15: #{tpu_custom_call.1} parent=11 // pred_region
          _
        $region16: #{tpu_custom_call.1} parent=11 // pred_fallthru
          _
        // Predicated region
        $region17: #{tpu_custom_call.1} parent=11 // pred_check
          %p166 = pneg %p80
        $region18: #{tpu_custom_call.1} parent=11 // pred_check_branch
          %168 = sbr.rel (%p166) target = $region20
        $region19: #{tpu_custom_call.1} parent=11 // pred_region
          _
        $region20: #{tpu_custom_call.1} parent=11 // pred_fallthru
          _
        // Predicated region
        $region21: #{tpu_custom_call.1} parent=11 // pred_check
          %p169 = pneg %p101
        $region22: #{tpu_custom_call.1} parent=11 // pred_check_branch
          %171 = sbr.rel (%p169) target = $region24
        $region23: #{tpu_custom_call.1} parent=11 // pred_region
          %s173 = ssub.s32 1536, 1536
          %174 = vsyncadd [#allocation3], %s173
          %s175 = sshll.u32 [#allocation2], 4
          %s176 = int_to_ptr.vmem [resolvable:$true] %s175
          %181 = dma.hbm_to_vmem [thread:$0]  %s3, 1536, %s176, [#allocation3], 128, 128, 8
        $region24: #{tpu_custom_call.1} parent=11 // pred_fallthru
          _
        // Predicated region
        $region25: #{tpu_custom_call.1} parent=11 // pred_check
          %p182 = pneg %p122
        $region26: #{tpu_custom_call.1} parent=11 // pred_check_branch
          %184 = sbr.rel (%p182) target = $region28
        $region27: #{tpu_custom_call.1} parent=11 // pred_region
          _
        $region28: #{tpu_custom_call.1} parent=11 // pred_fallthru
          _
      $region12: #{tpu_custom_call.1} parent=5 // pred_fallthru
        _
      %p185 = scmp.lt.s32.totalorder %s12, 2
      // Predicated region
      $region29: #{tpu_custom_call.1} parent=5 // pred_check
        %p186 = pneg %p185
      $region30: #{tpu_custom_call.1} parent=5 // pred_check_branch
        %188 = sbr.rel (%p186) target = $region32
      $region31: #{tpu_custom_call.1} parent=5 // pred_region
        // Predicated region
        $region33: #{tpu_custom_call.1} parent=31 // pred_check
          %p189 = pneg %p32
        $region34: #{tpu_custom_call.1} parent=31 // pred_check_branch
          %191 = sbr.rel (%p189) target = $region36
        $region35: #{tpu_custom_call.1} parent=31 // pred_region
          %s192 = smul.u32 2, %s12
          %p193 = scmp.lt.s32.totalorder %s192, 3
          %s194 = scalar_select %p193, %s192, 3
          %s195 = smul.addr %s194, 8
          %s196 = scalar_lea.vmem %s0, %s195
          %s197 = smul.u32 2, %s12
        $region36: #{tpu_custom_call.1} parent=31 // pred_fallthru
          _
      $region32: #{tpu_custom_call.1} parent=5 // pred_fallthru
        _
      %p198 = scmp.le.s32.totalorder 1, %s12
      %p199 = scmp.lt.s32.totalorder %s12, 3
      %p200 = pnand %p198, %p199
      %p201 = pneg %p200
      // Predicated region
      $region37: #{tpu_custom_call.1} parent=5 // pred_check
        _
      $region38: #{tpu_custom_call.1} parent=5 // pred_check_branch
        %203 = sbr.rel (%p200) target = $region40
      $region39: #{tpu_custom_call.1} parent=5 // pred_region
        %s204 = ssub.s32 %s12, 1
        // Predicated region
        $region41: #{tpu_custom_call.1} parent=39 // pred_check
          %p205 = pneg %p101
        $region42: #{tpu_custom_call.1} parent=39 // pred_check_branch
          %207 = sbr.rel (%p205) target = $region44
        $region43: #{tpu_custom_call.1} parent=39 // pred_region
          %208 = dma.done [#allocation3], 1536
        $region44: #{tpu_custom_call.1} parent=39 // pred_fallthru
          _
        %s209 = smul.u32 2, %s17
        %p210 = scmp.lt.s32.totalorder %s209, 3
        %s211 = scalar_select %p210, %s209, 3
        %s212 = smul.addr %s211, 8
        %s213 = scalar_lea.vmem %s0, %s212
        %p214 = pneg %p38
        %p215 = pneg %p35
        %p216 = pneg %p59
        %p217 = pneg %p56
        %p218 = pneg %p80
        %p219 = pneg %p77
        %p220 = pneg %p101
        %p221 = pneg %p98
        %p222 = pneg %p122
        %p223 = pneg %p119
        %p224 = pneg %p148
        %p225 = pneg %p145
        %s226 = smul.u32 2, %s17
        %p227 = scmp.lt.s32.totalorder %s226, 3
        %s228 = scalar_select %p227, %s226, 3
        %s229 = smul.addr %s228, 8
        %s230 = scalar_lea.vmem %s5, %s229
        %s231 = smul.u32 2, %s17
        %p232 = scmp.lt.s32.totalorder %s231, 3
        %s233 = scalar_select %p232, %s231, 3
        %s234 = smul.addr %s233, 8
        %s235 = scalar_lea.vmem %s0, %s234
        %s236 = smul.u32 2, %s17
        %s237 = smul.u32 2, %s17
        %p238 = scmp.lt.s32.totalorder %s237, 3
        %s239 = scalar_select %p238, %s237, 3
        %s240 = smul.addr %s239, 8
        %s241 = scalar_lea.vmem %s5, %s240
        %s242 = smul.u32 2, %s17
        %v243 = vld [vmem:[%s2] sm:$0xff]
        %v244 = vld [vmem:[%s2 + $0x8] sm:$0xff]
        %v245 = vld [vmem:[%s2 + $0x10] sm:$0xff]
        %v246 = vld [vmem:[%s2 + $0x18] sm:$0xff]
        %v247 = vld [vmem:[%s235] sm:$0x3f]
        %v248 = vld [vmem:[%s235 + $0x8] sm:$0x3f]
        %v249 = vld [vmem:[#allocation2] sm:$0xff]
        %v250 = vld [vmem:[#allocation2 + $0x8] sm:$0xff]
        %v251 = vld [vmem:[#allocation2 + $0x10] sm:$0xff]
        %v252 = vld [vmem:[#allocation2 + $0x18] sm:$0xff]
        %v253 = vld [vmem:[%s4] sm:$0x1]
        %v254 = vld [vmem:[%s1] sm:$0x3f]
        %v257 = vcombine.high %v247, %v247
        %v259 = vunpack.c.l.s4 1983009808
        %v260 = vunpack.c.0.s8 %v259
        %v261 = vlaneseq
        %v262 = vshrl.u32 %v261, 7
        %v263 = vsub.s32 %v260, %v262
        %v264 = vrot.slane %v247, %v263
        %v266 = vunpack.c.l.s4 1983009808
        %v267 = vunpack.c.0.s8 %v266
        %v268 = vlaneseq
        %v269 = vshrl.u32 %v268, 7
        %v270 = vsub.s32 %v267, %v269
        %v271 = vrot.slane %v257, %v270
        %v272 = vcombine.high %v264, %v264
        %v273 = vcombine.high %v248, %v248
        %v275 = vunpack.c.l.s4 1983009808
        %v276 = vunpack.c.0.s8 %v275
        %v277 = vlaneseq
        %v278 = vshrl.u32 %v277, 7
        %v279 = vsub.s32 %v276, %v278
        %v280 = vrot.slane %v248, %v279
        %v282 = vunpack.c.l.s4 1983009808
        %v283 = vunpack.c.0.s8 %v282
        %v284 = vlaneseq
        %v285 = vshrl.u32 %v284, 7
        %v286 = vsub.s32 %v283, %v285
        %v287 = vrot.slane %v273, %v286
        %v288 = vcombine.high %v280, %v280
        %v289 = vcombine.low %v264, %v272
        %v290 = vcombine.low %v271, %v280
        %v292 = vunpack.c.l.s4 1983009808
        %v293 = vunpack.c.0.s8 %v292
        %v294 = vlaneseq
        %v295 = vshrl.u32 %v294, 7
        %v296 = vsub.s32 %v293, %v295
        %v297 = vrot.slane %v289, %v296
        %v299 = vunpack.c.l.s4 1983009808
        %v300 = vunpack.c.0.s8 %v299
        %v301 = vlaneseq
        %v302 = vshrl.u32 %v301, 7
        %v303 = vsub.s32 %v300, %v302
        %v304 = vrot.slane %v290, %v303
        %v305 = vcombine.low %v297, %v304
        %v306 = vcombine.low %v288, %v287
        %v308 = vunpack.c.l.s4 1983009808
        %v309 = vunpack.c.0.s8 %v308
        %v310 = vlaneseq
        %v311 = vshrl.u32 %v310, 7
        %v312 = vsub.s32 %v309, %v311
        %v313 = vrot.slane %v306, %v312
        %vm314 = vcmask 261120
        %v315 = vsel %vm314, %v305, 0
        %v317 = vsel %vm314, %v313, 0
        %319 = vmatprep.subr.mxu0 0.0
        %320 = vmatpush1.msra.mxu0 0.0
        %321 = vmatprep.subr.mxu0 0.0
        %322 = vmatpush1.msra.mxu0 0.0
        %323 = vmatprep.subr.mxu0 0.0
        %324 = vmatpush1.msra.mxu0 0.0
        %325 = vmatprep.subr.mxu0 0.0
        %326 = vmatpush1.msra.mxu0 0.0
        %327 = vmatprep.subr.mxu0 0.0
        %328 = vmatpush1.msra.mxu0 0.0
        %329 = vmatprep.subr.mxu0 0.0
        %330 = vmatpush1.msra.mxu0 0.0
        %331 = vmatprep.subr.mxu0 0.0
        %332 = vmatpush1.msra.mxu0 0.0
        %333 = vmatprep.subr.mxu0 0.0
        %334 = vmatpush1.msra.mxu0 0.0
        %335 = vmatprep.subr.mxu0 0.0
        %336 = vmatpush1.msra.mxu0 0.0
        %337 = vmatprep.subr.mxu0 0.0
        %338 = vmatpush1.msra.mxu0 0.0
        %339 = vmatprep.subr.mxu0 0.0
        %340 = vmatpush1.msra.mxu0 0.0
        %341 = vmatprep.subr.mxu0 0.0
        %342 = vmatpush1.msra.mxu0 0.0
        %343 = vmatprep.subr.mxu0 0.0
        %344 = vmatpush1.msra.mxu0 %v252
        %345 = vmatprep.subr.mxu0 0.0
        %346 = vmatpush1.msra.mxu0 %v251
        %347 = vmatprep.subr.mxu0 0.0
        %348 = vmatpush1.msra.mxu0 %v250
        %349 = vmatprep.subr.mxu0 0.0
        %350 = vmatpush1.msra.mxu0 %v249
        %351 = vmatprep.subr.mxu0 0.0
        %352 = vmatpush2.msra.mxu0 0.0
        %353 = vmatprep.subr.mxu0 0.0
        %354 = vmatpush2.msra.mxu0 0.0
        %355 = vmatprep.subr.mxu0 0.0
        %356 = vmatpush2.msra.mxu0 0.0
        %357 = vmatprep.subr.mxu0 0.0
        %358 = vmatpush2.msra.mxu0 0.0
        %359 = vmatprep.subr.mxu0 0.0
        %360 = vmatpush2.msra.mxu0 0.0
        %361 = vmatprep.subr.mxu0 0.0
        %362 = vmatpush2.msra.mxu0 0.0
        %363 = vmatprep.subr.mxu0 0.0
        %364 = vmatpush2.msra.mxu0 0.0
        %365 = vmatprep.subr.mxu0 0.0
        %366 = vmatpush2.msra.mxu0 0.0
        %367 = vmatprep.subr.mxu0 0.0
        %368 = vmatpush2.msra.mxu0 0.0
        %369 = vmatprep.subr.mxu0 0.0
        %370 = vmatpush2.msra.mxu0 0.0
        %371 = vmatprep.subr.mxu0 0.0
        %372 = vmatpush2.msra.mxu0 0.0
        %373 = vmatprep.subr.mxu0 0.0
        %374 = vmatpush2.msra.mxu0 0.0
        %375 = vmatprep.subr.mxu0 0.0
        %376 = vmatpush2.msra.mxu0 0.0
        %377 = vmatprep.subr.mxu0 0.0
        %378 = vmatpush2.msra.mxu0 0.0
        %379 = vmatprep.subr.mxu0 0.0
        %380 = vmatpush2.msra.mxu0 0.0
        %381 = vmatprep.subr.mxu0 0.0
        %382 = vmatpush2.msra.mxu0 0.0
        %383 = vmatprep.mubr.f32.mxu0 0.0
        %384 = vmatmul.mubr.f32.gmra.mxu0 %v315
        %v385 = vpop.f32.mrf.mxu0
        %v386 = vadd.f32 0.0, %v385
        %v387 = vpop.f32.mrf.mxu0
        %388 = vmatprep.mubr.f32.mxu0 0.0
        %389 = vmatmul.mubr.f32.gmra.mxu0 %v317
        %v390 = vpop.f32.mrf.mxu0
        %v391 = vadd.f32 0.0, %v390
        %v392 = vpop.f32.mrf.mxu0
        %393 = vdwg.mxu0
        %v396 = vcombine.high %v386, %v386
        %v398 = vunpack.c.l.s4 1983009808
        %v399 = vunpack.c.0.s8 %v398
        %v400 = vlaneseq
        %v401 = vshrl.u32 %v400, 7
        %v402 = vsub.s32 %v399, %v401
        %v403 = vrot.slane %v386, %v402
        %v405 = vunpack.c.l.s4 1983009808
        %v406 = vunpack.c.0.s8 %v405
        %v407 = vlaneseq
        %v408 = vshrl.u32 %v407, 7
        %v409 = vsub.s32 %v406, %v408
        %v410 = vrot.slane %v396, %v409
        %v411 = vcombine.high %v403, %v403
        %v412 = vcombine.high %v410, %v410
        %v414 = vunpack.c.l.s4 1983009808
        %v415 = vunpack.c.0.s8 %v414
        %v416 = vlaneseq
        %v417 = vshrl.u32 %v416, 7
        %v418 = vsub.s32 %v415, %v417
        %v419 = vrot.slane %v391, %v418
        %v420 = vcombine.high %v419, %v419
        %v428 = vlaneseq
        %v429 = vshrl.u32 %v428, 7
        %v430 = vsub.s32 0, %v429
        %v431 = vrot.slane %v253, %v430
        %v432 = vcombine.high %v431, %v431
        %v434 = vunpack.c.l.s4 1983009808
        %v435 = vunpack.c.0.s8 %v434
        %v436 = vlaneseq
        %v437 = vshrl.u32 %v436, 7
        %v438 = vsub.s32 %v435, %v437
        %v439 = vrot.slane %v431, %v438
        %v441 = vunpack.c.l.s4 1983009808
        %v442 = vunpack.c.0.s8 %v441
        %v443 = vlaneseq
        %v444 = vshrl.u32 %v443, 7
        %v445 = vsub.s32 %v442, %v444
        %v446 = vrot.slane %v432, %v445
        %v447 = vcombine.high %v439, %v439
        %448 = vrot.lane.b32.xlu0 %v439, 96
        %v449 = vpop.permute.xlu0 %448
        %450 = vrot.lane.b32.xlu0 %v447, 96
        %v451 = vpop.permute.xlu0 %450
        %452 = vrot.lane.b32.xlu0 %v446, 96
        %v453 = vpop.permute.xlu0 %452
        %v457 = vadd.f32 %v403, %v449
        %v458 = vadd.f32 %v411, %v451
        %v459 = vadd.f32 %v410, %v453
        %v460 = vadd.f32 %v412, %v449
        %v461 = vadd.f32 %v419, %v451
        %v462 = vadd.f32 %v420, %v453
        %v463 = vxor.u32 %v457, 2147483648
        %v464 = vxor.u32 %v458, 2147483648
        %v465 = vxor.u32 %v459, 2147483648
        %v466 = vxor.u32 %v460, 2147483648
        %v467 = vxor.u32 %v461, 2147483648
        %v468 = vxor.u32 %v462, 2147483648
        %v469 = vmul.f32 %v463, 1.442695
        %v470 = vpow.pop %v469
        %v471 = vmul.f32 %v464, 1.442695
        %v472 = vpow.pop %v471
        %v473 = vmul.f32 %v465, 1.442695
        %v474 = vpow.pop %v473
        %v475 = vmul.f32 %v466, 1.442695
        %v476 = vpow.pop %v475
        %v477 = vmul.f32 %v467, 1.442695
        %v478 = vpow.pop %v477
        %v479 = vmul.f32 %v468, 1.442695
        %v480 = vpow.pop %v479
        %v481 = vadd.f32 %v470, 1.0
        %v482 = vadd.f32 %v472, 1.0
        %v483 = vadd.f32 %v474, 1.0
        %v484 = vadd.f32 %v476, 1.0
        %v485 = vadd.f32 %v478, 1.0
        %v486 = vadd.f32 %v480, 1.0
        %v487 = vrcp.pop %v481
        %v488 = vmul.f32 1.0, %v487
        %v489 = vrcp.pop %v482
        %v490 = vmul.f32 1.0, %v489
        %v491 = vrcp.pop %v483
        %v492 = vmul.f32 1.0, %v491
        %v493 = vrcp.pop %v484
        %v494 = vmul.f32 1.0, %v493
        %v495 = vrcp.pop %v485
        %v496 = vmul.f32 1.0, %v495
        %v497 = vrcp.pop %v486
        %v498 = vmul.f32 1.0, %v497
        %v499 = vcombine.low %v403, %v411
        %v501 = vunpack.c.l.s4 1983009808
        %v502 = vunpack.c.0.s8 %v501
        %v503 = vlaneseq
        %v504 = vshrl.u32 %v503, 7
        %v505 = vsub.s32 %v502, %v504
        %v506 = vrot.slane %v499, %v505
        %v508 = vunpack.c.l.s4 1983009808
        %v509 = vunpack.c.0.s8 %v508
        %v510 = vlaneseq
        %v511 = vshrl.u32 %v510, 7
        %v512 = vsub.s32 %v509, %v511
        %v513 = vrot.slane %v410, %v512
        %v514 = vcombine.low %v506, %v513
        %v515 = vcombine.low %v412, %v419
        %v517 = vunpack.c.l.s4 1983009808
        %v518 = vunpack.c.0.s8 %v517
        %v519 = vlaneseq
        %v520 = vshrl.u32 %v519, 7
        %v521 = vsub.s32 %v518, %v520
        %v522 = vrot.slane %v515, %v521
        %v524 = vunpack.c.l.s4 1983009808
        %v525 = vunpack.c.0.s8 %v524
        %v526 = vlaneseq
        %v527 = vshrl.u32 %v526, 7
        %v528 = vsub.s32 %v525, %v527
        %v529 = vrot.slane %v420, %v528
        %v530 = vcombine.low %v522, %v529
        %vm533 = vcmask 521472
        %v534 = vsel %vm533, %v514, -inf
        %v535 = vrot.slane %v534, 4
        %v536 = vmax.f32 %v534, %v535
        %v537 = vrot.slane %v536, 2
        %v538 = vmax.f32 %v536, %v537
        %v539 = vrot.slane %v538, 1
        %v540 = vmax.f32 %v538, %v539
        %v541 = vsel %vm533, %v530, -inf
        %v542 = vrot.slane %v541, 4
        %v543 = vmax.f32 %v541, %v542
        %v544 = vrot.slane %v543, 2
        %v545 = vmax.f32 %v543, %v544
        %v546 = vrot.slane %v545, 1
        %v547 = vmax.f32 %v545, %v546
        %v550 = vcombine.high %v540, %v540
        %v552 = vunpack.c.l.s4 1983009808
        %v553 = vunpack.c.0.s8 %v552
        %v554 = vlaneseq
        %v555 = vshrl.u32 %v554, 7
        %v556 = vsub.s32 %v553, %v555
        %v557 = vrot.slane %v540, %v556
        %v559 = vunpack.c.l.s4 1983009808
        %v560 = vunpack.c.0.s8 %v559
        %v561 = vlaneseq
        %v562 = vshrl.u32 %v561, 7
        %v563 = vsub.s32 %v560, %v562
        %v564 = vrot.slane %v550, %v563
        %v565 = vcombine.high %v557, %v557
        %v566 = vcombine.high %v547, %v547
        %v568 = vunpack.c.l.s4 1983009808
        %v569 = vunpack.c.0.s8 %v568
        %v570 = vlaneseq
        %v571 = vshrl.u32 %v570, 7
        %v572 = vsub.s32 %v569, %v571
        %v573 = vrot.slane %v547, %v572
        %v575 = vunpack.c.l.s4 1983009808
        %v576 = vunpack.c.0.s8 %v575
        %v577 = vlaneseq
        %v578 = vshrl.u32 %v577, 7
        %v579 = vsub.s32 %v576, %v578
        %v580 = vrot.slane %v566, %v579
        %v581 = vcombine.high %v573, %v573
        %v588 = vsub.f32 %v403, %v557
        %v589 = vsub.f32 %v411, %v565
        %v590 = vsub.f32 %v410, %v564
        %v591 = vsub.f32 %v412, %v573
        %v592 = vsub.f32 %v419, %v581
        %v593 = vsub.f32 %v420, %v580
        %v594 = vmul.f32 %v588, 1.442695
        %v595 = vpow.pop %v594
        %v596 = vmul.f32 %v589, 1.442695
        %v597 = vpow.pop %v596
        %v598 = vmul.f32 %v590, 1.442695
        %v599 = vpow.pop %v598
        %v600 = vmul.f32 %v591, 1.442695
        %v601 = vpow.pop %v600
        %v602 = vmul.f32 %v592, 1.442695
        %v603 = vpow.pop %v602
        %v604 = vmul.f32 %v593, 1.442695
        %v605 = vpow.pop %v604
        %v612 = vcombine.low %v595, %v597
        %v614 = vunpack.c.l.s4 1983009808
        %v615 = vunpack.c.0.s8 %v614
        %v616 = vlaneseq
        %v617 = vshrl.u32 %v616, 7
        %v618 = vsub.s32 %v615, %v617
        %v619 = vrot.slane %v612, %v618
        %v621 = vunpack.c.l.s4 1983009808
        %v622 = vunpack.c.0.s8 %v621
        %v623 = vlaneseq
        %v624 = vshrl.u32 %v623, 7
        %v625 = vsub.s32 %v622, %v624
        %v626 = vrot.slane %v599, %v625
        %v627 = vcombine.low %v619, %v626
        %v628 = vcombine.low %v601, %v603
        %v630 = vunpack.c.l.s4 1983009808
        %v631 = vunpack.c.0.s8 %v630
        %v632 = vlaneseq
        %v633 = vshrl.u32 %v632, 7
        %v634 = vsub.s32 %v631, %v633
        %v635 = vrot.slane %v628, %v634
        %v637 = vunpack.c.l.s4 1983009808
        %v638 = vunpack.c.0.s8 %v637
        %v639 = vlaneseq
        %v640 = vshrl.u32 %v639, 7
        %v641 = vsub.s32 %v638, %v640
        %v642 = vrot.slane %v605, %v641
        %v643 = vcombine.low %v635, %v642
        %v646 = vsel %vm533, %v627, 0.0
        %v647 = vrot.slane %v646, 4
        %v648 = vadd.f32 %v646, %v647
        %v649 = vrot.slane %v648, 2
        %v650 = vadd.f32 %v648, %v649
        %v651 = vrot.slane %v650, 1
        %v652 = vadd.f32 %v650, %v651
        %v653 = vsel %vm533, %v643, 0.0
        %v654 = vrot.slane %v653, 4
        %v655 = vadd.f32 %v653, %v654
        %v656 = vrot.slane %v655, 2
        %v657 = vadd.f32 %v655, %v656
        %v658 = vrot.slane %v657, 1
        %v659 = vadd.f32 %v657, %v658
        %v662 = vcombine.high %v652, %v652
        %v664 = vunpack.c.l.s4 1983009808
        %v665 = vunpack.c.0.s8 %v664
        %v666 = vlaneseq
        %v667 = vshrl.u32 %v666, 7
        %v668 = vsub.s32 %v665, %v667
        %v669 = vrot.slane %v652, %v668
        %v671 = vunpack.c.l.s4 1983009808
        %v672 = vunpack.c.0.s8 %v671
        %v673 = vlaneseq
        %v674 = vshrl.u32 %v673, 7
        %v675 = vsub.s32 %v672, %v674
        %v676 = vrot.slane %v662, %v675
        %v677 = vcombine.high %v669, %v669
        %v678 = vcombine.high %v659, %v659
        %v680 = vunpack.c.l.s4 1983009808
        %v681 = vunpack.c.0.s8 %v680
        %v682 = vlaneseq
        %v683 = vshrl.u32 %v682, 7
        %v684 = vsub.s32 %v681, %v683
        %v685 = vrot.slane %v659, %v684
        %v687 = vunpack.c.l.s4 1983009808
        %v688 = vunpack.c.0.s8 %v687
        %v689 = vlaneseq
        %v690 = vshrl.u32 %v689, 7
        %v691 = vsub.s32 %v688, %v690
        %v692 = vrot.slane %v678, %v691
        %v693 = vcombine.high %v685, %v685
        %v700 = vrcp.pop %v669
        %v701 = vmul.f32 %v595, %v700
        %v702 = vrcp.pop %v677
        %v703 = vmul.f32 %v597, %v702
        %v704 = vrcp.pop %v676
        %v705 = vmul.f32 %v599, %v704
        %v706 = vrcp.pop %v685
        %v707 = vmul.f32 %v601, %v706
        %v708 = vrcp.pop %v693
        %v709 = vmul.f32 %v603, %v708
        %v710 = vrcp.pop %v692
        %v711 = vmul.f32 %v605, %v710
        %v713 = vcombine.high %v254, %v254
        %v715 = vunpack.c.l.s4 1983009808
        %v716 = vunpack.c.0.s8 %v715
        %v717 = vlaneseq
        %v718 = vshrl.u32 %v717, 7
        %v719 = vsub.s32 %v716, %v718
        %v720 = vrot.slane %v254, %v719
        %v722 = vunpack.c.l.s4 1983009808
        %v723 = vunpack.c.0.s8 %v722
        %v724 = vlaneseq
        %v725 = vshrl.u32 %v724, 7
        %v726 = vsub.s32 %v723, %v725
        %v727 = vrot.slane %v713, %v726
        %v728 = vcombine.high %v720, %v720
        %729 = vrot.lane.b32.xlu0 %v720, 32
        %v730 = vpop.permute.xlu0 %729
        %731 = vrot.lane.b32.xlu0 %v728, 32
        %v732 = vpop.permute.xlu0 %731
        %733 = vrot.lane.b32.xlu0 %v727, 32
        %v734 = vpop.permute.xlu0 %733
        %v738 = vadd.f32 %v701, %v730
        %v739 = vadd.f32 %v703, %v732
        %v740 = vadd.f32 %v705, %v734
        %v741 = vadd.f32 %v707, %v730
        %v742 = vadd.f32 %v709, %v732
        %v743 = vadd.f32 %v711, %v734
        %v747 = vcombine.low %v738, %v739
        %v749 = vunpack.c.l.s4 1983009808
        %v750 = vunpack.c.0.s8 %v749
        %v751 = vlaneseq
        %v752 = vshrl.u32 %v751, 7
        %v753 = vsub.s32 %v750, %v752
        %v754 = vrot.slane %v747, %v753
        %v756 = vunpack.c.l.s4 1983009808
        %v757 = vunpack.c.0.s8 %v756
        %v758 = vlaneseq
        %v759 = vshrl.u32 %v758, 7
        %v760 = vsub.s32 %v757, %v759
        %v761 = vrot.slane %v740, %v760
        %v762 = vcombine.low %v754, %v761
        %763 = vrot.lane.b32.xlu0 %v762, 96
        %v764 = vpop.permute.xlu0 %763
        %766 = vxpose.xlu0.b32.start [1/16] %v764, 128
        %767 = vxpose.xlu0.b32.cont [2/16] 0.0, 128
        %768 = vxpose.xlu0.b32.cont [3/16] 0.0, 128
        %769 = vxpose.xlu0.b32.cont [4/16] 0.0, 128
        %770 = vxpose.xlu0.b32.cont [5/16] 0.0, 128
        %771 = vxpose.xlu0.b32.cont [6/16] 0.0, 128
        %772 = vxpose.xlu0.b32.cont [7/16] 0.0, 128
        %773 = vxpose.xlu0.b32.cont [8/16] 0.0, 128
        %774 = vxpose.xlu0.b32.cont [9/16] 0.0, 128
        %775 = vxpose.xlu0.b32.cont [10/16] 0.0, 128
        %776 = vxpose.xlu0.b32.cont [11/16] 0.0, 128
        %777 = vxpose.xlu0.b32.cont [12/16] 0.0, 128
        %778 = vxpose.xlu0.b32.cont [13/16] 0.0, 128
        %779 = vxpose.xlu0.b32.cont [14/16] 0.0, 128
        %780 = vxpose.xlu0.b32.cont [15/16] 0.0, 128
        %781 = vxpose.xlu0.b32.end [16/16] 0.0, 128
        %v782 = vpop.trf.xlu0
        %v783 = vpop.trf.xlu0
        %v784 = vpop.trf.xlu0
        %v785 = vpop.trf.xlu0
        %v786 = vpop.trf.xlu0
        %v787 = vpop.trf.xlu0
        %v788 = vpop.trf.xlu0
        %v789 = vpop.trf.xlu0
        %v790 = vpop.trf.xlu0
        %v791 = vpop.trf.xlu0
        %v792 = vpop.trf.xlu0
        %v793 = vpop.trf.xlu0
        %v794 = vpop.trf.xlu0
        %v795 = vpop.trf.xlu0
        %v796 = vpop.trf.xlu0
        %v797 = vpop.trf.xlu0
        %798 = vrot.lane.b32.xlu0 %v514, 64
        %v799 = vpop.permute.xlu0 %798
        %vm800 = vcmask 48128
        %v802 = vsel %vm800, %v782, 0
        %v805 = vsel %vm800, %v783, 0
        %v808 = vsel %vm800, %v784, 0
        %v811 = vsel %vm800, %v785, 0
        %vm813 = vcmask 1045504
        %v814 = vsel %vm813, %v799, 0
        %816 = vmatprep.subr.mxu0 0.0
        %817 = vmatpush1.msra.mxu0 0.0
        %818 = vmatprep.subr.mxu0 0.0
        %819 = vmatpush1.msra.mxu0 0.0
        %820 = vmatprep.subr.mxu0 0.0
        %821 = vmatpush1.msra.mxu0 0.0
        %822 = vmatprep.subr.mxu0 0.0
        %823 = vmatpush1.msra.mxu0 0.0
        %824 = vmatprep.subr.mxu0 0.0
        %825 = vmatpush1.msra.mxu0 0.0
        %826 = vmatprep.subr.mxu0 0.0
        %827 = vmatpush1.msra.mxu0 0.0
        %828 = vmatprep.subr.mxu0 0.0
        %829 = vmatpush1.msra.mxu0 0.0
        %830 = vmatprep.subr.mxu0 0.0
        %831 = vmatpush1.msra.mxu0 0.0
        %832 = vmatprep.subr.mxu0 0.0
        %833 = vmatpush1.msra.mxu0 0.0
        %834 = vmatprep.subr.mxu0 0.0
        %835 = vmatpush1.msra.mxu0 0.0
        %836 = vmatprep.subr.mxu0 0.0
        %837 = vmatpush1.msra.mxu0 0.0
        %838 = vmatprep.subr.mxu0 0.0
        %839 = vmatpush1.msra.mxu0 0.0
        %840 = vmatprep.subr.mxu0 0.0
        %841 = vmatpush1.msra.mxu0 0.0
        %842 = vmatprep.subr.mxu0 0.0
        %843 = vmatpush1.msra.mxu0 0.0
        %844 = vmatprep.subr.mxu0 0.0
        %845 = vmatpush1.msra.mxu0 0.0
        %846 = vmatprep.subr.mxu0 0.0
        %847 = vmatpush1.msra.mxu0 %v814
        %848 = vmatprep.subr.mxu0 0.0
        %849 = vmatpush2.msra.mxu0 0.0
        %850 = vmatprep.subr.mxu0 0.0
        %851 = vmatpush2.msra.mxu0 0.0
        %852 = vmatprep.subr.mxu0 0.0
        %853 = vmatpush2.msra.mxu0 0.0
        %854 = vmatprep.subr.mxu0 0.0
        %855 = vmatpush2.msra.mxu0 0.0
        %856 = vmatprep.subr.mxu0 0.0
        %857 = vmatpush2.msra.mxu0 0.0
        %858 = vmatprep.subr.mxu0 0.0
        %859 = vmatpush2.msra.mxu0 0.0
        %860 = vmatprep.subr.mxu0 0.0
        %861 = vmatpush2.msra.mxu0 0.0
        %862 = vmatprep.subr.mxu0 0.0
        %863 = vmatpush2.msra.mxu0 0.0
        %864 = vmatprep.subr.mxu0 0.0
        %865 = vmatpush2.msra.mxu0 0.0
        %866 = vmatprep.subr.mxu0 0.0
        %867 = vmatpush2.msra.mxu0 0.0
        %868 = vmatprep.subr.mxu0 0.0
        %869 = vmatpush2.msra.mxu0 0.0
        %870 = vmatprep.subr.mxu0 0.0
        %871 = vmatpush2.msra.mxu0 0.0
        %872 = vmatprep.subr.mxu0 0.0
        %873 = vmatpush2.msra.mxu0 0.0
        %874 = vmatprep.subr.mxu0 0.0
        %875 = vmatpush2.msra.mxu0 0.0
        %876 = vmatprep.subr.mxu0 0.0
        %877 = vmatpush2.msra.mxu0 0.0
        %878 = vmatprep.subr.mxu0 0.0
        %879 = vmatpush2.msra.mxu0 0.0
        %880 = vmatprep.mubr.f32.mxu0 0.0
        %881 = vmatmul.mubr.f32.gmra.mxu0 %v802
        %v882 = vpop.f32.mrf.mxu0
        %v883 = vadd.f32 0.0, %v882
        %v884 = vpop.f32.mrf.mxu0
        %885 = vmatprep.mubr.f32.mxu0 0.0
        %886 = vmatmul.mubr.f32.gmra.mxu0 %v805
        %v887 = vpop.f32.mrf.mxu0
        %v888 = vadd.f32 0.0, %v887
        %v889 = vpop.f32.mrf.mxu0
        %890 = vmatprep.mubr.f32.mxu0 0.0
        %891 = vmatmul.mubr.f32.gmra.mxu0 %v808
        %v892 = vpop.f32.mrf.mxu0
        %v893 = vadd.f32 0.0, %v892
        %v894 = vpop.f32.mrf.mxu0
        %895 = vmatprep.mubr.f32.mxu0 0.0
        %896 = vmatmul.mubr.f32.gmra.mxu0 %v811
        %v897 = vpop.f32.mrf.mxu0
        %v898 = vadd.f32 0.0, %v897
        %v899 = vpop.f32.mrf.mxu0
        %900 = vdwg.mxu0
        %v904 = vcombine.low %v741, %v742
        %v906 = vunpack.c.l.s4 1983009808
        %v907 = vunpack.c.0.s8 %v906
        %v908 = vlaneseq
        %v909 = vshrl.u32 %v908, 7
        %v910 = vsub.s32 %v907, %v909
        %v911 = vrot.slane %v904, %v910
        %v913 = vunpack.c.l.s4 1983009808
        %v914 = vunpack.c.0.s8 %v913
        %v915 = vlaneseq
        %v916 = vshrl.u32 %v915, 7
        %v917 = vsub.s32 %v914, %v916
        %v918 = vrot.slane %v743, %v917
        %v919 = vcombine.low %v911, %v918
        %920 = vrot.lane.b32.xlu0 %v919, 96
        %v921 = vpop.permute.xlu0 %920
        %923 = vxpose.xlu0.b32.start [1/16] %v921, 128
        %924 = vxpose.xlu0.b32.cont [2/16] 0.0, 128
        %925 = vxpose.xlu0.b32.cont [3/16] 0.0, 128
        %926 = vxpose.xlu0.b32.cont [4/16] 0.0, 128
        %927 = vxpose.xlu0.b32.cont [5/16] 0.0, 128
        %928 = vxpose.xlu0.b32.cont [6/16] 0.0, 128
        %929 = vxpose.xlu0.b32.cont [7/16] 0.0, 128
        %930 = vxpose.xlu0.b32.cont [8/16] 0.0, 128
        %931 = vxpose.xlu0.b32.cont [9/16] 0.0, 128
        %932 = vxpose.xlu0.b32.cont [10/16] 0.0, 128
        %933 = vxpose.xlu0.b32.cont [11/16] 0.0, 128
        %934 = vxpose.xlu0.b32.cont [12/16] 0.0, 128
        %935 = vxpose.xlu0.b32.cont [13/16] 0.0, 128
        %936 = vxpose.xlu0.b32.cont [14/16] 0.0, 128
        %937 = vxpose.xlu0.b32.cont [15/16] 0.0, 128
        %938 = vxpose.xlu0.b32.end [16/16] 0.0, 128
        %v939 = vpop.trf.xlu0
        %v940 = vpop.trf.xlu0
        %v941 = vpop.trf.xlu0
        %v942 = vpop.trf.xlu0
        %v943 = vpop.trf.xlu0
        %v944 = vpop.trf.xlu0
        %v945 = vpop.trf.xlu0
        %v946 = vpop.trf.xlu0
        %v947 = vpop.trf.xlu0
        %v948 = vpop.trf.xlu0
        %v949 = vpop.trf.xlu0
        %v950 = vpop.trf.xlu0
        %v951 = vpop.trf.xlu0
        %v952 = vpop.trf.xlu0
        %v953 = vpop.trf.xlu0
        %v954 = vpop.trf.xlu0
        %955 = vrot.lane.b32.xlu0 %v530, 64
        %v956 = vpop.permute.xlu0 %955
        %v958 = vsel %vm800, %v939, 0
        %v961 = vsel %vm800, %v940, 0
        %v964 = vsel %vm800, %v941, 0
        %v967 = vsel %vm800, %v942, 0
        %v969 = vsel %vm813, %v956, 0
        %971 = vmatprep.subr.mxu0 0.0
        %972 = vmatpush1.msra.mxu0 0.0
        %973 = vmatprep.subr.mxu0 0.0
        %974 = vmatpush1.msra.mxu0 0.0
        %975 = vmatprep.subr.mxu0 0.0
        %976 = vmatpush1.msra.mxu0 0.0
        %977 = vmatprep.subr.mxu0 0.0
        %978 = vmatpush1.msra.mxu0 0.0
        %979 = vmatprep.subr.mxu0 0.0
        %980 = vmatpush1.msra.mxu0 0.0
        %981 = vmatprep.subr.mxu0 0.0
        %982 = vmatpush1.msra.mxu0 0.0
        %983 = vmatprep.subr.mxu0 0.0
        %984 = vmatpush1.msra.mxu0 0.0
        %985 = vmatprep.subr.mxu0 0.0
        %986 = vmatpush1.msra.mxu0 0.0
        %987 = vmatprep.subr.mxu0 0.0
        %988 = vmatpush1.msra.mxu0 0.0
        %989 = vmatprep.subr.mxu0 0.0
        %990 = vmatpush1.msra.mxu0 0.0
        %991 = vmatprep.subr.mxu0 0.0
        %992 = vmatpush1.msra.mxu0 0.0
        %993 = vmatprep.subr.mxu0 0.0
        %994 = vmatpush1.msra.mxu0 0.0
        %995 = vmatprep.subr.mxu0 0.0
        %996 = vmatpush1.msra.mxu0 0.0
        %997 = vmatprep.subr.mxu0 0.0
        %998 = vmatpush1.msra.mxu0 0.0
        %999 = vmatprep.subr.mxu0 0.0
        %1000 = vmatpush1.msra.mxu0 0.0
        %1001 = vmatprep.subr.mxu0 0.0
        %1002 = vmatpush1.msra.mxu0 %v969
        %1003 = vmatprep.subr.mxu0 0.0
        %1004 = vmatpush2.msra.mxu0 0.0
        %1005 = vmatprep.subr.mxu0 0.0
        %1006 = vmatpush2.msra.mxu0 0.0
        %1007 = vmatprep.subr.mxu0 0.0
        %1008 = vmatpush2.msra.mxu0 0.0
        %1009 = vmatprep.subr.mxu0 0.0
        %1010 = vmatpush2.msra.mxu0 0.0
        %1011 = vmatprep.subr.mxu0 0.0
        %1012 = vmatpush2.msra.mxu0 0.0
        %1013 = vmatprep.subr.mxu0 0.0
        %1014 = vmatpush2.msra.mxu0 0.0
        %1015 = vmatprep.subr.mxu0 0.0
        %1016 = vmatpush2.msra.mxu0 0.0
        %1017 = vmatprep.subr.mxu0 0.0
        %1018 = vmatpush2.msra.mxu0 0.0
        %1019 = vmatprep.subr.mxu0 0.0
        %1020 = vmatpush2.msra.mxu0 0.0
        %1021 = vmatprep.subr.mxu0 0.0
        %1022 = vmatpush2.msra.mxu0 0.0
        %1023 = vmatprep.subr.mxu0 0.0
        %1024 = vmatpush2.msra.mxu0 0.0
        %1025 = vmatprep.subr.mxu0 0.0
        %1026 = vmatpush2.msra.mxu0 0.0
        %1027 = vmatprep.subr.mxu0 0.0
        %1028 = vmatpush2.msra.mxu0 0.0
        %1029 = vmatprep.subr.mxu0 0.0
        %1030 = vmatpush2.msra.mxu0 0.0
        %1031 = vmatprep.subr.mxu0 0.0
        %1032 = vmatpush2.msra.mxu0 0.0
        %1033 = vmatprep.subr.mxu0 0.0
        %1034 = vmatpush2.msra.mxu0 0.0
        %1035 = vmatprep.mubr.f32.mxu0 0.0
        %1036 = vmatmul.mubr.f32.gmra.mxu0 %v958
        %v1037 = vpop.f32.mrf.mxu0
        %v1038 = vadd.f32 0.0, %v1037
        %v1039 = vpop.f32.mrf.mxu0
        %1040 = vmatprep.mubr.f32.mxu0 0.0
        %1041 = vmatmul.mubr.f32.gmra.mxu0 %v961
        %v1042 = vpop.f32.mrf.mxu0
        %v1043 = vadd.f32 0.0, %v1042
        %v1044 = vpop.f32.mrf.mxu0
        %1045 = vmatprep.mubr.f32.mxu0 0.0
        %1046 = vmatmul.mubr.f32.gmra.mxu0 %v964
        %v1047 = vpop.f32.mrf.mxu0
        %v1048 = vadd.f32 0.0, %v1047
        %v1049 = vpop.f32.mrf.mxu0
        %1050 = vmatprep.mubr.f32.mxu0 0.0
        %1051 = vmatmul.mubr.f32.gmra.mxu0 %v967
        %v1052 = vpop.f32.mrf.mxu0
        %v1053 = vadd.f32 0.0, %v1052
        %v1054 = vpop.f32.mrf.mxu0
        %1055 = vdwg.mxu0
        %v1056 = vmul.f32 %v883, %v243
        %v1057 = vmul.f32 %v888, %v244
        %v1058 = vmul.f32 %v893, %v245
        %v1059 = vmul.f32 %v898, %v246
        %v1060 = vmul.f32 %v1038, %v243
        %v1061 = vmul.f32 %v1043, %v244
        %v1062 = vmul.f32 %v1048, %v245
        %v1063 = vmul.f32 %v1053, %v246
        %v1064 = vsel %vm314, %v514, 0
        %1066 = vmatprep.subr.mxu0 0.0
        %1067 = vmatpush1.msra.mxu0 0.0
        %1068 = vmatprep.subr.mxu0 0.0
        %1069 = vmatpush1.msra.mxu0 0.0
        %1070 = vmatprep.subr.mxu0 0.0
        %1071 = vmatpush1.msra.mxu0 0.0
        %1072 = vmatprep.subr.mxu0 0.0
        %1073 = vmatpush1.msra.mxu0 0.0
        %1074 = vmatprep.subr.mxu0 0.0
        %1075 = vmatpush1.msra.mxu0 0.0
        %1076 = vmatprep.subr.mxu0 0.0
        %1077 = vmatpush1.msra.mxu0 0.0
        %1078 = vmatprep.subr.mxu0 0.0
        %1079 = vmatpush1.msra.mxu0 0.0
        %1080 = vmatprep.subr.mxu0 0.0
        %1081 = vmatpush1.msra.mxu0 0.0
        %1082 = vmatprep.subr.mxu0 0.0
        %1083 = vmatpush1.msra.mxu0 0.0
        %1084 = vmatprep.subr.mxu0 0.0
        %1085 = vmatpush1.msra.mxu0 0.0
        %1086 = vmatprep.subr.mxu0 0.0
        %1087 = vmatpush1.msra.mxu0 0.0
        %1088 = vmatprep.subr.mxu0 0.0
        %1089 = vmatpush1.msra.mxu0 0.0
        %1090 = vmatprep.subr.mxu0 0.0
        %1091 = vmatpush1.msra.mxu0 %v1059
        %1092 = vmatprep.subr.mxu0 0.0
        %1093 = vmatpush1.msra.mxu0 %v1058
        %1094 = vmatprep.subr.mxu0 0.0
        %1095 = vmatpush1.msra.mxu0 %v1057
        %1096 = vmatprep.subr.mxu0 0.0
        %1097 = vmatpush1.msra.mxu0 %v1056
        %1098 = vmatprep.subr.mxu0 0.0
        %1099 = vmatpush2.msra.mxu0 0.0
        %1100 = vmatprep.subr.mxu0 0.0
        %1101 = vmatpush2.msra.mxu0 0.0
        %1102 = vmatprep.subr.mxu0 0.0
        %1103 = vmatpush2.msra.mxu0 0.0
        %1104 = vmatprep.subr.mxu0 0.0
        %1105 = vmatpush2.msra.mxu0 0.0
        %1106 = vmatprep.subr.mxu0 0.0
        %1107 = vmatpush2.msra.mxu0 0.0
        %1108 = vmatprep.subr.mxu0 0.0
        %1109 = vmatpush2.msra.mxu0 0.0
        %1110 = vmatprep.subr.mxu0 0.0
        %1111 = vmatpush2.msra.mxu0 0.0
        %1112 = vmatprep.subr.mxu0 0.0
        %1113 = vmatpush2.msra.mxu0 0.0
        %1114 = vmatprep.subr.mxu0 0.0
        %1115 = vmatpush2.msra.mxu0 0.0
        %1116 = vmatprep.subr.mxu0 0.0
        %1117 = vmatpush2.msra.mxu0 0.0
        %1118 = vmatprep.subr.mxu0 0.0
        %1119 = vmatpush2.msra.mxu0 0.0
        %1120 = vmatprep.subr.mxu0 0.0
        %1121 = vmatpush2.msra.mxu0 0.0
        %1122 = vmatprep.subr.mxu0 0.0
        %1123 = vmatpush2.msra.mxu0 0.0
        %1124 = vmatprep.subr.mxu0 0.0
        %1125 = vmatpush2.msra.mxu0 0.0
        %1126 = vmatprep.subr.mxu0 0.0
        %1127 = vmatpush2.msra.mxu0 0.0
        %1128 = vmatprep.subr.mxu0 0.0
        %1129 = vmatpush2.msra.mxu0 0.0
        %1130 = vmatprep.mubr.f32.mxu0 0.0
        %1131 = vmatmul.mubr.f32.gmra.mxu0 %v1064
        %v1132 = vpop.f32.mrf.mxu0
        %v1133 = vadd.f32 0.0, %v1132
        %v1134 = vpop.f32.mrf.mxu0
        %1135 = vdwg.mxu0
        %v1136 = vsel %vm314, %v530, 0
        %1138 = vmatprep.subr.mxu0 0.0
        %1139 = vmatpush1.msra.mxu0 0.0
        %1140 = vmatprep.subr.mxu0 0.0
        %1141 = vmatpush1.msra.mxu0 0.0
        %1142 = vmatprep.subr.mxu0 0.0
        %1143 = vmatpush1.msra.mxu0 0.0
        %1144 = vmatprep.subr.mxu0 0.0
        %1145 = vmatpush1.msra.mxu0 0.0
        %1146 = vmatprep.subr.mxu0 0.0
        %1147 = vmatpush1.msra.mxu0 0.0
        %1148 = vmatprep.subr.mxu0 0.0
        %1149 = vmatpush1.msra.mxu0 0.0
        %1150 = vmatprep.subr.mxu0 0.0
        %1151 = vmatpush1.msra.mxu0 0.0
        %1152 = vmatprep.subr.mxu0 0.0
        %1153 = vmatpush1.msra.mxu0 0.0
        %1154 = vmatprep.subr.mxu0 0.0
        %1155 = vmatpush1.msra.mxu0 0.0
        %1156 = vmatprep.subr.mxu0 0.0
        %1157 = vmatpush1.msra.mxu0 0.0
        %1158 = vmatprep.subr.mxu0 0.0
        %1159 = vmatpush1.msra.mxu0 0.0
        %1160 = vmatprep.subr.mxu0 0.0
        %1161 = vmatpush1.msra.mxu0 0.0
        %1162 = vmatprep.subr.mxu0 0.0
        %1163 = vmatpush1.msra.mxu0 %v1063
        %1164 = vmatprep.subr.mxu0 0.0
        %1165 = vmatpush1.msra.mxu0 %v1062
        %1166 = vmatprep.subr.mxu0 0.0
        %1167 = vmatpush1.msra.mxu0 %v1061
        %1168 = vmatprep.subr.mxu0 0.0
        %1169 = vmatpush1.msra.mxu0 %v1060
        %1170 = vmatprep.subr.mxu0 0.0
        %1171 = vmatpush2.msra.mxu0 0.0
        %1172 = vmatprep.subr.mxu0 0.0
        %1173 = vmatpush2.msra.mxu0 0.0
        %1174 = vmatprep.subr.mxu0 0.0
        %1175 = vmatpush2.msra.mxu0 0.0
        %1176 = vmatprep.subr.mxu0 0.0
        %1177 = vmatpush2.msra.mxu0 0.0
        %1178 = vmatprep.subr.mxu0 0.0
        %1179 = vmatpush2.msra.mxu0 0.0
        %1180 = vmatprep.subr.mxu0 0.0
        %1181 = vmatpush2.msra.mxu0 0.0
        %1182 = vmatprep.subr.mxu0 0.0
        %1183 = vmatpush2.msra.mxu0 0.0
        %1184 = vmatprep.subr.mxu0 0.0
        %1185 = vmatpush2.msra.mxu0 0.0
        %1186 = vmatprep.subr.mxu0 0.0
        %1187 = vmatpush2.msra.mxu0 0.0
        %1188 = vmatprep.subr.mxu0 0.0
        %1189 = vmatpush2.msra.mxu0 0.0
        %1190 = vmatprep.subr.mxu0 0.0
        %1191 = vmatpush2.msra.mxu0 0.0
        %1192 = vmatprep.subr.mxu0 0.0
        %1193 = vmatpush2.msra.mxu0 0.0
        %1194 = vmatprep.subr.mxu0 0.0
        %1195 = vmatpush2.msra.mxu0 0.0
        %1196 = vmatprep.subr.mxu0 0.0
        %1197 = vmatpush2.msra.mxu0 0.0
        %1198 = vmatprep.subr.mxu0 0.0
        %1199 = vmatpush2.msra.mxu0 0.0
        %1200 = vmatprep.subr.mxu0 0.0
        %1201 = vmatpush2.msra.mxu0 0.0
        %1202 = vmatprep.mubr.f32.mxu0 0.0
        %1203 = vmatmul.mubr.f32.gmra.mxu0 %v1136
        %v1204 = vpop.f32.mrf.mxu0
        %v1205 = vadd.f32 0.0, %v1204
        %v1206 = vpop.f32.mrf.mxu0
        %1207 = vdwg.mxu0
        %v1210 = vcombine.high %v1133, %v1133
        %v1212 = vunpack.c.l.s4 1983009808
        %v1213 = vunpack.c.0.s8 %v1212
        %v1214 = vlaneseq
        %v1215 = vshrl.u32 %v1214, 7
        %v1216 = vsub.s32 %v1213, %v1215
        %v1217 = vrot.slane %v1133, %v1216
        %v1219 = vunpack.c.l.s4 1983009808
        %v1220 = vunpack.c.0.s8 %v1219
        %v1221 = vlaneseq
        %v1222 = vshrl.u32 %v1221, 7
        %v1223 = vsub.s32 %v1220, %v1222
        %v1224 = vrot.slane %v1210, %v1223
        %v1225 = vcombine.high %v1217, %v1217
        %v1226 = vcombine.high %v1205, %v1205
        %v1228 = vunpack.c.l.s4 1983009808
        %v1229 = vunpack.c.0.s8 %v1228
        %v1230 = vlaneseq
        %v1231 = vshrl.u32 %v1230, 7
        %v1232 = vsub.s32 %v1229, %v1231
        %v1233 = vrot.slane %v1205, %v1232
        %v1235 = vunpack.c.l.s4 1983009808
        %v1236 = vunpack.c.0.s8 %v1235
        %v1237 = vlaneseq
        %v1238 = vshrl.u32 %v1237, 7
        %v1239 = vsub.s32 %v1236, %v1238
        %v1240 = vrot.slane %v1226, %v1239
        %v1241 = vcombine.high %v1233, %v1233
        %1242 = vrot.lane.b32.xlu0 %v1217, 96
        %v1243 = vpop.permute.xlu0 %1242
        %1244 = vrot.lane.b32.xlu0 %v1225, 96
        %v1245 = vpop.permute.xlu0 %1244
        %1246 = vrot.lane.b32.xlu0 %v1224, 96
        %v1247 = vpop.permute.xlu0 %1246
        %1248 = vrot.lane.b32.xlu0 %v1233, 96
        %v1249 = vpop.permute.xlu0 %1248
        %1250 = vrot.lane.b32.xlu0 %v1241, 96
        %v1251 = vpop.permute.xlu0 %1250
        %1252 = vrot.lane.b32.xlu0 %v1240, 96
        %v1253 = vpop.permute.xlu0 %1252
        %v1260 = vmul.f32 %v488, %v1243
        %v1261 = vmul.f32 %v490, %v1245
        %v1262 = vmul.f32 %v492, %v1247
        %v1263 = vmul.f32 %v494, %v1249
        %v1264 = vmul.f32 %v496, %v1251
        %v1265 = vmul.f32 %v498, %v1253
        %v1266 = vsub.f32 1.0, %v488
        %v1267 = vsub.f32 1.0, %v490
        %v1268 = vsub.f32 1.0, %v492
        %v1269 = vsub.f32 1.0, %v494
        %v1270 = vsub.f32 1.0, %v496
        %v1271 = vsub.f32 1.0, %v498
        %1272 = vrot.lane.b32.xlu0 %v264, 96
        %v1273 = vpop.permute.xlu0 %1272
        %1274 = vrot.lane.b32.xlu0 %v272, 96
        %v1275 = vpop.permute.xlu0 %1274
        %1276 = vrot.lane.b32.xlu0 %v271, 96
        %v1277 = vpop.permute.xlu0 %1276
        %1278 = vrot.lane.b32.xlu0 %v280, 96
        %v1279 = vpop.permute.xlu0 %1278
        %1280 = vrot.lane.b32.xlu0 %v288, 96
        %v1281 = vpop.permute.xlu0 %1280
        %1282 = vrot.lane.b32.xlu0 %v287, 96
        %v1283 = vpop.permute.xlu0 %1282
        %v1290 = vmul.f32 %v1266, %v1273
        %v1291 = vmul.f32 %v1267, %v1275
        %v1292 = vmul.f32 %v1268, %v1277
        %v1293 = vmul.f32 %v1269, %v1279
        %v1294 = vmul.f32 %v1270, %v1281
        %v1295 = vmul.f32 %v1271, %v1283
        %v1296 = vadd.f32 %v1260, %v1290
        %v1297 = vadd.f32 %v1261, %v1291
        %v1298 = vadd.f32 %v1262, %v1292
        %v1299 = vadd.f32 %v1263, %v1293
        %v1300 = vadd.f32 %v1264, %v1294
        %v1301 = vadd.f32 %v1265, %v1295
        %s1302 = scalar_lea.vmem [#allocation2], 32
        %v1303 = vld [vmem:[%s1302] sm:$0xff]
        %v1304 = vld [vmem:[%s1302 + $0x8] sm:$0xff]
        %v1305 = vld [vmem:[%s1302 + $0x10] sm:$0xff]
        %v1306 = vld [vmem:[%s1302 + $0x18] sm:$0xff]
        %s1307 = scalar_lea.vmem %s4, 1
        %v1308 = vld [vmem:[%s1307] sm:$0x1]
        %s1309 = scalar_lea.vmem %s1, 8
        %v1310 = vld [vmem:[%s1309] sm:$0x3f]
        %v1317 = vcombine.low %v1296, %v1297
        %v1318 = vcombine.low %v1298, %v1299
        %v1320 = vunpack.c.l.s4 1983009808
        %v1321 = vunpack.c.0.s8 %v1320
        %v1322 = vlaneseq
        %v1323 = vshrl.u32 %v1322, 7
        %v1324 = vsub.s32 %v1321, %v1323
        %v1325 = vrot.slane %v1317, %v1324
        %v1327 = vunpack.c.l.s4 1983009808
        %v1328 = vunpack.c.0.s8 %v1327
        %v1329 = vlaneseq
        %v1330 = vshrl.u32 %v1329, 7
        %v1331 = vsub.s32 %v1328, %v1330
        %v1332 = vrot.slane %v1318, %v1331
        %v1333 = vcombine.low %v1325, %v1332
        %v1334 = vcombine.low %v1300, %v1301
        %v1336 = vunpack.c.l.s4 1983009808
        %v1337 = vunpack.c.0.s8 %v1336
        %v1338 = vlaneseq
        %v1339 = vshrl.u32 %v1338, 7
        %v1340 = vsub.s32 %v1337, %v1339
        %v1341 = vrot.slane %v1334, %v1340
        %1342 = vrot.lane.b32.xlu0 %v1333, 32
        %v1343 = vpop.permute.xlu0 %1342
        %1344 = vrot.lane.b32.xlu0 %v1341, 32
        %v1345 = vpop.permute.xlu0 %1344
        %v1346 = vsel %vm314, %v1343, 0
        %v1348 = vsel %vm314, %v1345, 0
        %1350 = vmatprep.subr.mxu0 0.0
        %1351 = vmatpush1.msra.mxu0 0.0
        %1352 = vmatprep.subr.mxu0 0.0
        %1353 = vmatpush1.msra.mxu0 0.0
        %1354 = vmatprep.subr.mxu0 0.0
        %1355 = vmatpush1.msra.mxu0 0.0
        %1356 = vmatprep.subr.mxu0 0.0
        %1357 = vmatpush1.msra.mxu0 0.0
        %1358 = vmatprep.subr.mxu0 0.0
        %1359 = vmatpush1.msra.mxu0 0.0
        %1360 = vmatprep.subr.mxu0 0.0
        %1361 = vmatpush1.msra.mxu0 0.0
        %1362 = vmatprep.subr.mxu0 0.0
        %1363 = vmatpush1.msra.mxu0 0.0
        %1364 = vmatprep.subr.mxu0 0.0
        %1365 = vmatpush1.msra.mxu0 0.0
        %1366 = vmatprep.subr.mxu0 0.0
        %1367 = vmatpush1.msra.mxu0 0.0
        %1368 = vmatprep.subr.mxu0 0.0
        %1369 = vmatpush1.msra.mxu0 0.0
        %1370 = vmatprep.subr.mxu0 0.0
        %1371 = vmatpush1.msra.mxu0 0.0
        %1372 = vmatprep.subr.mxu0 0.0
        %1373 = vmatpush1.msra.mxu0 0.0
        %1374 = vmatprep.subr.mxu0 0.0
        %1375 = vmatpush1.msra.mxu0 %v1306
        %1376 = vmatprep.subr.mxu0 0.0
        %1377 = vmatpush1.msra.mxu0 %v1305
        %1378 = vmatprep.subr.mxu0 0.0
        %1379 = vmatpush1.msra.mxu0 %v1304
        %1380 = vmatprep.subr.mxu0 0.0
        %1381 = vmatpush1.msra.mxu0 %v1303
        %1382 = vmatprep.subr.mxu0 0.0
        %1383 = vmatpush2.msra.mxu0 0.0
        %1384 = vmatprep.subr.mxu0 0.0
        %1385 = vmatpush2.msra.mxu0 0.0
        %1386 = vmatprep.subr.mxu0 0.0
        %1387 = vmatpush2.msra.mxu0 0.0
        %1388 = vmatprep.subr.mxu0 0.0
        %1389 = vmatpush2.msra.mxu0 0.0
        %1390 = vmatprep.subr.mxu0 0.0
        %1391 = vmatpush2.msra.mxu0 0.0
        %1392 = vmatprep.subr.mxu0 0.0
        %1393 = vmatpush2.msra.mxu0 0.0
        %1394 = vmatprep.subr.mxu0 0.0
        %1395 = vmatpush2.msra.mxu0 0.0
        %1396 = vmatprep.subr.mxu0 0.0
        %1397 = vmatpush2.msra.mxu0 0.0
        %1398 = vmatprep.subr.mxu0 0.0
        %1399 = vmatpush2.msra.mxu0 0.0
        %1400 = vmatprep.subr.mxu0 0.0
        %1401 = vmatpush2.msra.mxu0 0.0
        %1402 = vmatprep.subr.mxu0 0.0
        %1403 = vmatpush2.msra.mxu0 0.0
        %1404 = vmatprep.subr.mxu0 0.0
        %1405 = vmatpush2.msra.mxu0 0.0
        %1406 = vmatprep.subr.mxu0 0.0
        %1407 = vmatpush2.msra.mxu0 0.0
        %1408 = vmatprep.subr.mxu0 0.0
        %1409 = vmatpush2.msra.mxu0 0.0
        %1410 = vmatprep.subr.mxu0 0.0
        %1411 = vmatpush2.msra.mxu0 0.0
        %1412 = vmatprep.subr.mxu0 0.0
        %1413 = vmatpush2.msra.mxu0 0.0
        %1414 = vmatprep.mubr.f32.mxu0 0.0
        %1415 = vmatmul.mubr.f32.gmra.mxu0 %v1346
        %v1416 = vpop.f32.mrf.mxu0
        %v1417 = vadd.f32 0.0, %v1416
        %v1418 = vpop.f32.mrf.mxu0
        %1419 = vmatprep.mubr.f32.mxu0 0.0
        %1420 = vmatmul.mubr.f32.gmra.mxu0 %v1348
        %v1421 = vpop.f32.mrf.mxu0
        %v1422 = vadd.f32 0.0, %v1421
        %v1423 = vpop.f32.mrf.mxu0
        %1424 = vdwg.mxu0
        %v1427 = vcombine.high %v1417, %v1417
        %v1429 = vunpack.c.l.s4 1983009808
        %v1430 = vunpack.c.0.s8 %v1429
        %v1431 = vlaneseq
        %v1432 = vshrl.u32 %v1431, 7
        %v1433 = vsub.s32 %v1430, %v1432
        %v1434 = vrot.slane %v1417, %v1433
        %v1436 = vunpack.c.l.s4 1983009808
        %v1437 = vunpack.c.0.s8 %v1436
        %v1438 = vlaneseq
        %v1439 = vshrl.u32 %v1438, 7
        %v1440 = vsub.s32 %v1437, %v1439
        %v1441 = vrot.slane %v1427, %v1440
        %v1442 = vcombine.high %v1434, %v1434
        %v1443 = vcombine.high %v1441, %v1441
        %v1445 = vunpack.c.l.s4 1983009808
        %v1446 = vunpack.c.0.s8 %v1445
        %v1447 = vlaneseq
        %v1448 = vshrl.u32 %v1447, 7
        %v1449 = vsub.s32 %v1446, %v1448
        %v1450 = vrot.slane %v1422, %v1449
        %v1451 = vcombine.high %v1450, %v1450
        %v1459 = vlaneseq
        %v1460 = vshrl.u32 %v1459, 7
        %v1461 = vsub.s32 0, %v1460
        %v1462 = vrot.slane %v1308, %v1461
        %v1463 = vcombine.high %v1462, %v1462
        %v1465 = vunpack.c.l.s4 1983009808
        %v1466 = vunpack.c.0.s8 %v1465
        %v1467 = vlaneseq
        %v1468 = vshrl.u32 %v1467, 7
        %v1469 = vsub.s32 %v1466, %v1468
        %v1470 = vrot.slane %v1462, %v1469
        %v1472 = vunpack.c.l.s4 1983009808
        %v1473 = vunpack.c.0.s8 %v1472
        %v1474 = vlaneseq
        %v1475 = vshrl.u32 %v1474, 7
        %v1476 = vsub.s32 %v1473, %v1475
        %v1477 = vrot.slane %v1463, %v1476
        %v1478 = vcombine.high %v1470, %v1470
        %1479 = vrot.lane.b32.xlu0 %v1470, 96
        %v1480 = vpop.permute.xlu0 %1479
        %1481 = vrot.lane.b32.xlu0 %v1478, 96
        %v1482 = vpop.permute.xlu0 %1481
        %1483 = vrot.lane.b32.xlu0 %v1477, 96
        %v1484 = vpop.permute.xlu0 %1483
        %v1488 = vadd.f32 %v1434, %v1480
        %v1489 = vadd.f32 %v1442, %v1482
        %v1490 = vadd.f32 %v1441, %v1484
        %v1491 = vadd.f32 %v1443, %v1480
        %v1492 = vadd.f32 %v1450, %v1482
        %v1493 = vadd.f32 %v1451, %v1484
        %v1494 = vxor.u32 %v1488, 2147483648
        %v1495 = vxor.u32 %v1489, 2147483648
        %v1496 = vxor.u32 %v1490, 2147483648
        %v1497 = vxor.u32 %v1491, 2147483648
        %v1498 = vxor.u32 %v1492, 2147483648
        %v1499 = vxor.u32 %v1493, 2147483648
        %v1500 = vmul.f32 %v1494, 1.442695
        %v1501 = vpow.pop %v1500
        %v1502 = vmul.f32 %v1495, 1.442695
        %v1503 = vpow.pop %v1502
        %v1504 = vmul.f32 %v1496, 1.442695
        %v1505 = vpow.pop %v1504
        %v1506 = vmul.f32 %v1497, 1.442695
        %v1507 = vpow.pop %v1506
        %v1508 = vmul.f32 %v1498, 1.442695
        %v1509 = vpow.pop %v1508
        %v1510 = vmul.f32 %v1499, 1.442695
        %v1511 = vpow.pop %v1510
        %v1512 = vadd.f32 %v1501, 1.0
        %v1513 = vadd.f32 %v1503, 1.0
        %v1514 = vadd.f32 %v1505, 1.0
        %v1515 = vadd.f32 %v1507, 1.0
        %v1516 = vadd.f32 %v1509, 1.0
        %v1517 = vadd.f32 %v1511, 1.0
        %v1518 = vrcp.pop %v1512
        %v1519 = vmul.f32 1.0, %v1518
        %v1520 = vrcp.pop %v1513
        %v1521 = vmul.f32 1.0, %v1520
        %v1522 = vrcp.pop %v1514
        %v1523 = vmul.f32 1.0, %v1522
        %v1524 = vrcp.pop %v1515
        %v1525 = vmul.f32 1.0, %v1524
        %v1526 = vrcp.pop %v1516
        %v1527 = vmul.f32 1.0, %v1526
        %v1528 = vrcp.pop %v1517
        %v1529 = vmul.f32 1.0, %v1528
        %v1530 = vcombine.low %v1434, %v1442
        %v1532 = vunpack.c.l.s4 1983009808
        %v1533 = vunpack.c.0.s8 %v1532
        %v1534 = vlaneseq
        %v1535 = vshrl.u32 %v1534, 7
        %v1536 = vsub.s32 %v1533, %v1535
        %v1537 = vrot.slane %v1530, %v1536
        %v1539 = vunpack.c.l.s4 1983009808
        %v1540 = vunpack.c.0.s8 %v1539
        %v1541 = vlaneseq
        %v1542 = vshrl.u32 %v1541, 7
        %v1543 = vsub.s32 %v1540, %v1542
        %v1544 = vrot.slane %v1441, %v1543
        %v1545 = vcombine.low %v1537, %v1544
        %v1546 = vcombine.low %v1443, %v1450
        %v1548 = vunpack.c.l.s4 1983009808
        %v1549 = vunpack.c.0.s8 %v1548
        %v1550 = vlaneseq
        %v1551 = vshrl.u32 %v1550, 7
        %v1552 = vsub.s32 %v1549, %v1551
        %v1553 = vrot.slane %v1546, %v1552
        %v1555 = vunpack.c.l.s4 1983009808
        %v1556 = vunpack.c.0.s8 %v1555
        %v1557 = vlaneseq
        %v1558 = vshrl.u32 %v1557, 7
        %v1559 = vsub.s32 %v1556, %v1558
        %v1560 = vrot.slane %v1451, %v1559
        %v1561 = vcombine.low %v1553, %v1560
        %v1564 = vsel %vm533, %v1545, -inf
        %v1565 = vrot.slane %v1564, 4
        %v1566 = vmax.f32 %v1564, %v1565
        %v1567 = vrot.slane %v1566, 2
        %v1568 = vmax.f32 %v1566, %v1567
        %v1569 = vrot.slane %v1568, 1
        %v1570 = vmax.f32 %v1568, %v1569
        %v1571 = vsel %vm533, %v1561, -inf
        %v1572 = vrot.slane %v1571, 4
        %v1573 = vmax.f32 %v1571, %v1572
        %v1574 = vrot.slane %v1573, 2
        %v1575 = vmax.f32 %v1573, %v1574
        %v1576 = vrot.slane %v1575, 1
        %v1577 = vmax.f32 %v1575, %v1576
        %v1580 = vcombine.high %v1570, %v1570
        %v1582 = vunpack.c.l.s4 1983009808
        %v1583 = vunpack.c.0.s8 %v1582
        %v1584 = vlaneseq
        %v1585 = vshrl.u32 %v1584, 7
        %v1586 = vsub.s32 %v1583, %v1585
        %v1587 = vrot.slane %v1570, %v1586
        %v1589 = vunpack.c.l.s4 1983009808
        %v1590 = vunpack.c.0.s8 %v1589
        %v1591 = vlaneseq
        %v1592 = vshrl.u32 %v1591, 7
        %v1593 = vsub.s32 %v1590, %v1592
        %v1594 = vrot.slane %v1580, %v1593
        %v1595 = vcombine.high %v1587, %v1587
        %v1596 = vcombine.high %v1577, %v1577
        %v1598 = vunpack.c.l.s4 1983009808
        %v1599 = vunpack.c.0.s8 %v1598
        %v1600 = vlaneseq
        %v1601 = vshrl.u32 %v1600, 7
        %v1602 = vsub.s32 %v1599, %v1601
        %v1603 = vrot.slane %v1577, %v1602
        %v1605 = vunpack.c.l.s4 1983009808
        %v1606 = vunpack.c.0.s8 %v1605
        %v1607 = vlaneseq
        %v1608 = vshrl.u32 %v1607, 7
        %v1609 = vsub.s32 %v1606, %v1608
        %v1610 = vrot.slane %v1596, %v1609
        %v1611 = vcombine.high %v1603, %v1603
        %v1618 = vsub.f32 %v1434, %v1587
        %v1619 = vsub.f32 %v1442, %v1595
        %v1620 = vsub.f32 %v1441, %v1594
        %v1621 = vsub.f32 %v1443, %v1603
        %v1622 = vsub.f32 %v1450, %v1611
        %v1623 = vsub.f32 %v1451, %v1610
        %v1624 = vmul.f32 %v1618, 1.442695
        %v1625 = vpow.pop %v1624
        %v1626 = vmul.f32 %v1619, 1.442695
        %v1627 = vpow.pop %v1626
        %v1628 = vmul.f32 %v1620, 1.442695
        %v1629 = vpow.pop %v1628
        %v1630 = vmul.f32 %v1621, 1.442695
        %v1631 = vpow.pop %v1630
        %v1632 = vmul.f32 %v1622, 1.442695
        %v1633 = vpow.pop %v1632
        %v1634 = vmul.f32 %v1623, 1.442695
        %v1635 = vpow.pop %v1634
        %v1642 = vcombine.low %v1625, %v1627
        %v1644 = vunpack.c.l.s4 1983009808
        %v1645 = vunpack.c.0.s8 %v1644
        %v1646 = vlaneseq
        %v1647 = vshrl.u32 %v1646, 7
        %v1648 = vsub.s32 %v1645, %v1647
        %v1649 = vrot.slane %v1642, %v1648
        %v1651 = vunpack.c.l.s4 1983009808
        %v1652 = vunpack.c.0.s8 %v1651
        %v1653 = vlaneseq
        %v1654 = vshrl.u32 %v1653, 7
        %v1655 = vsub.s32 %v1652, %v1654
        %v1656 = vrot.slane %v1629, %v1655
        %v1657 = vcombine.low %v1649, %v1656
        %v1658 = vcombine.low %v1631, %v1633
        %v1660 = vunpack.c.l.s4 1983009808
        %v1661 = vunpack.c.0.s8 %v1660
        %v1662 = vlaneseq
        %v1663 = vshrl.u32 %v1662, 7
        %v1664 = vsub.s32 %v1661, %v1663
        %v1665 = vrot.slane %v1658, %v1664
        %v1667 = vunpack.c.l.s4 1983009808
        %v1668 = vunpack.c.0.s8 %v1667
        %v1669 = vlaneseq
        %v1670 = vshrl.u32 %v1669, 7
        %v1671 = vsub.s32 %v1668, %v1670
        %v1672 = vrot.slane %v1635, %v1671
        %v1673 = vcombine.low %v1665, %v1672
        %v1676 = vsel %vm533, %v1657, 0.0
        %v1677 = vrot.slane %v1676, 4
        %v1678 = vadd.f32 %v1676, %v1677
        %v1679 = vrot.slane %v1678, 2
        %v1680 = vadd.f32 %v1678, %v1679
        %v1681 = vrot.slane %v1680, 1
        %v1682 = vadd.f32 %v1680, %v1681
        %v1683 = vsel %vm533, %v1673, 0.0
        %v1684 = vrot.slane %v1683, 4
        %v1685 = vadd.f32 %v1683, %v1684
        %v1686 = vrot.slane %v1685, 2
        %v1687 = vadd.f32 %v1685, %v1686
        %v1688 = vrot.slane %v1687, 1
        %v1689 = vadd.f32 %v1687, %v1688
        %v1692 = vcombine.high %v1682, %v1682
        %v1694 = vunpack.c.l.s4 1983009808
        %v1695 = vunpack.c.0.s8 %v1694
        %v1696 = vlaneseq
        %v1697 = vshrl.u32 %v1696, 7
        %v1698 = vsub.s32 %v1695, %v1697
        %v1699 = vrot.slane %v1682, %v1698
        %v1701 = vunpack.c.l.s4 1983009808
        %v1702 = vunpack.c.0.s8 %v1701
        %v1703 = vlaneseq
        %v1704 = vshrl.u32 %v1703, 7
        %v1705 = vsub.s32 %v1702, %v1704
        %v1706 = vrot.slane %v1692, %v1705
        %v1707 = vcombine.high %v1699, %v1699
        %v1708 = vcombine.high %v1689, %v1689
        %v1710 = vunpack.c.l.s4 1983009808
        %v1711 = vunpack.c.0.s8 %v1710
        %v1712 = vlaneseq
        %v1713 = vshrl.u32 %v1712, 7
        %v1714 = vsub.s32 %v1711, %v1713
        %v1715 = vrot.slane %v1689, %v1714
        %v1717 = vunpack.c.l.s4 1983009808
        %v1718 = vunpack.c.0.s8 %v1717
        %v1719 = vlaneseq
        %v1720 = vshrl.u32 %v1719, 7
        %v1721 = vsub.s32 %v1718, %v1720
        %v1722 = vrot.slane %v1708, %v1721
        %v1723 = vcombine.high %v1715, %v1715
        %v1730 = vrcp.pop %v1699
        %v1731 = vmul.f32 %v1625, %v1730
        %v1732 = vrcp.pop %v1707
        %v1733 = vmul.f32 %v1627, %v1732
        %v1734 = vrcp.pop %v1706
        %v1735 = vmul.f32 %v1629, %v1734
        %v1736 = vrcp.pop %v1715
        %v1737 = vmul.f32 %v1631, %v1736
        %v1738 = vrcp.pop %v1723
        %v1739 = vmul.f32 %v1633, %v1738
        %v1740 = vrcp.pop %v1722
        %v1741 = vmul.f32 %v1635, %v1740
        %v1743 = vcombine.high %v1310, %v1310
        %v1745 = vunpack.c.l.s4 1983009808
        %v1746 = vunpack.c.0.s8 %v1745
        %v1747 = vlaneseq
        %v1748 = vshrl.u32 %v1747, 7
        %v1749 = vsub.s32 %v1746, %v1748
        %v1750 = vrot.slane %v1310, %v1749
        %v1752 = vunpack.c.l.s4 1983009808
        %v1753 = vunpack.c.0.s8 %v1752
        %v1754 = vlaneseq
        %v1755 = vshrl.u32 %v1754, 7
        %v1756 = vsub.s32 %v1753, %v1755
        %v1757 = vrot.slane %v1743, %v1756
        %v1758 = vcombine.high %v1750, %v1750
        %1759 = vrot.lane.b32.xlu0 %v1750, 32
        %v1760 = vpop.permute.xlu0 %1759
        %1761 = vrot.lane.b32.xlu0 %v1758, 32
        %v1762 = vpop.permute.xlu0 %1761
        %1763 = vrot.lane.b32.xlu0 %v1757, 32
        %v1764 = vpop.permute.xlu0 %1763
        %v1768 = vadd.f32 %v1731, %v1760
        %v1769 = vadd.f32 %v1733, %v1762
        %v1770 = vadd.f32 %v1735, %v1764
        %v1771 = vadd.f32 %v1737, %v1760
        %v1772 = vadd.f32 %v1739, %v1762
        %v1773 = vadd.f32 %v1741, %v1764
        %v1777 = vcombine.low %v1768, %v1769
        %v1779 = vunpack.c.l.s4 1983009808
        %v1780 = vunpack.c.0.s8 %v1779
        %v1781 = vlaneseq
        %v1782 = vshrl.u32 %v1781, 7
        %v1783 = vsub.s32 %v1780, %v1782
        %v1784 = vrot.slane %v1777, %v1783
        %v1786 = vunpack.c.l.s4 1983009808
        %v1787 = vunpack.c.0.s8 %v1786
        %v1788 = vlaneseq
        %v1789 = vshrl.u32 %v1788, 7
        %v1790 = vsub.s32 %v1787, %v1789
        %v1791 = vrot.slane %v1770, %v1790
        %v1792 = vcombine.low %v1784, %v1791
        %1793 = vrot.lane.b32.xlu0 %v1792, 96
        %v1794 = vpop.permute.xlu0 %1793
        %1796 = vxpose.xlu0.b32.start [1/16] %v1794, 128
        %1797 = vxpose.xlu0.b32.cont [2/16] 0.0, 128
        %1798 = vxpose.xlu0.b32.cont [3/16] 0.0, 128
        %1799 = vxpose.xlu0.b32.cont [4/16] 0.0, 128
        %1800 = vxpose.xlu0.b32.cont [5/16] 0.0, 128
        %1801 = vxpose.xlu0.b32.cont [6/16] 0.0, 128
        %1802 = vxpose.xlu0.b32.cont [7/16] 0.0, 128
        %1803 = vxpose.xlu0.b32.cont [8/16] 0.0, 128
        %1804 = vxpose.xlu0.b32.cont [9/16] 0.0, 128
        %1805 = vxpose.xlu0.b32.cont [10/16] 0.0, 128
        %1806 = vxpose.xlu0.b32.cont [11/16] 0.0, 128
        %1807 = vxpose.xlu0.b32.cont [12/16] 0.0, 128
        %1808 = vxpose.xlu0.b32.cont [13/16] 0.0, 128
        %1809 = vxpose.xlu0.b32.cont [14/16] 0.0, 128
        %1810 = vxpose.xlu0.b32.cont [15/16] 0.0, 128
        %1811 = vxpose.xlu0.b32.end [16/16] 0.0, 128
        %v1812 = vpop.trf.xlu0
        %v1813 = vpop.trf.xlu0
        %v1814 = vpop.trf.xlu0
        %v1815 = vpop.trf.xlu0
        %v1816 = vpop.trf.xlu0
        %v1817 = vpop.trf.xlu0
        %v1818 = vpop.trf.xlu0
        %v1819 = vpop.trf.xlu0
        %v1820 = vpop.trf.xlu0
        %v1821 = vpop.trf.xlu0
        %v1822 = vpop.trf.xlu0
        %v1823 = vpop.trf.xlu0
        %v1824 = vpop.trf.xlu0
        %v1825 = vpop.trf.xlu0
        %v1826 = vpop.trf.xlu0
        %v1827 = vpop.trf.xlu0
        %1828 = vrot.lane.b32.xlu0 %v1545, 64
        %v1829 = vpop.permute.xlu0 %1828
        %v1831 = vsel %vm800, %v1812, 0
        %v1834 = vsel %vm800, %v1813, 0
        %v1837 = vsel %vm800, %v1814, 0
        %v1840 = vsel %vm800, %v1815, 0
        %v1842 = vsel %vm813, %v1829, 0
        %1844 = vmatprep.subr.mxu0 0.0
        %1845 = vmatpush1.msra.mxu0 0.0
        %1846 = vmatprep.subr.mxu0 0.0
        %1847 = vmatpush1.msra.mxu0 0.0
        %1848 = vmatprep.subr.mxu0 0.0
        %1849 = vmatpush1.msra.mxu0 0.0
        %1850 = vmatprep.subr.mxu0 0.0
        %1851 = vmatpush1.msra.mxu0 0.0
        %1852 = vmatprep.subr.mxu0 0.0
        %1853 = vmatpush1.msra.mxu0 0.0
        %1854 = vmatprep.subr.mxu0 0.0
        %1855 = vmatpush1.msra.mxu0 0.0
        %1856 = vmatprep.subr.mxu0 0.0
        %1857 = vmatpush1.msra.mxu0 0.0
        %1858 = vmatprep.subr.mxu0 0.0
        %1859 = vmatpush1.msra.mxu0 0.0
        %1860 = vmatprep.subr.mxu0 0.0
        %1861 = vmatpush1.msra.mxu0 0.0
        %1862 = vmatprep.subr.mxu0 0.0
        %1863 = vmatpush1.msra.mxu0 0.0
        %1864 = vmatprep.subr.mxu0 0.0
        %1865 = vmatpush1.msra.mxu0 0.0
        %1866 = vmatprep.subr.mxu0 0.0
        %1867 = vmatpush1.msra.mxu0 0.0
        %1868 = vmatprep.subr.mxu0 0.0
        %1869 = vmatpush1.msra.mxu0 0.0
        %1870 = vmatprep.subr.mxu0 0.0
        %1871 = vmatpush1.msra.mxu0 0.0
        %1872 = vmatprep.subr.mxu0 0.0
        %1873 = vmatpush1.msra.mxu0 0.0
        %1874 = vmatprep.subr.mxu0 0.0
        %1875 = vmatpush1.msra.mxu0 %v1842
        %1876 = vmatprep.subr.mxu0 0.0
        %1877 = vmatpush2.msra.mxu0 0.0
        %1878 = vmatprep.subr.mxu0 0.0
        %1879 = vmatpush2.msra.mxu0 0.0
        %1880 = vmatprep.subr.mxu0 0.0
        %1881 = vmatpush2.msra.mxu0 0.0
        %1882 = vmatprep.subr.mxu0 0.0
        %1883 = vmatpush2.msra.mxu0 0.0
        %1884 = vmatprep.subr.mxu0 0.0
        %1885 = vmatpush2.msra.mxu0 0.0
        %1886 = vmatprep.subr.mxu0 0.0
        %1887 = vmatpush2.msra.mxu0 0.0
        %1888 = vmatprep.subr.mxu0 0.0
        %1889 = vmatpush2.msra.mxu0 0.0
        %1890 = vmatprep.subr.mxu0 0.0
        %1891 = vmatpush2.msra.mxu0 0.0
        %1892 = vmatprep.subr.mxu0 0.0
        %1893 = vmatpush2.msra.mxu0 0.0
        %1894 = vmatprep.subr.mxu0 0.0
        %1895 = vmatpush2.msra.mxu0 0.0
        %1896 = vmatprep.subr.mxu0 0.0
        %1897 = vmatpush2.msra.mxu0 0.0
        %1898 = vmatprep.subr.mxu0 0.0
        %1899 = vmatpush2.msra.mxu0 0.0
        %1900 = vmatprep.subr.mxu0 0.0
        %1901 = vmatpush2.msra.mxu0 0.0
        %1902 = vmatprep.subr.mxu0 0.0
        %1903 = vmatpush2.msra.mxu0 0.0
        %1904 = vmatprep.subr.mxu0 0.0
        %1905 = vmatpush2.msra.mxu0 0.0
        %1906 = vmatprep.subr.mxu0 0.0
        %1907 = vmatpush2.msra.mxu0 0.0
        %1908 = vmatprep.mubr.f32.mxu0 0.0
        %1909 = vmatmul.mubr.f32.gmra.mxu0 %v1831
        %v1910 = vpop.f32.mrf.mxu0
        %v1911 = vadd.f32 0.0, %v1910
        %v1912 = vpop.f32.mrf.mxu0
        %1913 = vmatprep.mubr.f32.mxu0 0.0
        %1914 = vmatmul.mubr.f32.gmra.mxu0 %v1834
        %v1915 = vpop.f32.mrf.mxu0
        %v1916 = vadd.f32 0.0, %v1915
        %v1917 = vpop.f32.mrf.mxu0
        %1918 = vmatprep.mubr.f32.mxu0 0.0
        %1919 = vmatmul.mubr.f32.gmra.mxu0 %v1837
        %v1920 = vpop.f32.mrf.mxu0
        %v1921 = vadd.f32 0.0, %v1920
        %v1922 = vpop.f32.mrf.mxu0
        %1923 = vmatprep.mubr.f32.mxu0 0.0
        %1924 = vmatmul.mubr.f32.gmra.mxu0 %v1840
        %v1925 = vpop.f32.mrf.mxu0
        %v1926 = vadd.f32 0.0, %v1925
        %v1927 = vpop.f32.mrf.mxu0
        %1928 = vdwg.mxu0
        %v1932 = vcombine.low %v1771, %v1772
        %v1934 = vunpack.c.l.s4 1983009808
        %v1935 = vunpack.c.0.s8 %v1934
        %v1936 = vlaneseq
        %v1937 = vshrl.u32 %v1936, 7
        %v1938 = vsub.s32 %v1935, %v1937
        %v1939 = vrot.slane %v1932, %v1938
        %v1941 = vunpack.c.l.s4 1983009808
        %v1942 = vunpack.c.0.s8 %v1941
        %v1943 = vlaneseq
        %v1944 = vshrl.u32 %v1943, 7
        %v1945 = vsub.s32 %v1942, %v1944
        %v1946 = vrot.slane %v1773, %v1945
        %v1947 = vcombine.low %v1939, %v1946
        %1948 = vrot.lane.b32.xlu0 %v1947, 96
        %v1949 = vpop.permute.xlu0 %1948
        %1951 = vxpose.xlu0.b32.start [1/16] %v1949, 128
        %1952 = vxpose.xlu0.b32.cont [2/16] 0.0, 128
        %1953 = vxpose.xlu0.b32.cont [3/16] 0.0, 128
        %1954 = vxpose.xlu0.b32.cont [4/16] 0.0, 128
        %1955 = vxpose.xlu0.b32.cont [5/16] 0.0, 128
        %1956 = vxpose.xlu0.b32.cont [6/16] 0.0, 128
        %1957 = vxpose.xlu0.b32.cont [7/16] 0.0, 128
        %1958 = vxpose.xlu0.b32.cont [8/16] 0.0, 128
        %1959 = vxpose.xlu0.b32.cont [9/16] 0.0, 128
        %1960 = vxpose.xlu0.b32.cont [10/16] 0.0, 128
        %1961 = vxpose.xlu0.b32.cont [11/16] 0.0, 128
        %1962 = vxpose.xlu0.b32.cont [12/16] 0.0, 128
        %1963 = vxpose.xlu0.b32.cont [13/16] 0.0, 128
        %1964 = vxpose.xlu0.b32.cont [14/16] 0.0, 128
        %1965 = vxpose.xlu0.b32.cont [15/16] 0.0, 128
        %1966 = vxpose.xlu0.b32.end [16/16] 0.0, 128
        %v1967 = vpop.trf.xlu0
        %v1968 = vpop.trf.xlu0
        %v1969 = vpop.trf.xlu0
        %v1970 = vpop.trf.xlu0
        %v1971 = vpop.trf.xlu0
        %v1972 = vpop.trf.xlu0
        %v1973 = vpop.trf.xlu0
        %v1974 = vpop.trf.xlu0
        %v1975 = vpop.trf.xlu0
        %v1976 = vpop.trf.xlu0
        %v1977 = vpop.trf.xlu0
        %v1978 = vpop.trf.xlu0
        %v1979 = vpop.trf.xlu0
        %v1980 = vpop.trf.xlu0
        %v1981 = vpop.trf.xlu0
        %v1982 = vpop.trf.xlu0
        %1983 = vrot.lane.b32.xlu0 %v1561, 64
        %v1984 = vpop.permute.xlu0 %1983
        %v1986 = vsel %vm800, %v1967, 0
        %v1989 = vsel %vm800, %v1968, 0
        %v1992 = vsel %vm800, %v1969, 0
        %v1995 = vsel %vm800, %v1970, 0
        %v1997 = vsel %vm813, %v1984, 0
        %1999 = vmatprep.subr.mxu0 0.0
        %2000 = vmatpush1.msra.mxu0 0.0
        %2001 = vmatprep.subr.mxu0 0.0
        %2002 = vmatpush1.msra.mxu0 0.0
        %2003 = vmatprep.subr.mxu0 0.0
        %2004 = vmatpush1.msra.mxu0 0.0
        %2005 = vmatprep.subr.mxu0 0.0
        %2006 = vmatpush1.msra.mxu0 0.0
        %2007 = vmatprep.subr.mxu0 0.0
        %2008 = vmatpush1.msra.mxu0 0.0
        %2009 = vmatprep.subr.mxu0 0.0
        %2010 = vmatpush1.msra.mxu0 0.0
        %2011 = vmatprep.subr.mxu0 0.0
        %2012 = vmatpush1.msra.mxu0 0.0
        %2013 = vmatprep.subr.mxu0 0.0
        %2014 = vmatpush1.msra.mxu0 0.0
        %2015 = vmatprep.subr.mxu0 0.0
        %2016 = vmatpush1.msra.mxu0 0.0
        %2017 = vmatprep.subr.mxu0 0.0
        %2018 = vmatpush1.msra.mxu0 0.0
        %2019 = vmatprep.subr.mxu0 0.0
        %2020 = vmatpush1.msra.mxu0 0.0
        %2021 = vmatprep.subr.mxu0 0.0
        %2022 = vmatpush1.msra.mxu0 0.0
        %2023 = vmatprep.subr.mxu0 0.0
        %2024 = vmatpush1.msra.mxu0 0.0
        %2025 = vmatprep.subr.mxu0 0.0
        %2026 = vmatpush1.msra.mxu0 0.0
        %2027 = vmatprep.subr.mxu0 0.0
        %2028 = vmatpush1.msra.mxu0 0.0
        %2029 = vmatprep.subr.mxu0 0.0
        %2030 = vmatpush1.msra.mxu0 %v1997
        %2031 = vmatprep.subr.mxu0 0.0
        %2032 = vmatpush2.msra.mxu0 0.0
        %2033 = vmatprep.subr.mxu0 0.0
        %2034 = vmatpush2.msra.mxu0 0.0
        %2035 = vmatprep.subr.mxu0 0.0
        %2036 = vmatpush2.msra.mxu0 0.0
        %2037 = vmatprep.subr.mxu0 0.0
        %2038 = vmatpush2.msra.mxu0 0.0
        %2039 = vmatprep.subr.mxu0 0.0
        %2040 = vmatpush2.msra.mxu0 0.0
        %2041 = vmatprep.subr.mxu0 0.0
        %2042 = vmatpush2.msra.mxu0 0.0
        %2043 = vmatprep.subr.mxu0 0.0
        %2044 = vmatpush2.msra.mxu0 0.0
        %2045 = vmatprep.subr.mxu0 0.0
        %2046 = vmatpush2.msra.mxu0 0.0
        %2047 = vmatprep.subr.mxu0 0.0
        %2048 = vmatpush2.msra.mxu0 0.0
        %2049 = vmatprep.subr.mxu0 0.0
        %2050 = vmatpush2.msra.mxu0 0.0
        %2051 = vmatprep.subr.mxu0 0.0
        %2052 = vmatpush2.msra.mxu0 0.0
        %2053 = vmatprep.subr.mxu0 0.0
        %2054 = vmatpush2.msra.mxu0 0.0
        %2055 = vmatprep.subr.mxu0 0.0
        %2056 = vmatpush2.msra.mxu0 0.0
        %2057 = vmatprep.subr.mxu0 0.0
        %2058 = vmatpush2.msra.mxu0 0.0
        %2059 = vmatprep.subr.mxu0 0.0
        %2060 = vmatpush2.msra.mxu0 0.0
        %2061 = vmatprep.subr.mxu0 0.0
        %2062 = vmatpush2.msra.mxu0 0.0
        %2063 = vmatprep.mubr.f32.mxu0 0.0
        %2064 = vmatmul.mubr.f32.gmra.mxu0 %v1986
        %v2065 = vpop.f32.mrf.mxu0
        %v2066 = vadd.f32 0.0, %v2065
        %v2067 = vpop.f32.mrf.mxu0
        %2068 = vmatprep.mubr.f32.mxu0 0.0
        %2069 = vmatmul.mubr.f32.gmra.mxu0 %v1989
        %v2070 = vpop.f32.mrf.mxu0
        %v2071 = vadd.f32 0.0, %v2070
        %v2072 = vpop.f32.mrf.mxu0
        %2073 = vmatprep.mubr.f32.mxu0 0.0
        %2074 = vmatmul.mubr.f32.gmra.mxu0 %v1992
        %v2075 = vpop.f32.mrf.mxu0
        %v2076 = vadd.f32 0.0, %v2075
        %v2077 = vpop.f32.mrf.mxu0
        %2078 = vmatprep.mubr.f32.mxu0 0.0
        %2079 = vmatmul.mubr.f32.gmra.mxu0 %v1995
        %v2080 = vpop.f32.mrf.mxu0
        %v2081 = vadd.f32 0.0, %v2080
        %v2082 = vpop.f32.mrf.mxu0
        %2083 = vdwg.mxu0
        %v2084 = vmul.f32 %v1911, %v243
        %v2085 = vmul.f32 %v1916, %v244
        %v2086 = vmul.f32 %v1921, %v245
        %v2087 = vmul.f32 %v1926, %v246
        %v2088 = vmul.f32 %v2066, %v243
        %v2089 = vmul.f32 %v2071, %v244
        %v2090 = vmul.f32 %v2076, %v245
        %v2091 = vmul.f32 %v2081, %v246
        %v2092 = vsel %vm314, %v1545, 0
        %2094 = vmatprep.subr.mxu0 0.0
        %2095 = vmatpush1.msra.mxu0 0.0
        %2096 = vmatprep.subr.mxu0 0.0
        %2097 = vmatpush1.msra.mxu0 0.0
        %2098 = vmatprep.subr.mxu0 0.0
        %2099 = vmatpush1.msra.mxu0 0.0
        %2100 = vmatprep.subr.mxu0 0.0
        %2101 = vmatpush1.msra.mxu0 0.0
        %2102 = vmatprep.subr.mxu0 0.0
        %2103 = vmatpush1.msra.mxu0 0.0
        %2104 = vmatprep.subr.mxu0 0.0
        %2105 = vmatpush1.msra.mxu0 0.0
        %2106 = vmatprep.subr.mxu0 0.0
        %2107 = vmatpush1.msra.mxu0 0.0
        %2108 = vmatprep.subr.mxu0 0.0
        %2109 = vmatpush1.msra.mxu0 0.0
        %2110 = vmatprep.subr.mxu0 0.0
        %2111 = vmatpush1.msra.mxu0 0.0
        %2112 = vmatprep.subr.mxu0 0.0
        %2113 = vmatpush1.msra.mxu0 0.0
        %2114 = vmatprep.subr.mxu0 0.0
        %2115 = vmatpush1.msra.mxu0 0.0
        %2116 = vmatprep.subr.mxu0 0.0
        %2117 = vmatpush1.msra.mxu0 0.0
        %2118 = vmatprep.subr.mxu0 0.0
        %2119 = vmatpush1.msra.mxu0 %v2087
        %2120 = vmatprep.subr.mxu0 0.0
        %2121 = vmatpush1.msra.mxu0 %v2086
        %2122 = vmatprep.subr.mxu0 0.0
        %2123 = vmatpush1.msra.mxu0 %v2085
        %2124 = vmatprep.subr.mxu0 0.0
        %2125 = vmatpush1.msra.mxu0 %v2084
        %2126 = vmatprep.subr.mxu0 0.0
        %2127 = vmatpush2.msra.mxu0 0.0
        %2128 = vmatprep.subr.mxu0 0.0
        %2129 = vmatpush2.msra.mxu0 0.0
        %2130 = vmatprep.subr.mxu0 0.0
        %2131 = vmatpush2.msra.mxu0 0.0
        %2132 = vmatprep.subr.mxu0 0.0
        %2133 = vmatpush2.msra.mxu0 0.0
        %2134 = vmatprep.subr.mxu0 0.0
        %2135 = vmatpush2.msra.mxu0 0.0
        %2136 = vmatprep.subr.mxu0 0.0
        %2137 = vmatpush2.msra.mxu0 0.0
        %2138 = vmatprep.subr.mxu0 0.0
        %2139 = vmatpush2.msra.mxu0 0.0
        %2140 = vmatprep.subr.mxu0 0.0
        %2141 = vmatpush2.msra.mxu0 0.0
        %2142 = vmatprep.subr.mxu0 0.0
        %2143 = vmatpush2.msra.mxu0 0.0
        %2144 = vmatprep.subr.mxu0 0.0
        %2145 = vmatpush2.msra.mxu0 0.0
        %2146 = vmatprep.subr.mxu0 0.0
        %2147 = vmatpush2.msra.mxu0 0.0
        %2148 = vmatprep.subr.mxu0 0.0
        %2149 = vmatpush2.msra.mxu0 0.0
        %2150 = vmatprep.subr.mxu0 0.0
        %2151 = vmatpush2.msra.mxu0 0.0
        %2152 = vmatprep.subr.mxu0 0.0
        %2153 = vmatpush2.msra.mxu0 0.0
        %2154 = vmatprep.subr.mxu0 0.0
        %2155 = vmatpush2.msra.mxu0 0.0
        %2156 = vmatprep.subr.mxu0 0.0
        %2157 = vmatpush2.msra.mxu0 0.0
        %2158 = vmatprep.mubr.f32.mxu0 0.0
        %2159 = vmatmul.mubr.f32.gmra.mxu0 %v2092
        %v2160 = vpop.f32.mrf.mxu0
        %v2161 = vadd.f32 0.0, %v2160
        %v2162 = vpop.f32.mrf.mxu0
        %2163 = vdwg.mxu0
        %v2164 = vsel %vm314, %v1561, 0
        %2166 = vmatprep.subr.mxu0 0.0
        %2167 = vmatpush1.msra.mxu0 0.0
        %2168 = vmatprep.subr.mxu0 0.0
        %2169 = vmatpush1.msra.mxu0 0.0
        %2170 = vmatprep.subr.mxu0 0.0
        %2171 = vmatpush1.msra.mxu0 0.0
        %2172 = vmatprep.subr.mxu0 0.0
        %2173 = vmatpush1.msra.mxu0 0.0
        %2174 = vmatprep.subr.mxu0 0.0
        %2175 = vmatpush1.msra.mxu0 0.0
        %2176 = vmatprep.subr.mxu0 0.0
        %2177 = vmatpush1.msra.mxu0 0.0
        %2178 = vmatprep.subr.mxu0 0.0
        %2179 = vmatpush1.msra.mxu0 0.0
        %2180 = vmatprep.subr.mxu0 0.0
        %2181 = vmatpush1.msra.mxu0 0.0
        %2182 = vmatprep.subr.mxu0 0.0
        %2183 = vmatpush1.msra.mxu0 0.0
        %2184 = vmatprep.subr.mxu0 0.0
        %2185 = vmatpush1.msra.mxu0 0.0
        %2186 = vmatprep.subr.mxu0 0.0
        %2187 = vmatpush1.msra.mxu0 0.0
        %2188 = vmatprep.subr.mxu0 0.0
        %2189 = vmatpush1.msra.mxu0 0.0
        %2190 = vmatprep.subr.mxu0 0.0
        %2191 = vmatpush1.msra.mxu0 %v2091
        %2192 = vmatprep.subr.mxu0 0.0
        %2193 = vmatpush1.msra.mxu0 %v2090
        %2194 = vmatprep.subr.mxu0 0.0
        %2195 = vmatpush1.msra.mxu0 %v2089
        %2196 = vmatprep.subr.mxu0 0.0
        %2197 = vmatpush1.msra.mxu0 %v2088
        %2198 = vmatprep.subr.mxu0 0.0
        %2199 = vmatpush2.msra.mxu0 0.0
        %2200 = vmatprep.subr.mxu0 0.0
        %2201 = vmatpush2.msra.mxu0 0.0
        %2202 = vmatprep.subr.mxu0 0.0
        %2203 = vmatpush2.msra.mxu0 0.0
        %2204 = vmatprep.subr.mxu0 0.0
        %2205 = vmatpush2.msra.mxu0 0.0
        %2206 = vmatprep.subr.mxu0 0.0
        %2207 = vmatpush2.msra.mxu0 0.0
        %2208 = vmatprep.subr.mxu0 0.0
        %2209 = vmatpush2.msra.mxu0 0.0
        %2210 = vmatprep.subr.mxu0 0.0
        %2211 = vmatpush2.msra.mxu0 0.0
        %2212 = vmatprep.subr.mxu0 0.0
        %2213 = vmatpush2.msra.mxu0 0.0
        %2214 = vmatprep.subr.mxu0 0.0
        %2215 = vmatpush2.msra.mxu0 0.0
        %2216 = vmatprep.subr.mxu0 0.0
        %2217 = vmatpush2.msra.mxu0 0.0
        %2218 = vmatprep.subr.mxu0 0.0
        %2219 = vmatpush2.msra.mxu0 0.0
        %2220 = vmatprep.subr.mxu0 0.0
        %2221 = vmatpush2.msra.mxu0 0.0
        %2222 = vmatprep.subr.mxu0 0.0
        %2223 = vmatpush2.msra.mxu0 0.0
        %2224 = vmatprep.subr.mxu0 0.0
        %2225 = vmatpush2.msra.mxu0 0.0
        %2226 = vmatprep.subr.mxu0 0.0
        %2227 = vmatpush2.msra.mxu0 0.0
        %2228 = vmatprep.subr.mxu0 0.0
        %2229 = vmatpush2.msra.mxu0 0.0
        %2230 = vmatprep.mubr.f32.mxu0 0.0
        %2231 = vmatmul.mubr.f32.gmra.mxu0 %v2164
        %v2232 = vpop.f32.mrf.mxu0
        %v2233 = vadd.f32 0.0, %v2232
        %v2234 = vpop.f32.mrf.mxu0
        %2235 = vdwg.mxu0
        %v2238 = vcombine.high %v2161, %v2161
        %v2240 = vunpack.c.l.s4 1983009808
        %v2241 = vunpack.c.0.s8 %v2240
        %v2242 = vlaneseq
        %v2243 = vshrl.u32 %v2242, 7
        %v2244 = vsub.s32 %v2241, %v2243
        %v2245 = vrot.slane %v2161, %v2244
        %v2247 = vunpack.c.l.s4 1983009808
        %v2248 = vunpack.c.0.s8 %v2247
        %v2249 = vlaneseq
        %v2250 = vshrl.u32 %v2249, 7
        %v2251 = vsub.s32 %v2248, %v2250
        %v2252 = vrot.slane %v2238, %v2251
        %v2253 = vcombine.high %v2245, %v2245
        %v2254 = vcombine.high %v2233, %v2233
        %v2256 = vunpack.c.l.s4 1983009808
        %v2257 = vunpack.c.0.s8 %v2256
        %v2258 = vlaneseq
        %v2259 = vshrl.u32 %v2258, 7
        %v2260 = vsub.s32 %v2257, %v2259
        %v2261 = vrot.slane %v2233, %v2260
        %v2263 = vunpack.c.l.s4 1983009808
        %v2264 = vunpack.c.0.s8 %v2263
        %v2265 = vlaneseq
        %v2266 = vshrl.u32 %v2265, 7
        %v2267 = vsub.s32 %v2264, %v2266
        %v2268 = vrot.slane %v2254, %v2267
        %v2269 = vcombine.high %v2261, %v2261
        %2270 = vrot.lane.b32.xlu0 %v2245, 96
        %v2271 = vpop.permute.xlu0 %2270
        %2272 = vrot.lane.b32.xlu0 %v2253, 96
        %v2273 = vpop.permute.xlu0 %2272
        %2274 = vrot.lane.b32.xlu0 %v2252, 96
        %v2275 = vpop.permute.xlu0 %2274
        %2276 = vrot.lane.b32.xlu0 %v2261, 96
        %v2277 = vpop.permute.xlu0 %2276
        %2278 = vrot.lane.b32.xlu0 %v2269, 96
        %v2279 = vpop.permute.xlu0 %2278
        %2280 = vrot.lane.b32.xlu0 %v2268, 96
        %v2281 = vpop.permute.xlu0 %2280
        %v2288 = vmul.f32 %v1519, %v2271
        %v2289 = vmul.f32 %v1521, %v2273
        %v2290 = vmul.f32 %v1523, %v2275
        %v2291 = vmul.f32 %v1525, %v2277
        %v2292 = vmul.f32 %v1527, %v2279
        %v2293 = vmul.f32 %v1529, %v2281
        %v2294 = vsub.f32 1.0, %v1519
        %v2295 = vsub.f32 1.0, %v1521
        %v2296 = vsub.f32 1.0, %v1523
        %v2297 = vsub.f32 1.0, %v1525
        %v2298 = vsub.f32 1.0, %v1527
        %v2299 = vsub.f32 1.0, %v1529
        %v2300 = vmul.f32 %v2294, %v1296
        %v2301 = vmul.f32 %v2295, %v1297
        %v2302 = vmul.f32 %v2296, %v1298
        %v2303 = vmul.f32 %v2297, %v1299
        %v2304 = vmul.f32 %v2298, %v1300
        %v2305 = vmul.f32 %v2299, %v1301
        %v2306 = vadd.f32 %v2288, %v2300
        %v2307 = vadd.f32 %v2289, %v2301
        %v2308 = vadd.f32 %v2290, %v2302
        %v2309 = vadd.f32 %v2291, %v2303
        %v2310 = vadd.f32 %v2292, %v2304
        %v2311 = vadd.f32 %v2293, %v2305
        %s2312 = scalar_lea.vmem [#allocation2], 64
        %v2313 = vld [vmem:[%s2312] sm:$0xff]
        %v2314 = vld [vmem:[%s2312 + $0x8] sm:$0xff]
        %v2315 = vld [vmem:[%s2312 + $0x10] sm:$0xff]
        %v2316 = vld [vmem:[%s2312 + $0x18] sm:$0xff]
        %s2317 = scalar_lea.vmem %s4, 2
        %v2318 = vld [vmem:[%s2317] sm:$0x1]
        %s2319 = scalar_lea.vmem %s1, 16
        %v2320 = vld [vmem:[%s2319] sm:$0x3f]
        %v2327 = vcombine.low %v2306, %v2307
        %v2328 = vcombine.low %v2308, %v2309
        %v2330 = vunpack.c.l.s4 1983009808
        %v2331 = vunpack.c.0.s8 %v2330
        %v2332 = vlaneseq
        %v2333 = vshrl.u32 %v2332, 7
        %v2334 = vsub.s32 %v2331, %v2333
        %v2335 = vrot.slane %v2327, %v2334
        %v2337 = vunpack.c.l.s4 1983009808
        %v2338 = vunpack.c.0.s8 %v2337
        %v2339 = vlaneseq
        %v2340 = vshrl.u32 %v2339, 7
        %v2341 = vsub.s32 %v2338, %v2340
        %v2342 = vrot.slane %v2328, %v2341
        %v2343 = vcombine.low %v2335, %v2342
        %v2344 = vcombine.low %v2310, %v2311
        %v2346 = vunpack.c.l.s4 1983009808
        %v2347 = vunpack.c.0.s8 %v2346
        %v2348 = vlaneseq
        %v2349 = vshrl.u32 %v2348, 7
        %v2350 = vsub.s32 %v2347, %v2349
        %v2351 = vrot.slane %v2344, %v2350
        %2352 = vrot.lane.b32.xlu0 %v2343, 32
        %v2353 = vpop.permute.xlu0 %2352
        %2354 = vrot.lane.b32.xlu0 %v2351, 32
        %v2355 = vpop.permute.xlu0 %2354
        %v2356 = vsel %vm314, %v2353, 0
        %v2358 = vsel %vm314, %v2355, 0
        %2360 = vmatprep.subr.mxu0 0.0
        %2361 = vmatpush1.msra.mxu0 0.0
        %2362 = vmatprep.subr.mxu0 0.0
        %2363 = vmatpush1.msra.mxu0 0.0
        %2364 = vmatprep.subr.mxu0 0.0
        %2365 = vmatpush1.msra.mxu0 0.0
        %2366 = vmatprep.subr.mxu0 0.0
        %2367 = vmatpush1.msra.mxu0 0.0
        %2368 = vmatprep.subr.mxu0 0.0
        %2369 = vmatpush1.msra.mxu0 0.0
        %2370 = vmatprep.subr.mxu0 0.0
        %2371 = vmatpush1.msra.mxu0 0.0
        %2372 = vmatprep.subr.mxu0 0.0
        %2373 = vmatpush1.msra.mxu0 0.0
        %2374 = vmatprep.subr.mxu0 0.0
        %2375 = vmatpush1.msra.mxu0 0.0
        %2376 = vmatprep.subr.mxu0 0.0
        %2377 = vmatpush1.msra.mxu0 0.0
        %2378 = vmatprep.subr.mxu0 0.0
        %2379 = vmatpush1.msra.mxu0 0.0
        %2380 = vmatprep.subr.mxu0 0.0
        %2381 = vmatpush1.msra.mxu0 0.0
        %2382 = vmatprep.subr.mxu0 0.0
        %2383 = vmatpush1.msra.mxu0 0.0
        %2384 = vmatprep.subr.mxu0 0.0
        %2385 = vmatpush1.msra.mxu0 %v2316
        %2386 = vmatprep.subr.mxu0 0.0
        %2387 = vmatpush1.msra.mxu0 %v2315
        %2388 = vmatprep.subr.mxu0 0.0
        %2389 = vmatpush1.msra.mxu0 %v2314
        %2390 = vmatprep.subr.mxu0 0.0
        %2391 = vmatpush1.msra.mxu0 %v2313
        %2392 = vmatprep.subr.mxu0 0.0
        %2393 = vmatpush2.msra.mxu0 0.0
        %2394 = vmatprep.subr.mxu0 0.0
        %2395 = vmatpush2.msra.mxu0 0.0
        %2396 = vmatprep.subr.mxu0 0.0
        %2397 = vmatpush2.msra.mxu0 0.0
        %2398 = vmatprep.subr.mxu0 0.0
        %2399 = vmatpush2.msra.mxu0 0.0
        %2400 = vmatprep.subr.mxu0 0.0
        %2401 = vmatpush2.msra.mxu0 0.0
        %2402 = vmatprep.subr.mxu0 0.0
        %2403 = vmatpush2.msra.mxu0 0.0
        %2404 = vmatprep.subr.mxu0 0.0
        %2405 = vmatpush2.msra.mxu0 0.0
        %2406 = vmatprep.subr.mxu0 0.0
        %2407 = vmatpush2.msra.mxu0 0.0
        %2408 = vmatprep.subr.mxu0 0.0
        %2409 = vmatpush2.msra.mxu0 0.0
        %2410 = vmatprep.subr.mxu0 0.0
        %2411 = vmatpush2.msra.mxu0 0.0
        %2412 = vmatprep.subr.mxu0 0.0
        %2413 = vmatpush2.msra.mxu0 0.0
        %2414 = vmatprep.subr.mxu0 0.0
        %2415 = vmatpush2.msra.mxu0 0.0
        %2416 = vmatprep.subr.mxu0 0.0
        %2417 = vmatpush2.msra.mxu0 0.0
        %2418 = vmatprep.subr.mxu0 0.0
        %2419 = vmatpush2.msra.mxu0 0.0
        %2420 = vmatprep.subr.mxu0 0.0
        %2421 = vmatpush2.msra.mxu0 0.0
        %2422 = vmatprep.subr.mxu0 0.0
        %2423 = vmatpush2.msra.mxu0 0.0
        %2424 = vmatprep.mubr.f32.mxu0 0.0
        %2425 = vmatmul.mubr.f32.gmra.mxu0 %v2356
        %v2426 = vpop.f32.mrf.mxu0
        %v2427 = vadd.f32 0.0, %v2426
        %v2428 = vpop.f32.mrf.mxu0
        %2429 = vmatprep.mubr.f32.mxu0 0.0
        %2430 = vmatmul.mubr.f32.gmra.mxu0 %v2358
        %v2431 = vpop.f32.mrf.mxu0
        %v2432 = vadd.f32 0.0, %v2431
        %v2433 = vpop.f32.mrf.mxu0
        %2434 = vdwg.mxu0
        %v2437 = vcombine.high %v2427, %v2427
        %v2439 = vunpack.c.l.s4 1983009808
        %v2440 = vunpack.c.0.s8 %v2439
        %v2441 = vlaneseq
        %v2442 = vshrl.u32 %v2441, 7
        %v2443 = vsub.s32 %v2440, %v2442
        %v2444 = vrot.slane %v2427, %v2443
        %v2446 = vunpack.c.l.s4 1983009808
        %v2447 = vunpack.c.0.s8 %v2446
        %v2448 = vlaneseq
        %v2449 = vshrl.u32 %v2448, 7
        %v2450 = vsub.s32 %v2447, %v2449
        %v2451 = vrot.slane %v2437, %v2450
        %v2452 = vcombine.high %v2444, %v2444
        %v2453 = vcombine.high %v2451, %v2451
        %v2455 = vunpack.c.l.s4 1983009808
        %v2456 = vunpack.c.0.s8 %v2455
        %v2457 = vlaneseq
        %v2458 = vshrl.u32 %v2457, 7
        %v2459 = vsub.s32 %v2456, %v2458
        %v2460 = vrot.slane %v2432, %v2459
        %v2461 = vcombine.high %v2460, %v2460
        %v2469 = vlaneseq
        %v2470 = vshrl.u32 %v2469, 7
        %v2471 = vsub.s32 0, %v2470
        %v2472 = vrot.slane %v2318, %v2471
        %v2473 = vcombine.high %v2472, %v2472
        %v2475 = vunpack.c.l.s4 1983009808
        %v2476 = vunpack.c.0.s8 %v2475
        %v2477 = vlaneseq
        %v2478 = vshrl.u32 %v2477, 7
        %v2479 = vsub.s32 %v2476, %v2478
        %v2480 = vrot.slane %v2472, %v2479
        %v2482 = vunpack.c.l.s4 1983009808
        %v2483 = vunpack.c.0.s8 %v2482
        %v2484 = vlaneseq
        %v2485 = vshrl.u32 %v2484, 7
        %v2486 = vsub.s32 %v2483, %v2485
        %v2487 = vrot.slane %v2473, %v2486
        %v2488 = vcombine.high %v2480, %v2480
        %2489 = vrot.lane.b32.xlu0 %v2480, 96
        %v2490 = vpop.permute.xlu0 %2489
        %2491 = vrot.lane.b32.xlu0 %v2488, 96
        %v2492 = vpop.permute.xlu0 %2491
        %2493 = vrot.lane.b32.xlu0 %v2487, 96
        %v2494 = vpop.permute.xlu0 %2493
        %v2498 = vadd.f32 %v2444, %v2490
        %v2499 = vadd.f32 %v2452, %v2492
        %v2500 = vadd.f32 %v2451, %v2494
        %v2501 = vadd.f32 %v2453, %v2490
        %v2502 = vadd.f32 %v2460, %v2492
        %v2503 = vadd.f32 %v2461, %v2494
        %v2504 = vxor.u32 %v2498, 2147483648
        %v2505 = vxor.u32 %v2499, 2147483648
        %v2506 = vxor.u32 %v2500, 2147483648
        %v2507 = vxor.u32 %v2501, 2147483648
        %v2508 = vxor.u32 %v2502, 2147483648
        %v2509 = vxor.u32 %v2503, 2147483648
        %v2510 = vmul.f32 %v2504, 1.442695
        %v2511 = vpow.pop %v2510
        %v2512 = vmul.f32 %v2505, 1.442695
        %v2513 = vpow.pop %v2512
        %v2514 = vmul.f32 %v2506, 1.442695
        %v2515 = vpow.pop %v2514
        %v2516 = vmul.f32 %v2507, 1.442695
        %v2517 = vpow.pop %v2516
        %v2518 = vmul.f32 %v2508, 1.442695
        %v2519 = vpow.pop %v2518
        %v2520 = vmul.f32 %v2509, 1.442695
        %v2521 = vpow.pop %v2520
        %v2522 = vadd.f32 %v2511, 1.0
        %v2523 = vadd.f32 %v2513, 1.0
        %v2524 = vadd.f32 %v2515, 1.0
        %v2525 = vadd.f32 %v2517, 1.0
        %v2526 = vadd.f32 %v2519, 1.0
        %v2527 = vadd.f32 %v2521, 1.0
        %v2528 = vrcp.pop %v2522
        %v2529 = vmul.f32 1.0, %v2528
        %v2530 = vrcp.pop %v2523
        %v2531 = vmul.f32 1.0, %v2530
        %v2532 = vrcp.pop %v2524
        %v2533 = vmul.f32 1.0, %v2532
        %v2534 = vrcp.pop %v2525
        %v2535 = vmul.f32 1.0, %v2534
        %v2536 = vrcp.pop %v2526
        %v2537 = vmul.f32 1.0, %v2536
        %v2538 = vrcp.pop %v2527
        %v2539 = vmul.f32 1.0, %v2538
        %v2540 = vcombine.low %v2444, %v2452
        %v2542 = vunpack.c.l.s4 1983009808
        %v2543 = vunpack.c.0.s8 %v2542
        %v2544 = vlaneseq
        %v2545 = vshrl.u32 %v2544, 7
        %v2546 = vsub.s32 %v2543, %v2545
        %v2547 = vrot.slane %v2540, %v2546
        %v2549 = vunpack.c.l.s4 1983009808
        %v2550 = vunpack.c.0.s8 %v2549
        %v2551 = vlaneseq
        %v2552 = vshrl.u32 %v2551, 7
        %v2553 = vsub.s32 %v2550, %v2552
        %v2554 = vrot.slane %v2451, %v2553
        %v2555 = vcombine.low %v2547, %v2554
        %v2556 = vcombine.low %v2453, %v2460
        %v2558 = vunpack.c.l.s4 1983009808
        %v2559 = vunpack.c.0.s8 %v2558
        %v2560 = vlaneseq
        %v2561 = vshrl.u32 %v2560, 7
        %v2562 = vsub.s32 %v2559, %v2561
        %v2563 = vrot.slane %v2556, %v2562
        %v2565 = vunpack.c.l.s4 1983009808
        %v2566 = vunpack.c.0.s8 %v2565
        %v2567 = vlaneseq
        %v2568 = vshrl.u32 %v2567, 7
        %v2569 = vsub.s32 %v2566, %v2568
        %v2570 = vrot.slane %v2461, %v2569
        %v2571 = vcombine.low %v2563, %v2570
        %v2574 = vsel %vm533, %v2555, -inf
        %v2575 = vrot.slane %v2574, 4
        %v2576 = vmax.f32 %v2574, %v2575
        %v2577 = vrot.slane %v2576, 2
        %v2578 = vmax.f32 %v2576, %v2577
        %v2579 = vrot.slane %v2578, 1
        %v2580 = vmax.f32 %v2578, %v2579
        %v2581 = vsel %vm533, %v2571, -inf
        %v2582 = vrot.slane %v2581, 4
        %v2583 = vmax.f32 %v2581, %v2582
        %v2584 = vrot.slane %v2583, 2
        %v2585 = vmax.f32 %v2583, %v2584
        %v2586 = vrot.slane %v2585, 1
        %v2587 = vmax.f32 %v2585, %v2586
        %v2590 = vcombine.high %v2580, %v2580
        %v2592 = vunpack.c.l.s4 1983009808
        %v2593 = vunpack.c.0.s8 %v2592
        %v2594 = vlaneseq
        %v2595 = vshrl.u32 %v2594, 7
        %v2596 = vsub.s32 %v2593, %v2595
        %v2597 = vrot.slane %v2580, %v2596
        %v2599 = vunpack.c.l.s4 1983009808
        %v2600 = vunpack.c.0.s8 %v2599
        %v2601 = vlaneseq
        %v2602 = vshrl.u32 %v2601, 7
        %v2603 = vsub.s32 %v2600, %v2602
        %v2604 = vrot.slane %v2590, %v2603
        %v2605 = vcombine.high %v2597, %v2597
        %v2606 = vcombine.high %v2587, %v2587
        %v2608 = vunpack.c.l.s4 1983009808
        %v2609 = vunpack.c.0.s8 %v2608
        %v2610 = vlaneseq
        %v2611 = vshrl.u32 %v2610, 7
        %v2612 = vsub.s32 %v2609, %v2611
        %v2613 = vrot.slane %v2587, %v2612
        %v2615 = vunpack.c.l.s4 1983009808
        %v2616 = vunpack.c.0.s8 %v2615
        %v2617 = vlaneseq
        %v2618 = vshrl.u32 %v2617, 7
        %v2619 = vsub.s32 %v2616, %v2618
        %v2620 = vrot.slane %v2606, %v2619
        %v2621 = vcombine.high %v2613, %v2613
        %v2628 = vsub.f32 %v2444, %v2597
        %v2629 = vsub.f32 %v2452, %v2605
        %v2630 = vsub.f32 %v2451, %v2604
        %v2631 = vsub.f32 %v2453, %v2613
        %v2632 = vsub.f32 %v2460, %v2621
        %v2633 = vsub.f32 %v2461, %v2620
        %v2634 = vmul.f32 %v2628, 1.442695
        %v2635 = vpow.pop %v2634
        %v2636 = vmul.f32 %v2629, 1.442695
        %v2637 = vpow.pop %v2636
        %v2638 = vmul.f32 %v2630, 1.442695
        %v2639 = vpow.pop %v2638
        %v2640 = vmul.f32 %v2631, 1.442695
        %v2641 = vpow.pop %v2640
        %v2642 = vmul.f32 %v2632, 1.442695
        %v2643 = vpow.pop %v2642
        %v2644 = vmul.f32 %v2633, 1.442695
        %v2645 = vpow.pop %v2644
        %v2652 = vcombine.low %v2635, %v2637
        %v2654 = vunpack.c.l.s4 1983009808
        %v2655 = vunpack.c.0.s8 %v2654
        %v2656 = vlaneseq
        %v2657 = vshrl.u32 %v2656, 7
        %v2658 = vsub.s32 %v2655, %v2657
        %v2659 = vrot.slane %v2652, %v2658
        %v2661 = vunpack.c.l.s4 1983009808
        %v2662 = vunpack.c.0.s8 %v2661
        %v2663 = vlaneseq
        %v2664 = vshrl.u32 %v2663, 7
        %v2665 = vsub.s32 %v2662, %v2664
        %v2666 = vrot.slane %v2639, %v2665
        %v2667 = vcombine.low %v2659, %v2666
        %v2668 = vcombine.low %v2641, %v2643
        %v2670 = vunpack.c.l.s4 1983009808
        %v2671 = vunpack.c.0.s8 %v2670
        %v2672 = vlaneseq
        %v2673 = vshrl.u32 %v2672, 7
        %v2674 = vsub.s32 %v2671, %v2673
        %v2675 = vrot.slane %v2668, %v2674
        %v2677 = vunpack.c.l.s4 1983009808
        %v2678 = vunpack.c.0.s8 %v2677
        %v2679 = vlaneseq
        %v2680 = vshrl.u32 %v2679, 7
        %v2681 = vsub.s32 %v2678, %v2680
        %v2682 = vrot.slane %v2645, %v2681
        %v2683 = vcombine.low %v2675, %v2682
        %v2686 = vsel %vm533, %v2667, 0.0
        %v2687 = vrot.slane %v2686, 4
        %v2688 = vadd.f32 %v2686, %v2687
        %v2689 = vrot.slane %v2688, 2
        %v2690 = vadd.f32 %v2688, %v2689
        %v2691 = vrot.slane %v2690, 1
        %v2692 = vadd.f32 %v2690, %v2691
        %v2693 = vsel %vm533, %v2683, 0.0
        %v2694 = vrot.slane %v2693, 4
        %v2695 = vadd.f32 %v2693, %v2694
        %v2696 = vrot.slane %v2695, 2
        %v2697 = vadd.f32 %v2695, %v2696
        %v2698 = vrot.slane %v2697, 1
        %v2699 = vadd.f32 %v2697, %v2698
        %v2702 = vcombine.high %v2692, %v2692
        %v2704 = vunpack.c.l.s4 1983009808
        %v2705 = vunpack.c.0.s8 %v2704
        %v2706 = vlaneseq
        %v2707 = vshrl.u32 %v2706, 7
        %v2708 = vsub.s32 %v2705, %v2707
        %v2709 = vrot.slane %v2692, %v2708
        %v2711 = vunpack.c.l.s4 1983009808
        %v2712 = vunpack.c.0.s8 %v2711
        %v2713 = vlaneseq
        %v2714 = vshrl.u32 %v2713, 7
        %v2715 = vsub.s32 %v2712, %v2714
        %v2716 = vrot.slane %v2702, %v2715
        %v2717 = vcombine.high %v2709, %v2709
        %v2718 = vcombine.high %v2699, %v2699
        %v2720 = vunpack.c.l.s4 1983009808
        %v2721 = vunpack.c.0.s8 %v2720
        %v2722 = vlaneseq
        %v2723 = vshrl.u32 %v2722, 7
        %v2724 = vsub.s32 %v2721, %v2723
        %v2725 = vrot.slane %v2699, %v2724
        %v2727 = vunpack.c.l.s4 1983009808
        %v2728 = vunpack.c.0.s8 %v2727
        %v2729 = vlaneseq
        %v2730 = vshrl.u32 %v2729, 7
        %v2731 = vsub.s32 %v2728, %v2730
        %v2732 = vrot.slane %v2718, %v2731
        %v2733 = vcombine.high %v2725, %v2725
        %v2740 = vrcp.pop %v2709
        %v2741 = vmul.f32 %v2635, %v2740
        %v2742 = vrcp.pop %v2717
        %v2743 = vmul.f32 %v2637, %v2742
        %v2744 = vrcp.pop %v2716
        %v2745 = vmul.f32 %v2639, %v2744
        %v2746 = vrcp.pop %v2725
        %v2747 = vmul.f32 %v2641, %v2746
        %v2748 = vrcp.pop %v2733
        %v2749 = vmul.f32 %v2643, %v2748
        %v2750 = vrcp.pop %v2732
        %v2751 = vmul.f32 %v2645, %v2750
        %v2753 = vcombine.high %v2320, %v2320
        %v2755 = vunpack.c.l.s4 1983009808
        %v2756 = vunpack.c.0.s8 %v2755
        %v2757 = vlaneseq
        %v2758 = vshrl.u32 %v2757, 7
        %v2759 = vsub.s32 %v2756, %v2758
        %v2760 = vrot.slane %v2320, %v2759
        %v2762 = vunpack.c.l.s4 1983009808
        %v2763 = vunpack.c.0.s8 %v2762
        %v2764 = vlaneseq
        %v2765 = vshrl.u32 %v2764, 7
        %v2766 = vsub.s32 %v2763, %v2765
        %v2767 = vrot.slane %v2753, %v2766
        %v2768 = vcombine.high %v2760, %v2760
        %2769 = vrot.lane.b32.xlu0 %v2760, 32
        %v2770 = vpop.permute.xlu0 %2769
        %2771 = vrot.lane.b32.xlu0 %v2768, 32
        %v2772 = vpop.permute.xlu0 %2771
        %2773 = vrot.lane.b32.xlu0 %v2767, 32
        %v2774 = vpop.permute.xlu0 %2773
        %v2778 = vadd.f32 %v2741, %v2770
        %v2779 = vadd.f32 %v2743, %v2772
        %v2780 = vadd.f32 %v2745, %v2774
        %v2781 = vadd.f32 %v2747, %v2770
        %v2782 = vadd.f32 %v2749, %v2772
        %v2783 = vadd.f32 %v2751, %v2774
        %v2787 = vcombine.low %v2778, %v2779
        %v2789 = vunpack.c.l.s4 1983009808
        %v2790 = vunpack.c.0.s8 %v2789
        %v2791 = vlaneseq
        %v2792 = vshrl.u32 %v2791, 7
        %v2793 = vsub.s32 %v2790, %v2792
        %v2794 = vrot.slane %v2787, %v2793
        %v2796 = vunpack.c.l.s4 1983009808
        %v2797 = vunpack.c.0.s8 %v2796
        %v2798 = vlaneseq
        %v2799 = vshrl.u32 %v2798, 7
        %v2800 = vsub.s32 %v2797, %v2799
        %v2801 = vrot.slane %v2780, %v2800
        %v2802 = vcombine.low %v2794, %v2801
        %2803 = vrot.lane.b32.xlu0 %v2802, 96
        %v2804 = vpop.permute.xlu0 %2803
        %2806 = vxpose.xlu0.b32.start [1/16] %v2804, 128
        %2807 = vxpose.xlu0.b32.cont [2/16] 0.0, 128
        %2808 = vxpose.xlu0.b32.cont [3/16] 0.0, 128
        %2809 = vxpose.xlu0.b32.cont [4/16] 0.0, 128
        %2810 = vxpose.xlu0.b32.cont [5/16] 0.0, 128
        %2811 = vxpose.xlu0.b32.cont [6/16] 0.0, 128
        %2812 = vxpose.xlu0.b32.cont [7/16] 0.0, 128
        %2813 = vxpose.xlu0.b32.cont [8/16] 0.0, 128
        %2814 = vxpose.xlu0.b32.cont [9/16] 0.0, 128
        %2815 = vxpose.xlu0.b32.cont [10/16] 0.0, 128
        %2816 = vxpose.xlu0.b32.cont [11/16] 0.0, 128
        %2817 = vxpose.xlu0.b32.cont [12/16] 0.0, 128
        %2818 = vxpose.xlu0.b32.cont [13/16] 0.0, 128
        %2819 = vxpose.xlu0.b32.cont [14/16] 0.0, 128
        %2820 = vxpose.xlu0.b32.cont [15/16] 0.0, 128
        %2821 = vxpose.xlu0.b32.end [16/16] 0.0, 128
        %v2822 = vpop.trf.xlu0
        %v2823 = vpop.trf.xlu0
        %v2824 = vpop.trf.xlu0
        %v2825 = vpop.trf.xlu0
        %v2826 = vpop.trf.xlu0
        %v2827 = vpop.trf.xlu0
        %v2828 = vpop.trf.xlu0
        %v2829 = vpop.trf.xlu0
        %v2830 = vpop.trf.xlu0
        %v2831 = vpop.trf.xlu0
        %v2832 = vpop.trf.xlu0
        %v2833 = vpop.trf.xlu0
        %v2834 = vpop.trf.xlu0
        %v2835 = vpop.trf.xlu0
        %v2836 = vpop.trf.xlu0
        %v2837 = vpop.trf.xlu0
        %2838 = vrot.lane.b32.xlu0 %v2555, 64
        %v2839 = vpop.permute.xlu0 %2838
        %v2841 = vsel %vm800, %v2822, 0
        %v2844 = vsel %vm800, %v2823, 0
        %v2847 = vsel %vm800, %v2824, 0
        %v2850 = vsel %vm800, %v2825, 0
        %v2852 = vsel %vm813, %v2839, 0
        %2854 = vmatprep.subr.mxu0 0.0
        %2855 = vmatpush1.msra.mxu0 0.0
        %2856 = vmatprep.subr.mxu0 0.0
        %2857 = vmatpush1.msra.mxu0 0.0
        %2858 = vmatprep.subr.mxu0 0.0
        %2859 = vmatpush1.msra.mxu0 0.0
        %2860 = vmatprep.subr.mxu0 0.0
        %2861 = vmatpush1.msra.mxu0 0.0
        %2862 = vmatprep.subr.mxu0 0.0
        %2863 = vmatpush1.msra.mxu0 0.0
        %2864 = vmatprep.subr.mxu0 0.0
        %2865 = vmatpush1.msra.mxu0 0.0
        %2866 = vmatprep.subr.mxu0 0.0
        %2867 = vmatpush1.msra.mxu0 0.0
        %2868 = vmatprep.subr.mxu0 0.0
        %2869 = vmatpush1.msra.mxu0 0.0
        %2870 = vmatprep.subr.mxu0 0.0
        %2871 = vmatpush1.msra.mxu0 0.0
        %2872 = vmatprep.subr.mxu0 0.0
        %2873 = vmatpush1.msra.mxu0 0.0
        %2874 = vmatprep.subr.mxu0 0.0
        %2875 = vmatpush1.msra.mxu0 0.0
        %2876 = vmatprep.subr.mxu0 0.0
        %2877 = vmatpush1.msra.mxu0 0.0
        %2878 = vmatprep.subr.mxu0 0.0
        %2879 = vmatpush1.msra.mxu0 0.0
        %2880 = vmatprep.subr.mxu0 0.0
        %2881 = vmatpush1.msra.mxu0 0.0
        %2882 = vmatprep.subr.mxu0 0.0
        %2883 = vmatpush1.msra.mxu0 0.0
        %2884 = vmatprep.subr.mxu0 0.0
        %2885 = vmatpush1.msra.mxu0 %v2852
        %2886 = vmatprep.subr.mxu0 0.0
        %2887 = vmatpush2.msra.mxu0 0.0
        %2888 = vmatprep.subr.mxu0 0.0
        %2889 = vmatpush2.msra.mxu0 0.0
        %2890 = vmatprep.subr.mxu0 0.0
        %2891 = vmatpush2.msra.mxu0 0.0
        %2892 = vmatprep.subr.mxu0 0.0
        %2893 = vmatpush2.msra.mxu0 0.0
        %2894 = vmatprep.subr.mxu0 0.0
        %2895 = vmatpush2.msra.mxu0 0.0
        %2896 = vmatprep.subr.mxu0 0.0
        %2897 = vmatpush2.msra.mxu0 0.0
        %2898 = vmatprep.subr.mxu0 0.0
        %2899 = vmatpush2.msra.mxu0 0.0
        %2900 = vmatprep.subr.mxu0 0.0
        %2901 = vmatpush2.msra.mxu0 0.0
        %2902 = vmatprep.subr.mxu0 0.0
        %2903 = vmatpush2.msra.mxu0 0.0
        %2904 = vmatprep.subr.mxu0 0.0
        %2905 = vmatpush2.msra.mxu0 0.0
        %2906 = vmatprep.subr.mxu0 0.0
        %2907 = vmatpush2.msra.mxu0 0.0
        %2908 = vmatprep.subr.mxu0 0.0
        %2909 = vmatpush2.msra.mxu0 0.0
        %2910 = vmatprep.subr.mxu0 0.0
        %2911 = vmatpush2.msra.mxu0 0.0
        %2912 = vmatprep.subr.mxu0 0.0
        %2913 = vmatpush2.msra.mxu0 0.0
        %2914 = vmatprep.subr.mxu0 0.0
        %2915 = vmatpush2.msra.mxu0 0.0
        %2916 = vmatprep.subr.mxu0 0.0
        %2917 = vmatpush2.msra.mxu0 0.0
        %2918 = vmatprep.mubr.f32.mxu0 0.0
        %2919 = vmatmul.mubr.f32.gmra.mxu0 %v2841
        %v2920 = vpop.f32.mrf.mxu0
        %v2921 = vadd.f32 0.0, %v2920
        %v2922 = vpop.f32.mrf.mxu0
        %2923 = vmatprep.mubr.f32.mxu0 0.0
        %2924 = vmatmul.mubr.f32.gmra.mxu0 %v2844
        %v2925 = vpop.f32.mrf.mxu0
        %v2926 = vadd.f32 0.0, %v2925
        %v2927 = vpop.f32.mrf.mxu0
        %2928 = vmatprep.mubr.f32.mxu0 0.0
        %2929 = vmatmul.mubr.f32.gmra.mxu0 %v2847
        %v2930 = vpop.f32.mrf.mxu0
        %v2931 = vadd.f32 0.0, %v2930
        %v2932 = vpop.f32.mrf.mxu0
        %2933 = vmatprep.mubr.f32.mxu0 0.0
        %2934 = vmatmul.mubr.f32.gmra.mxu0 %v2850
        %v2935 = vpop.f32.mrf.mxu0
        %v2936 = vadd.f32 0.0, %v2935
        %v2937 = vpop.f32.mrf.mxu0
        %2938 = vdwg.mxu0
        %v2942 = vcombine.low %v2781, %v2782
        %v2944 = vunpack.c.l.s4 1983009808
        %v2945 = vunpack.c.0.s8 %v2944
        %v2946 = vlaneseq
        %v2947 = vshrl.u32 %v2946, 7
        %v2948 = vsub.s32 %v2945, %v2947
        %v2949 = vrot.slane %v2942, %v2948
        %v2951 = vunpack.c.l.s4 1983009808
        %v2952 = vunpack.c.0.s8 %v2951
        %v2953 = vlaneseq
        %v2954 = vshrl.u32 %v2953, 7
        %v2955 = vsub.s32 %v2952, %v2954
        %v2956 = vrot.slane %v2783, %v2955
        %v2957 = vcombine.low %v2949, %v2956
        %2958 = vrot.lane.b32.xlu0 %v2957, 96
        %v2959 = vpop.permute.xlu0 %2958
        %2961 = vxpose.xlu0.b32.start [1/16] %v2959, 128
        %2962 = vxpose.xlu0.b32.cont [2/16] 0.0, 128
        %2963 = vxpose.xlu0.b32.cont [3/16] 0.0, 128
        %2964 = vxpose.xlu0.b32.cont [4/16] 0.0, 128
        %2965 = vxpose.xlu0.b32.cont [5/16] 0.0, 128
        %2966 = vxpose.xlu0.b32.cont [6/16] 0.0, 128
        %2967 = vxpose.xlu0.b32.cont [7/16] 0.0, 128
        %2968 = vxpose.xlu0.b32.cont [8/16] 0.0, 128
        %2969 = vxpose.xlu0.b32.cont [9/16] 0.0, 128
        %2970 = vxpose.xlu0.b32.cont [10/16] 0.0, 128
        %2971 = vxpose.xlu0.b32.cont [11/16] 0.0, 128
        %2972 = vxpose.xlu0.b32.cont [12/16] 0.0, 128
        %2973 = vxpose.xlu0.b32.cont [13/16] 0.0, 128
        %2974 = vxpose.xlu0.b32.cont [14/16] 0.0, 128
        %2975 = vxpose.xlu0.b32.cont [15/16] 0.0, 128
        %2976 = vxpose.xlu0.b32.end [16/16] 0.0, 128
        %v2977 = vpop.trf.xlu0
        %v2978 = vpop.trf.xlu0
        %v2979 = vpop.trf.xlu0
        %v2980 = vpop.trf.xlu0
        %v2981 = vpop.trf.xlu0
        %v2982 = vpop.trf.xlu0
        %v2983 = vpop.trf.xlu0
        %v2984 = vpop.trf.xlu0
        %v2985 = vpop.trf.xlu0
        %v2986 = vpop.trf.xlu0
        %v2987 = vpop.trf.xlu0
        %v2988 = vpop.trf.xlu0
        %v2989 = vpop.trf.xlu0
        %v2990 = vpop.trf.xlu0
        %v2991 = vpop.trf.xlu0
        %v2992 = vpop.trf.xlu0
        %2993 = vrot.lane.b32.xlu0 %v2571, 64
        %v2994 = vpop.permute.xlu0 %2993
        %v2996 = vsel %vm800, %v2977, 0
        %v2999 = vsel %vm800, %v2978, 0
        %v3002 = vsel %vm800, %v2979, 0
        %v3005 = vsel %vm800, %v2980, 0
        %v3007 = vsel %vm813, %v2994, 0
        %3009 = vmatprep.subr.mxu0 0.0
        %3010 = vmatpush1.msra.mxu0 0.0
        %3011 = vmatprep.subr.mxu0 0.0
        %3012 = vmatpush1.msra.mxu0 0.0
        %3013 = vmatprep.subr.mxu0 0.0
        %3014 = vmatpush1.msra.mxu0 0.0
        %3015 = vmatprep.subr.mxu0 0.0
        %3016 = vmatpush1.msra.mxu0 0.0
        %3017 = vmatprep.subr.mxu0 0.0
        %3018 = vmatpush1.msra.mxu0 0.0
        %3019 = vmatprep.subr.mxu0 0.0
        %3020 = vmatpush1.msra.mxu0 0.0
        %3021 = vmatprep.subr.mxu0 0.0
        %3022 = vmatpush1.msra.mxu0 0.0
        %3023 = vmatprep.subr.mxu0 0.0
        %3024 = vmatpush1.msra.mxu0 0.0
        %3025 = vmatprep.subr.mxu0 0.0
        %3026 = vmatpush1.msra.mxu0 0.0
        %3027 = vmatprep.subr.mxu0 0.0
        %3028 = vmatpush1.msra.mxu0 0.0
        %3029 = vmatprep.subr.mxu0 0.0
        %3030 = vmatpush1.msra.mxu0 0.0
        %3031 = vmatprep.subr.mxu0 0.0
        %3032 = vmatpush1.msra.mxu0 0.0
        %3033 = vmatprep.subr.mxu0 0.0
        %3034 = vmatpush1.msra.mxu0 0.0
        %3035 = vmatprep.subr.mxu0 0.0
        %3036 = vmatpush1.msra.mxu0 0.0
        %3037 = vmatprep.subr.mxu0 0.0
        %3038 = vmatpush1.msra.mxu0 0.0
        %3039 = vmatprep.subr.mxu0 0.0
        %3040 = vmatpush1.msra.mxu0 %v3007
        %3041 = vmatprep.subr.mxu0 0.0
        %3042 = vmatpush2.msra.mxu0 0.0
        %3043 = vmatprep.subr.mxu0 0.0
        %3044 = vmatpush2.msra.mxu0 0.0
        %3045 = vmatprep.subr.mxu0 0.0
        %3046 = vmatpush2.msra.mxu0 0.0
        %3047 = vmatprep.subr.mxu0 0.0
        %3048 = vmatpush2.msra.mxu0 0.0
        %3049 = vmatprep.subr.mxu0 0.0
        %3050 = vmatpush2.msra.mxu0 0.0
        %3051 = vmatprep.subr.mxu0 0.0
        %3052 = vmatpush2.msra.mxu0 0.0
        %3053 = vmatprep.subr.mxu0 0.0
        %3054 = vmatpush2.msra.mxu0 0.0
        %3055 = vmatprep.subr.mxu0 0.0
        %3056 = vmatpush2.msra.mxu0 0.0
        %3057 = vmatprep.subr.mxu0 0.0
        %3058 = vmatpush2.msra.mxu0 0.0
        %3059 = vmatprep.subr.mxu0 0.0
        %3060 = vmatpush2.msra.mxu0 0.0
        %3061 = vmatprep.subr.mxu0 0.0
        %3062 = vmatpush2.msra.mxu0 0.0
        %3063 = vmatprep.subr.mxu0 0.0
        %3064 = vmatpush2.msra.mxu0 0.0
        %3065 = vmatprep.subr.mxu0 0.0
        %3066 = vmatpush2.msra.mxu0 0.0
        %3067 = vmatprep.subr.mxu0 0.0
        %3068 = vmatpush2.msra.mxu0 0.0
        %3069 = vmatprep.subr.mxu0 0.0
        %3070 = vmatpush2.msra.mxu0 0.0
        %3071 = vmatprep.subr.mxu0 0.0
        %3072 = vmatpush2.msra.mxu0 0.0
        %3073 = vmatprep.mubr.f32.mxu0 0.0
        %3074 = vmatmul.mubr.f32.gmra.mxu0 %v2996
        %v3075 = vpop.f32.mrf.mxu0
        %v3076 = vadd.f32 0.0, %v3075
        %v3077 = vpop.f32.mrf.mxu0
        %3078 = vmatprep.mubr.f32.mxu0 0.0
        %3079 = vmatmul.mubr.f32.gmra.mxu0 %v2999
        %v3080 = vpop.f32.mrf.mxu0
        %v3081 = vadd.f32 0.0, %v3080
        %v3082 = vpop.f32.mrf.mxu0
        %3083 = vmatprep.mubr.f32.mxu0 0.0
        %3084 = vmatmul.mubr.f32.gmra.mxu0 %v3002
        %v3085 = vpop.f32.mrf.mxu0
        %v3086 = vadd.f32 0.0, %v3085
        %v3087 = vpop.f32.mrf.mxu0
        %3088 = vmatprep.mubr.f32.mxu0 0.0
        %3089 = vmatmul.mubr.f32.gmra.mxu0 %v3005
        %v3090 = vpop.f32.mrf.mxu0
        %v3091 = vadd.f32 0.0, %v3090
        %v3092 = vpop.f32.mrf.mxu0
        %3093 = vdwg.mxu0
        %v3094 = vmul.f32 %v2921, %v243
        %v3095 = vmul.f32 %v2926, %v244
        %v3096 = vmul.f32 %v2931, %v245
        %v3097 = vmul.f32 %v2936, %v246
        %v3098 = vmul.f32 %v3076, %v243
        %v3099 = vmul.f32 %v3081, %v244
        %v3100 = vmul.f32 %v3086, %v245
        %v3101 = vmul.f32 %v3091, %v246
        %v3102 = vsel %vm314, %v2555, 0
        %3104 = vmatprep.subr.mxu0 0.0
        %3105 = vmatpush1.msra.mxu0 0.0
        %3106 = vmatprep.subr.mxu0 0.0
        %3107 = vmatpush1.msra.mxu0 0.0
        %3108 = vmatprep.subr.mxu0 0.0
        %3109 = vmatpush1.msra.mxu0 0.0
        %3110 = vmatprep.subr.mxu0 0.0
        %3111 = vmatpush1.msra.mxu0 0.0
        %3112 = vmatprep.subr.mxu0 0.0
        %3113 = vmatpush1.msra.mxu0 0.0
        %3114 = vmatprep.subr.mxu0 0.0
        %3115 = vmatpush1.msra.mxu0 0.0
        %3116 = vmatprep.subr.mxu0 0.0
        %3117 = vmatpush1.msra.mxu0 0.0
        %3118 = vmatprep.subr.mxu0 0.0
        %3119 = vmatpush1.msra.mxu0 0.0
        %3120 = vmatprep.subr.mxu0 0.0
        %3121 = vmatpush1.msra.mxu0 0.0
        %3122 = vmatprep.subr.mxu0 0.0
        %3123 = vmatpush1.msra.mxu0 0.0
        %3124 = vmatprep.subr.mxu0 0.0
        %3125 = vmatpush1.msra.mxu0 0.0
        %3126 = vmatprep.subr.mxu0 0.0
        %3127 = vmatpush1.msra.mxu0 0.0
        %3128 = vmatprep.subr.mxu0 0.0
        %3129 = vmatpush1.msra.mxu0 %v3097
        %3130 = vmatprep.subr.mxu0 0.0
        %3131 = vmatpush1.msra.mxu0 %v3096
        %3132 = vmatprep.subr.mxu0 0.0
        %3133 = vmatpush1.msra.mxu0 %v3095
        %3134 = vmatprep.subr.mxu0 0.0
        %3135 = vmatpush1.msra.mxu0 %v3094
        %3136 = vmatprep.subr.mxu0 0.0
        %3137 = vmatpush2.msra.mxu0 0.0
        %3138 = vmatprep.subr.mxu0 0.0
        %3139 = vmatpush2.msra.mxu0 0.0
        %3140 = vmatprep.subr.mxu0 0.0
        %3141 = vmatpush2.msra.mxu0 0.0
        %3142 = vmatprep.subr.mxu0 0.0
        %3143 = vmatpush2.msra.mxu0 0.0
        %3144 = vmatprep.subr.mxu0 0.0
        %3145 = vmatpush2.msra.mxu0 0.0
        %3146 = vmatprep.subr.mxu0 0.0
        %3147 = vmatpush2.msra.mxu0 0.0
        %3148 = vmatprep.subr.mxu0 0.0
        %3149 = vmatpush2.msra.mxu0 0.0
        %3150 = vmatprep.subr.mxu0 0.0
        %3151 = vmatpush2.msra.mxu0 0.0
        %3152 = vmatprep.subr.mxu0 0.0
        %3153 = vmatpush2.msra.mxu0 0.0
        %3154 = vmatprep.subr.mxu0 0.0
        %3155 = vmatpush2.msra.mxu0 0.0
        %3156 = vmatprep.subr.mxu0 0.0
        %3157 = vmatpush2.msra.mxu0 0.0
        %3158 = vmatprep.subr.mxu0 0.0
        %3159 = vmatpush2.msra.mxu0 0.0
        %3160 = vmatprep.subr.mxu0 0.0
        %3161 = vmatpush2.msra.mxu0 0.0
        %3162 = vmatprep.subr.mxu0 0.0
        %3163 = vmatpush2.msra.mxu0 0.0
        %3164 = vmatprep.subr.mxu0 0.0
        %3165 = vmatpush2.msra.mxu0 0.0
        %3166 = vmatprep.subr.mxu0 0.0
        %3167 = vmatpush2.msra.mxu0 0.0
        %3168 = vmatprep.mubr.f32.mxu0 0.0
        %3169 = vmatmul.mubr.f32.gmra.mxu0 %v3102
        %v3170 = vpop.f32.mrf.mxu0
        %v3171 = vadd.f32 0.0, %v3170
        %v3172 = vpop.f32.mrf.mxu0
        %3173 = vdwg.mxu0
        %v3174 = vsel %vm314, %v2571, 0
        %3176 = vmatprep.subr.mxu0 0.0
        %3177 = vmatpush1.msra.mxu0 0.0
        %3178 = vmatprep.subr.mxu0 0.0
        %3179 = vmatpush1.msra.mxu0 0.0
        %3180 = vmatprep.subr.mxu0 0.0
        %3181 = vmatpush1.msra.mxu0 0.0
        %3182 = vmatprep.subr.mxu0 0.0
        %3183 = vmatpush1.msra.mxu0 0.0
        %3184 = vmatprep.subr.mxu0 0.0
        %3185 = vmatpush1.msra.mxu0 0.0
        %3186 = vmatprep.subr.mxu0 0.0
        %3187 = vmatpush1.msra.mxu0 0.0
        %3188 = vmatprep.subr.mxu0 0.0
        %3189 = vmatpush1.msra.mxu0 0.0
        %3190 = vmatprep.subr.mxu0 0.0
        %3191 = vmatpush1.msra.mxu0 0.0
        %3192 = vmatprep.subr.mxu0 0.0
        %3193 = vmatpush1.msra.mxu0 0.0
        %3194 = vmatprep.subr.mxu0 0.0
        %3195 = vmatpush1.msra.mxu0 0.0
        %3196 = vmatprep.subr.mxu0 0.0
        %3197 = vmatpush1.msra.mxu0 0.0
        %3198 = vmatprep.subr.mxu0 0.0
        %3199 = vmatpush1.msra.mxu0 0.0
        %3200 = vmatprep.subr.mxu0 0.0
        %3201 = vmatpush1.msra.mxu0 %v3101
        %3202 = vmatprep.subr.mxu0 0.0
        %3203 = vmatpush1.msra.mxu0 %v3100
        %3204 = vmatprep.subr.mxu0 0.0
        %3205 = vmatpush1.msra.mxu0 %v3099
        %3206 = vmatprep.subr.mxu0 0.0
        %3207 = vmatpush1.msra.mxu0 %v3098
        %3208 = vmatprep.subr.mxu0 0.0
        %3209 = vmatpush2.msra.mxu0 0.0
        %3210 = vmatprep.subr.mxu0 0.0
        %3211 = vmatpush2.msra.mxu0 0.0
        %3212 = vmatprep.subr.mxu0 0.0
        %3213 = vmatpush2.msra.mxu0 0.0
        %3214 = vmatprep.subr.mxu0 0.0
        %3215 = vmatpush2.msra.mxu0 0.0
        %3216 = vmatprep.subr.mxu0 0.0
        %3217 = vmatpush2.msra.mxu0 0.0
        %3218 = vmatprep.subr.mxu0 0.0
        %3219 = vmatpush2.msra.mxu0 0.0
        %3220 = vmatprep.subr.mxu0 0.0
        %3221 = vmatpush2.msra.mxu0 0.0
        %3222 = vmatprep.subr.mxu0 0.0
        %3223 = vmatpush2.msra.mxu0 0.0
        %3224 = vmatprep.subr.mxu0 0.0
        %3225 = vmatpush2.msra.mxu0 0.0
        %3226 = vmatprep.subr.mxu0 0.0
        %3227 = vmatpush2.msra.mxu0 0.0
        %3228 = vmatprep.subr.mxu0 0.0
        %3229 = vmatpush2.msra.mxu0 0.0
        %3230 = vmatprep.subr.mxu0 0.0
        %3231 = vmatpush2.msra.mxu0 0.0
        %3232 = vmatprep.subr.mxu0 0.0
        %3233 = vmatpush2.msra.mxu0 0.0
        %3234 = vmatprep.subr.mxu0 0.0
        %3235 = vmatpush2.msra.mxu0 0.0
        %3236 = vmatprep.subr.mxu0 0.0
        %3237 = vmatpush2.msra.mxu0 0.0
        %3238 = vmatprep.subr.mxu0 0.0
        %3239 = vmatpush2.msra.mxu0 0.0
        %3240 = vmatprep.mubr.f32.mxu0 0.0
        %3241 = vmatmul.mubr.f32.gmra.mxu0 %v3174
        %v3242 = vpop.f32.mrf.mxu0
        %v3243 = vadd.f32 0.0, %v3242
        %v3244 = vpop.f32.mrf.mxu0
        %3245 = vdwg.mxu0
        %v3248 = vcombine.high %v3171, %v3171
        %v3250 = vunpack.c.l.s4 1983009808
        %v3251 = vunpack.c.0.s8 %v3250
        %v3252 = vlaneseq
        %v3253 = vshrl.u32 %v3252, 7
        %v3254 = vsub.s32 %v3251, %v3253
        %v3255 = vrot.slane %v3171, %v3254
        %v3257 = vunpack.c.l.s4 1983009808
        %v3258 = vunpack.c.0.s8 %v3257
        %v3259 = vlaneseq
        %v3260 = vshrl.u32 %v3259, 7
        %v3261 = vsub.s32 %v3258, %v3260
        %v3262 = vrot.slane %v3248, %v3261
        %v3263 = vcombine.high %v3255, %v3255
        %v3264 = vcombine.high %v3243, %v3243
        %v3266 = vunpack.c.l.s4 1983009808
        %v3267 = vunpack.c.0.s8 %v3266
        %v3268 = vlaneseq
        %v3269 = vshrl.u32 %v3268, 7
        %v3270 = vsub.s32 %v3267, %v3269
        %v3271 = vrot.slane %v3243, %v3270
        %v3273 = vunpack.c.l.s4 1983009808
        %v3274 = vunpack.c.0.s8 %v3273
        %v3275 = vlaneseq
        %v3276 = vshrl.u32 %v3275, 7
        %v3277 = vsub.s32 %v3274, %v3276
        %v3278 = vrot.slane %v3264, %v3277
        %v3279 = vcombine.high %v3271, %v3271
        %3280 = vrot.lane.b32.xlu0 %v3255, 96
        %v3281 = vpop.permute.xlu0 %3280
        %3282 = vrot.lane.b32.xlu0 %v3263, 96
        %v3283 = vpop.permute.xlu0 %3282
        %3284 = vrot.lane.b32.xlu0 %v3262, 96
        %v3285 = vpop.permute.xlu0 %3284
        %3286 = vrot.lane.b32.xlu0 %v3271, 96
        %v3287 = vpop.permute.xlu0 %3286
        %3288 = vrot.lane.b32.xlu0 %v3279, 96
        %v3289 = vpop.permute.xlu0 %3288
        %3290 = vrot.lane.b32.xlu0 %v3278, 96
        %v3291 = vpop.permute.xlu0 %3290
        %v3298 = vmul.f32 %v2529, %v3281
        %v3299 = vmul.f32 %v2531, %v3283
        %v3300 = vmul.f32 %v2533, %v3285
        %v3301 = vmul.f32 %v2535, %v3287
        %v3302 = vmul.f32 %v2537, %v3289
        %v3303 = vmul.f32 %v2539, %v3291
        %v3304 = vsub.f32 1.0, %v2529
        %v3305 = vsub.f32 1.0, %v2531
        %v3306 = vsub.f32 1.0, %v2533
        %v3307 = vsub.f32 1.0, %v2535
        %v3308 = vsub.f32 1.0, %v2537
        %v3309 = vsub.f32 1.0, %v2539
        %v3310 = vmul.f32 %v3304, %v2306
        %v3311 = vmul.f32 %v3305, %v2307
        %v3312 = vmul.f32 %v3306, %v2308
        %v3313 = vmul.f32 %v3307, %v2309
        %v3314 = vmul.f32 %v3308, %v2310
        %v3315 = vmul.f32 %v3309, %v2311
        %v3316 = vadd.f32 %v3298, %v3310
        %v3317 = vadd.f32 %v3299, %v3311
        %v3318 = vadd.f32 %v3300, %v3312
        %v3319 = vadd.f32 %v3301, %v3313
        %v3320 = vadd.f32 %v3302, %v3314
        %v3321 = vadd.f32 %v3303, %v3315
        %v3328 = vcombine.low %v3316, %v3317
        %v3330 = vunpack.c.l.s4 1983009808
        %v3331 = vunpack.c.0.s8 %v3330
        %v3332 = vlaneseq
        %v3333 = vshrl.u32 %v3332, 7
        %v3334 = vsub.s32 %v3331, %v3333
        %v3335 = vrot.slane %v3328, %v3334
        %v3337 = vunpack.c.l.s4 1983009808
        %v3338 = vunpack.c.0.s8 %v3337
        %v3339 = vlaneseq
        %v3340 = vshrl.u32 %v3339, 7
        %v3341 = vsub.s32 %v3338, %v3340
        %v3342 = vrot.slane %v3318, %v3341
        %v3343 = vcombine.low %v3335, %v3342
        %v3344 = vcombine.low %v3319, %v3320
        %v3346 = vunpack.c.l.s4 1983009808
        %v3347 = vunpack.c.0.s8 %v3346
        %v3348 = vlaneseq
        %v3349 = vshrl.u32 %v3348, 7
        %v3350 = vsub.s32 %v3347, %v3349
        %v3351 = vrot.slane %v3344, %v3350
        %v3353 = vunpack.c.l.s4 1983009808
        %v3354 = vunpack.c.0.s8 %v3353
        %v3355 = vlaneseq
        %v3356 = vshrl.u32 %v3355, 7
        %v3357 = vsub.s32 %v3354, %v3356
        %v3358 = vrot.slane %v3321, %v3357
        %v3359 = vcombine.low %v3351, %v3358
        %3360 = vrot.lane.b32.xlu0 %v3343, 32
        %v3361 = vpop.permute.xlu0 %3360
        %3362 = vrot.lane.b32.xlu0 %v3359, 32
        %v3363 = vpop.permute.xlu0 %3362
        %vm3366 = vcmask 259072
        %3367 = vst.msk [vmem:[%s241] sm:$0x3f] %vm3366, %v3361
        %3368 = vst.msk [vmem:[%s241 + $0x8] sm:$0x3f] %vm3366, %v3363
        %s3369 = smul.u32 2, %s17
        %p3370 = scmp.lt.s32.totalorder %s3369, 3
        %s3371 = scalar_select %p3370, %s3369, 3
        %s3372 = smul.addr %s3371, 8
        %s3373 = scalar_lea.vmem %s5, %s3372
        // Predicated region
        $region45: #{tpu_custom_call.1} parent=39 // pred_check
          %p3374 = pneg %p145
        $region46: #{tpu_custom_call.1} parent=39 // pred_check_branch
          %3376 = sbr.rel (%p3374) target = $region48
        $region47: #{tpu_custom_call.1} parent=39 // pred_region
          %s3377 = smul.u32 2, %s17
        $region48: #{tpu_custom_call.1} parent=39 // pred_fallthru
          _
      $region40: #{tpu_custom_call.1} parent=5 // pred_fallthru
        _
      %p3378 = scmp.le.s32.totalorder 2, %s12
      // Predicated region
      $region49: #{tpu_custom_call.1} parent=5 // pred_check
        %p3379 = pneg %p3378
      $region50: #{tpu_custom_call.1} parent=5 // pred_check_branch
        %3381 = sbr.rel (%p3379) target = $region52
      $region51: #{tpu_custom_call.1} parent=5 // pred_region
        %s3382 = ssub.s32 %s12, 2
        // Predicated region
        $region53: #{tpu_custom_call.1} parent=51 // pred_check
          %p3383 = pneg %p151
        $region54: #{tpu_custom_call.1} parent=51 // pred_check_branch
          %3385 = sbr.rel (%p3383) target = $region56
        $region55: #{tpu_custom_call.1} parent=51 // pred_region
          %s3386 = smul.u32 2, %s18
          %p3387 = scmp.lt.s32.totalorder %s3386, 3
          %s3388 = scalar_select %p3387, %s3386, 3
          %s3389 = smul.addr %s3388, 8
          %s3390 = scalar_lea.vmem %s5, %s3389
        $region56: #{tpu_custom_call.1} parent=51 // pred_fallthru
          _
      $region52: #{tpu_custom_call.1} parent=5 // pred_fallthru
        _
    $region6: #{tpu_custom_call.1} parent=1 // loop_footer
      %s16 = sadd.s32 1, %s12
    $region7: #{tpu_custom_call.1} parent=1 // loop_footer_branch
      %11 = sbr.rel target = $region3
    $region8: #{tpu_custom_call.1} parent=1 // loop_exit
      _
    %3391 = vsyncpa [#allocation3], 1
    %s3392 = scalar_lea.sflag [#allocation3], 1
    %3393 = vsyncpa %s3392, 1

</llo_original>
